<compile_context>
chip_gen: v5e
topology: v5e:2x2
jax: 0.10.0
libtpu: 0.0.40
codegen_flags: <defaults>
</compile_context>

<pallas_src>
import jax
import jax.numpy as jnp
from jax import lax
from jax.experimental import pallas as pl
from jax.experimental.pallas import tpu as pltpu

LN_EPS = 1e-5  # nn.LayerNorm default


def _qm9scalar_kernel(s_ref, z_ref, gw_ref, bw_ref, emb_ref, out_ref):
    ni = pl.program_id(1)

    @pl.when(ni == 0)
    def _init():
        out_ref[...] = jnp.zeros_like(out_ref)

    s = s_ref[...].astype(jnp.float32)    # (tb, tn, H)  cast-in-kernel (bf16 ok)
    z = z_ref[...]                        # (tb, tn)  int32
    gw = gw_ref[...]                      # (1, 1, H) f32 = gamma * w
    bw = bw_ref[0]                        # scalar (SMEM) = sum(beta * w)

    # --- folded LayerNorm + Linear(hid_dim -> 1, bias=False) ---
    mean = jnp.mean(s, axis=-1, keepdims=True)
    centered = s - mean
    var = jnp.mean(centered * centered, axis=-1)           # (tb, tn)
    dot = jnp.sum(centered * gw, axis=-1)                   # (tb, tn)
    y = dot * lax.rsqrt(var + LN_EPS) + bw                  # (tb, tn)

    # --- s[z == 0] = 0  (only the MLP branch needs masking; emb row 0 skipped) ---
    y = jnp.where(z != 0, y, 0.0)

    # --- atom_ref embedding lookup from SMEM table (skip padding row 0) ---
    # TODO(synk): z >= max_z silently contributes 0 here; PyTorch embedding would raise.
    max_z = emb_ref.shape[0]

    def emb_body(i, acc):
        return acc + jnp.where(z == i, emb_ref[i], 0.0)

    ref_vals = lax.fori_loop(1, max_z, emb_body, jnp.zeros_like(y), unroll=True)

    # --- accumulate sum over atoms into the resident (tb, 1) output block ---
    out_ref[...] += jnp.sum(y + ref_vals, axis=1, keepdims=True)


def qm9scalar_forward(z, s, pos, gamma, beta, w, emb_table, *, block_b=8, block_n=512):
    """z: (B,N) int, s: (B,N,H) f32/bf16, pos unused. Returns (B,1) f32."""
    del pos  # unused in the PyTorch forward as well
    B, N, H = s.shape
    max_z = emb_table.shape[0]

    # Fold LayerNorm affine + Linear weight in the wrapper (pure parameter prep).
    gamma = gamma.reshape(H).astype(jnp.float32)
    beta = beta.reshape(H).astype(jnp.float32)
    w_flat = w.reshape(H).astype(jnp.float32)
    gw = (gamma * w_flat).reshape(1, 1, H)
    bw = jnp.sum(beta * w_flat).reshape(1)
    emb = emb_table.reshape(max_z).astype(jnp.float32)
    z = z.astype(jnp.int32)

    # Tile pick: tb multiple of 8 dividing B (else full B); tn multiple of 128
    # dividing N (else full N).  Satisfies the (8,128) block constraints for the
    # (tb,tn) int32 z block, the (tb,tn,H) s block and the (tb,1) output block.
    if B % 8 == 0:
        tb = max(8, (min(block_b, B) // 8) * 8)
        while B % tb:
            tb -= 8
    else:
        tb = B
    if N % 128 == 0:
        tn = max(128, (min(block_n, N) // 128) * 128)
        while N % tn:
            tn -= 128
    else:
        tn = N

    grid = (B // tb, N // tn)
    bytes_accessed = int(s.size) * s.dtype.itemsize + int(z.size) * 4 \
        + (H + max_z + 1 + B) * 4

    return pl.pallas_call(
        _qm9scalar_kernel,
        out_shape=jax.ShapeDtypeStruct((B, 1), jnp.float32),
        grid_spec=pltpu.PrefetchScalarGridSpec(
            num_scalar_prefetch=0,
            grid=grid,
            in_specs=[
                pl.BlockSpec((tb, tn, H), lambda bi, ni: (bi, ni, 0)),   # s
                pl.BlockSpec((tb, tn), lambda bi, ni: (bi, ni)),         # z
                pl.BlockSpec((1, 1, H), lambda bi, ni: (0, 0, 0)),       # gamma*w
                pl.BlockSpec(memory_space=pltpu.MemorySpace.SMEM),       # sum(beta*w)
                pl.BlockSpec(memory_space=pltpu.MemorySpace.SMEM),       # emb table
            ],
            out_specs=pl.BlockSpec((tb, 1), lambda bi, ni: (bi, 0)),
        ),
        compiler_params=pltpu.CompilerParams(
            dimension_semantics=("parallel", "arbitrary"),
            vmem_limit_bytes=32 * 1024 * 1024,
        ),
        cost_estimate=pl.CostEstimate(
            flops=6 * B * N * H,
            transcendentals=B * N,
            bytes_accessed=bytes_accessed,
        ),
    )(s, z, gw, bw, emb)


def qm9scalar_reference(z, s, pos, gamma, beta, w, emb_table):
    """Pure-JAX reference matching the PyTorch module."""
    del pos
    s = s.astype(jnp.float32)
    mean = jnp.mean(s, axis=-1, keepdims=True)
    var = jnp.mean((s - mean) ** 2, axis=-1, keepdims=True)
    sn = (s - mean) / jnp.sqrt(var + LN_EPS) * gamma + beta
    y = sn @ w.reshape(-1, 1)                   # (B, N, 1)
    y = y + emb_table[z]                        # (B, N, 1)
    y = jnp.where((z == 0)[..., None], 0.0, y)
    return jnp.sum(y, axis=1)                   # (B, 1)


if __name__ == "__main__":
    B, N, H, MAX_Z = 16, 256, 32, 10  # batch, atoms, hid_dim, max_z

    key = jax.random.PRNGKey(0)
    k_s, k_z, k_g, k_b, k_w, k_e = jax.random.split(key, 6)

    s = jax.random.normal(k_s, (B, N, H), dtype=jnp.float32)
    z = jax.random.randint(k_z, (B, N), 0, MAX_Z, dtype=jnp.int32)  # 0 == padding
    pos = jax.random.normal(key, (B, N, 3), dtype=jnp.float32)      # unused

    # ln_learnable=True params: gamma ~ 1 + noise, beta ~ noise
    gamma = 1.0 + 0.1 * jax.random.normal(k_g, (H,), dtype=jnp.float32)
    beta = 0.1 * jax.random.normal(k_b, (H,), dtype=jnp.float32)
    # Linear(hid_dim, 1, bias=False) weight, flattened to (H,)
    w = jax.random.normal(k_w, (H,), dtype=jnp.float32) / jnp.sqrt(H)
    # Embedding(max_z, 1) with padding_idx=0 row zeroed
    emb_table = jax.random.normal(k_e, (MAX_Z, 1), dtype=jnp.float32)
    emb_table = emb_table.at[0].set(0.0)

    # block_b=8, block_n=128 -> grid (2, 2): exercises both the parallel batch
    # axis and the N-axis accumulator.
    out = qm9scalar_forward(z, s, pos, gamma, beta, w, emb_table,
                            block_b=8, block_n=128)
    out = jax.block_until_ready(out)

    ref = qm9scalar_reference(z, s, pos, gamma, beta, w, emb_table)
    assert out.shape == (B, 1)
    assert jnp.allclose(out, ref, atol=1e-3, rtol=1e-3), (out, ref)

    print("KERNEL_OK")
</pallas_src>

<mosaic_0001>
module attributes {stable_mosaic.version = 11 : i64} {
  func.func @_qm9scalar_kernel(%arg0: i32, %arg1: i32, %arg2: memref<8x128x32xf32, #tpu.memory_space<vmem>>, %arg3: memref<8x128xi32, #tpu.memory_space<vmem>>, %arg4: memref<1x1x32xf32, #tpu.memory_space<vmem>>, %arg5: memref<1xf32, #tpu.memory_space<smem>>, %arg6: memref<10xf32, #tpu.memory_space<smem>>, %arg7: memref<8x1xf32, #tpu.memory_space<vmem>>) attributes {dimension_semantics = [#tpu.dimension_semantics<parallel>, #tpu.dimension_semantics<arbitrary>], iteration_bounds = array<i64: 2, 2>, scalar_prefetch = 0 : i64, scratch_operands = 0 : i64, tpu.core_type = #tpu.core_type<tc>, window_params = [{transform_indices = @transform_0, window_bounds = array<i64: 8, 128, 32>}, {transform_indices = @transform_1, window_bounds = array<i64: 8, 128>}, {pipeline_mode = #tpu.pipeline_mode<synchronous>, transform_indices = @transform_2, window_bounds = array<i64: 1, 1, 32>}, {transform_indices = @transform_3, window_bounds = array<i64: 1>}, {transform_indices = @transform_4, window_bounds = array<i64: 10>}, {transform_indices = @transform_5, window_bounds = array<i64: 8, 1>}]} {
    %c0_i32 = arith.constant 0 : i32
    %0 = arith.cmpi eq, %arg1, %c0_i32 : i32
    %1 = arith.extui %0 : i1 to i32
    %c0_i32_0 = arith.constant 0 : i32
    %2 = arith.cmpi ne, %1, %c0_i32_0 : i32
    scf.if %2 {
      %cst_32 = arith.constant 0.000000e+00 : f32
      %109 = vector.broadcast %cst_32 : f32 to vector<8x1xf32>
      %c0_33 = arith.constant 0 : index
      %c0_34 = arith.constant 0 : index
      %110 = vector.load %arg7[%c0_33, %c0_34] : memref<8x1xf32, #tpu.memory_space<vmem>>, vector<8x1xf32>
      tpu.vector_store %arg7[%c0_33, %c0_34], %109 {strides = array<i32>} : memref<8x1xf32, #tpu.memory_space<vmem>>, vector<8x1xf32>,
    } else {
    }
    %c0 = arith.constant 0 : index
    %c0_1 = arith.constant 0 : index
    %c0_2 = arith.constant 0 : index
    %3 = vector.load %arg2[%c0, %c0_1, %c0_2] : memref<8x128x32xf32, #tpu.memory_space<vmem>>, vector<8x128x32xf32>
    %c0_3 = arith.constant 0 : index
    %c0_4 = arith.constant 0 : index
    %4 = vector.load %arg3[%c0_3, %c0_4] : memref<8x128xi32, #tpu.memory_space<vmem>>, vector<8x128xi32>
    %c0_5 = arith.constant 0 : index
    %c0_6 = arith.constant 0 : index
    %c0_7 = arith.constant 0 : index
    %5 = vector.load %arg4[%c0_5, %c0_6, %c0_7] : memref<1x1x32xf32, #tpu.memory_space<vmem>>, vector<1x1x32xf32>
    %c0_8 = arith.constant 0 : index
    %6 = memref.load %arg5[%c0_8] : memref<1xf32, #tpu.memory_space<smem>>
    %cst = arith.constant dense<0.000000e+00> : vector<8x128xf32>
    %7 = vector.multi_reduction <add>, %3, %cst [2] : vector<8x128x32xf32> to vector<8x128xf32>
    %8 = vector.shape_cast %7 : vector<8x128xf32> to vector<8x128x1xf32>
    %cst_9 = arith.constant 3.200000e+01 : f32
    %9 = vector.broadcast %cst_9 : f32 to vector<8x128x1xf32>
    %10 = arith.divf %8, %9 : vector<8x128x1xf32>
    %11 = vector.broadcast %10 : vector<8x128x1xf32> to vector<8x128x32xf32>
    %12 = arith.subf %3, %11 : vector<8x128x32xf32>
    %13 = arith.mulf %12, %12 : vector<8x128x32xf32>
    %cst_10 = arith.constant dense<0.000000e+00> : vector<8x128xf32>
    %14 = vector.multi_reduction <add>, %13, %cst_10 [2] : vector<8x128x32xf32> to vector<8x128xf32>
    %cst_11 = arith.constant 3.200000e+01 : f32
    %15 = vector.broadcast %cst_11 : f32 to vector<8x128xf32>
    %16 = arith.divf %14, %15 : vector<8x128xf32>
    %17 = vector.broadcast %5 : vector<1x1x32xf32> to vector<8x128x32xf32>
    %18 = arith.mulf %12, %17 : vector<8x128x32xf32>
    %cst_12 = arith.constant dense<0.000000e+00> : vector<8x128xf32>
    %19 = vector.multi_reduction <add>, %18, %cst_12 [2] : vector<8x128x32xf32> to vector<8x128xf32>
    %cst_13 = arith.constant 9.99999974E-6 : f32
    %20 = vector.broadcast %cst_13 : f32 to vector<8x128xf32>
    %21 = arith.addf %16, %20 : vector<8x128xf32>
    %22 = math.rsqrt %21 : vector<8x128xf32>
    %23 = arith.mulf %19, %22 : vector<8x128xf32>
    %24 = vector.broadcast %6 : f32 to vector<8x128xf32>
    %25 = arith.addf %23, %24 : vector<8x128xf32>
    %c0_i32_14 = arith.constant 0 : i32
    %26 = vector.broadcast %c0_i32_14 : i32 to vector<8x128xi32>
    %27 = arith.cmpi ne, %4, %26 : vector<8x128xi32>
    %cst_15 = arith.constant 0.000000e+00 : f32
    %28 = vector.broadcast %cst_15 : f32 to vector<8x128xf32>
    %29 = arith.select %27, %25, %28 : vector<8x128xi1>, vector<8x128xf32>
    %cst_16 = arith.constant 0.000000e+00 : f32
    %30 = vector.broadcast %cst_16 : f32 to vector<8x128xf32>
    %c1_i32 = arith.constant 1 : i32
    %31 = vector.broadcast %c1_i32 : i32 to vector<8x128xi32>
    %32 = arith.cmpi eq, %4, %31 : vector<8x128xi32>
    %33 = arith.index_cast %c1_i32 : i32 to index
    %34 = memref.load %arg6[%33] : memref<10xf32, #tpu.memory_space<smem>>
    %cst_17 = arith.constant 0.000000e+00 : f32
    %35 = vector.broadcast %34 : f32 to vector<8x128xf32>
    %36 = vector.broadcast %cst_17 : f32 to vector<8x128xf32>
    %37 = arith.select %32, %35, %36 : vector<8x128xi1>, vector<8x128xf32>
    %38 = arith.addf %30, %37 : vector<8x128xf32>
    %c2_i32 = arith.constant 2 : i32
    %39 = vector.broadcast %c2_i32 : i32 to vector<8x128xi32>
    %40 = arith.cmpi eq, %4, %39 : vector<8x128xi32>
    %41 = arith.index_cast %c2_i32 : i32 to index
    %42 = memref.load %arg6[%41] : memref<10xf32, #tpu.memory_space<smem>>
    %cst_18 = arith.constant 0.000000e+00 : f32
    %43 = vector.broadcast %42 : f32 to vector<8x128xf32>
    %44 = vector.broadcast %cst_18 : f32 to vector<8x128xf32>
    %45 = arith.select %40, %43, %44 : vector<8x128xi1>, vector<8x128xf32>
    %46 = arith.addf %38, %45 : vector<8x128xf32>
    %c3_i32 = arith.constant 3 : i32
    %47 = vector.broadcast %c3_i32 : i32 to vector<8x128xi32>
    %48 = arith.cmpi eq, %4, %47 : vector<8x128xi32>
    %49 = arith.index_cast %c3_i32 : i32 to index
    %50 = memref.load %arg6[%49] : memref<10xf32, #tpu.memory_space<smem>>
    %cst_19 = arith.constant 0.000000e+00 : f32
    %51 = vector.broadcast %50 : f32 to vector<8x128xf32>
    %52 = vector.broadcast %cst_19 : f32 to vector<8x128xf32>
    %53 = arith.select %48, %51, %52 : vector<8x128xi1>, vector<8x128xf32>
    %54 = arith.addf %46, %53 : vector<8x128xf32>
    %c4_i32 = arith.constant 4 : i32
    %55 = vector.broadcast %c4_i32 : i32 to vector<8x128xi32>
    %56 = arith.cmpi eq, %4, %55 : vector<8x128xi32>
    %57 = arith.index_cast %c4_i32 : i32 to index
    %58 = memref.load %arg6[%57] : memref<10xf32, #tpu.memory_space<smem>>
    %cst_20 = arith.constant 0.000000e+00 : f32
    %59 = vector.broadcast %58 : f32 to vector<8x128xf32>
    %60 = vector.broadcast %cst_20 : f32 to vector<8x128xf32>
    %61 = arith.select %56, %59, %60 : vector<8x128xi1>, vector<8x128xf32>
    %62 = arith.addf %54, %61 : vector<8x128xf32>
    %c5_i32 = arith.constant 5 : i32
    %63 = vector.broadcast %c5_i32 : i32 to vector<8x128xi32>
    %64 = arith.cmpi eq, %4, %63 : vector<8x128xi32>
    %65 = arith.index_cast %c5_i32 : i32 to index
    %66 = memref.load %arg6[%65] : memref<10xf32, #tpu.memory_space<smem>>
    %cst_21 = arith.constant 0.000000e+00 : f32
    %67 = vector.broadcast %66 : f32 to vector<8x128xf32>
    %68 = vector.broadcast %cst_21 : f32 to vector<8x128xf32>
    %69 = arith.select %64, %67, %68 : vector<8x128xi1>, vector<8x128xf32>
    %70 = arith.addf %62, %69 : vector<8x128xf32>
    %c6_i32 = arith.constant 6 : i32
    %71 = vector.broadcast %c6_i32 : i32 to vector<8x128xi32>
    %72 = arith.cmpi eq, %4, %71 : vector<8x128xi32>
    %73 = arith.index_cast %c6_i32 : i32 to index
    %74 = memref.load %arg6[%73] : memref<10xf32, #tpu.memory_space<smem>>
    %cst_22 = arith.constant 0.000000e+00 : f32
    %75 = vector.broadcast %74 : f32 to vector<8x128xf32>
    %76 = vector.broadcast %cst_22 : f32 to vector<8x128xf32>
    %77 = arith.select %72, %75, %76 : vector<8x128xi1>, vector<8x128xf32>
    %78 = arith.addf %70, %77 : vector<8x128xf32>
    %c7_i32 = arith.constant 7 : i32
    %79 = vector.broadcast %c7_i32 : i32 to vector<8x128xi32>
    %80 = arith.cmpi eq, %4, %79 : vector<8x128xi32>
    %81 = arith.index_cast %c7_i32 : i32 to index
    %82 = memref.load %arg6[%81] : memref<10xf32, #tpu.memory_space<smem>>
    %cst_23 = arith.constant 0.000000e+00 : f32
    %83 = vector.broadcast %82 : f32 to vector<8x128xf32>
    %84 = vector.broadcast %cst_23 : f32 to vector<8x128xf32>
    %85 = arith.select %80, %83, %84 : vector<8x128xi1>, vector<8x128xf32>
    %86 = arith.addf %78, %85 : vector<8x128xf32>
    %c8_i32 = arith.constant 8 : i32
    %87 = vector.broadcast %c8_i32 : i32 to vector<8x128xi32>
    %88 = arith.cmpi eq, %4, %87 : vector<8x128xi32>
    %89 = arith.index_cast %c8_i32 : i32 to index
    %90 = memref.load %arg6[%89] : memref<10xf32, #tpu.memory_space<smem>>
    %cst_24 = arith.constant 0.000000e+00 : f32
    %91 = vector.broadcast %90 : f32 to vector<8x128xf32>
    %92 = vector.broadcast %cst_24 : f32 to vector<8x128xf32>
    %93 = arith.select %88, %91, %92 : vector<8x128xi1>, vector<8x128xf32>
    %94 = arith.addf %86, %93 : vector<8x128xf32>
    %c9_i32 = arith.constant 9 : i32
    %95 = vector.broadcast %c9_i32 : i32 to vector<8x128xi32>
    %96 = arith.cmpi eq, %4, %95 : vector<8x128xi32>
    %97 = arith.index_cast %c9_i32 : i32 to index
    %98 = memref.load %arg6[%97] : memref<10xf32, #tpu.memory_space<smem>>
    %cst_25 = arith.constant 0.000000e+00 : f32
    %99 = vector.broadcast %98 : f32 to vector<8x128xf32>
    %100 = vector.broadcast %cst_25 : f32 to vector<8x128xf32>
    %101 = arith.select %96, %99, %100 : vector<8x128xi1>, vector<8x128xf32>
    %102 = arith.addf %94, %101 : vector<8x128xf32>
    %c9_i32_26 = arith.constant 9 : i32
    %c0_27 = arith.constant 0 : index
    %c0_28 = arith.constant 0 : index
    %103 = vector.load %arg7[%c0_27, %c0_28] : memref<8x1xf32, #tpu.memory_space<vmem>>, vector<8x1xf32>
    %104 = arith.addf %29, %102 : vector<8x128xf32>
    %cst_29 = arith.constant dense<0.000000e+00> : vector<8xf32>
    %105 = vector.multi_reduction <add>, %104, %cst_29 [1] : vector<8x128xf32> to vector<8xf32>
    %106 = vector.shape_cast %105 : vector<8xf32> to vector<8x1xf32>
    %107 = arith.addf %103, %106 : vector<8x1xf32>
    %c0_30 = arith.constant 0 : index
    %c0_31 = arith.constant 0 : index
    %108 = vector.load %arg7[%c0_30, %c0_31] : memref<8x1xf32, #tpu.memory_space<vmem>>, vector<8x1xf32>
    tpu.vector_store %arg7[%c0_30, %c0_31], %107 {strides = array<i32>} : memref<8x1xf32, #tpu.memory_space<vmem>>, vector<8x1xf32>,
    return
  }
  func.func @transform_0(%arg0: i32, %arg1: i32) -> (i32, i32, i32) {
    %c0_i32 = arith.constant 0 : i32
    %c0_i32_0 = arith.constant 0 : i32
    return %arg0, %arg1, %c0_i32 : i32, i32, i32
  }
  func.func @transform_1(%arg0: i32, %arg1: i32) -> (i32, i32) {
    %c0_i32 = arith.constant 0 : i32
    return %arg0, %arg1 : i32, i32
  }
  func.func @transform_2(%arg0: i32, %arg1: i32) -> (i32, i32, i32) {
    %c0_i32 = arith.constant 0 : i32
    %c0_i32_0 = arith.constant 0 : i32
    %c0_i32_1 = arith.constant 0 : i32
    %c0_i32_2 = arith.constant 0 : i32
    return %c0_i32, %c0_i32_0, %c0_i32_1 : i32, i32, i32
  }
  func.func @transform_3(%arg0: i32, %arg1: i32) -> i32 {
    %c0_i32 = arith.constant 0 : i32
    %c0_i32_0 = arith.constant 0 : i32
    return %c0_i32 : i32
  }
  func.func @transform_4(%arg0: i32, %arg1: i32) -> i32 {
    %c0_i32 = arith.constant 0 : i32
    %c0_i32_0 = arith.constant 0 : i32
    return %c0_i32 : i32
  }
  func.func @transform_5(%arg0: i32, %arg1: i32) -> (i32, i32) {
    %c0_i32 = arith.constant 0 : i32
    %c0_i32_0 = arith.constant 0 : i32
    return %arg0, %c0_i32 : i32, i32
  }
}

</mosaic_0001>

<llo_original>
// kernel: tpu_custom_call.1
$region0: #{tpu_custom_call.1}
  #allocation0 [shape = 'u32[]', space=smem, size = 0x4, offset = 0x4, fixed_abs, tag = 'smem constant byte address 0x4 - core index']
  #allocation1 [shape = 'u32[72,128]{1,0:T(1,128)}', space=vmem, size = 0x9000, scoped, tag = 'internal scratch']
  #allocation2 [shape = 'f32[1]{0:T(128)S(6)}', space=smem, size = 0x200, scoped, tag = 'scoped memory for tpu_custom_call.1']
  %s0 = inlined_call_operand.vmem [shape: f32[16,256,32], index: 0, kind: input, shape index: {}]
  %s1 = inlined_call_operand.vmem [shape: s32[16,256], index: 1, kind: input, shape index: {}]
  %s2 = inlined_call_operand.vmem [shape: f32[1,1,32], index: 2, kind: input, shape index: {}]
  %s3 = inlined_call_operand.<no memory space> [shape: f32[1], index: 3, kind: input, shape index: {}]
  %s4 = inlined_call_operand.vmem [shape: f32[10], index: 4, kind: input, shape index: {}]
  %s5 = inlined_call_operand.vmem [shape: f32[16,1], index: 5, kind: output, shape index: {}]
  %s6 = sld [smem:[#allocation0]]
  $region99: #{tpu_custom_call.1} parent=0
    _
  %s8 = ssub.s32 1, %s6
  %s9 = scalar_select 0, %s8, %s6
  %10 = sst [smem:[#allocation2]] %s3
  $region1: #{tpu_custom_call.1} parent=0
    #allocation3 [shape = 'u8[1048576]{0}', space=vmem, size = 0x100000, scoped, tag = 'input window, operand 0']
    #allocation4 [shape = 'u8[512]{0}', space=smem, size = 0x200, scoped, tag = 'input window, operand 4, single buffered']
    #allocation5 [shape = 's32[2]{0}', space=sflag, size = 0x8, scoped, tag = 'scoped memory for tpu_custom_call.1']
    %11 = vsyncpa [#allocation5], 0
    loop: start=0, step=1, limit=6
    $region2: #{tpu_custom_call.1} parent=1 // loop_pre_header
      _
    $region3: #{tpu_custom_call.1} parent=1 // loop_header
      %s13 = sphi 0, %s17
      %p14 = scmp.ge.s32.totalorder %s13, 6
      %s20 = sphi 0, %s32
      %s21 = sphi 0, %s28
      %s22 = sphi 0, %s20
      %s23 = sphi 0, %s21
      %s24 = sphi 0, %s22
      %s25 = sphi 0, %s23
      %s37 = sphi 0, %s39
      %s40 = sphi 0, %s37
      %s41 = sphi 0, %s40
      %s57 = sphi 0, %s41
      %s65 = sphi 0, %s67
      %s68 = sphi 0, %s65
      %s69 = sphi 0, %s68
      %s85 = sphi 0, %s69
      %s89 = sphi 0, %s89
      %s91 = sphi 0, %s89
      %s92 = sphi 0, %s91
      %s106 = sphi 0, %s92
      %s110 = sphi 0, %s110
      %s112 = sphi 0, %s110
      %s113 = sphi 0, %s112
      %s127 = sphi 0, %s113
      %s131 = sphi 0, %s131
      %s133 = sphi 0, %s131
      %s134 = sphi 0, %s133
      %s148 = sphi 0, %s134
      %s154 = sphi 0, %s156
      %s157 = sphi 0, %s154
      %s158 = sphi 0, %s157
      %s174 = sphi 0, %s158
    $region4: #{tpu_custom_call.1} parent=1 // loop_header_branch
      %16 = sbr.rel (%p14) target = $region8
    $region5: #{tpu_custom_call.1} parent=1 // loop_body
      %s18 = ssub.s32 %s13, 1
      %s19 = ssub.s32 %s13, 2
      %s26 = sadd.s32 1, %s21
      %p27 = scmp.ge.s32.totalorder %s26, 2
      %s28 = scalar_select %p27, 0, %s26
      %s29 = sadd.s32 1, %s20
      %s30 = scalar_select %p27, %s29, %s20
      %p31 = scmp.ge.s32.totalorder %s30, 2
      %s32 = scalar_select %p31, 0, %s30
      %s33 = ssub.s32 %s20, %s32
      %s34 = ssub.s32 %s21, %s28
      %s35 = sor.u32 %s33, %s34
      %p36 = scmp.eq.s32.totalorder %s35, 0
      %s38 = sadd.s32 %s37, 1
      %s39 = scalar_select %p36, %s37, %s38
      %p42 = pneg %p36
      %p43 = scmp.eq.s32.totalorder %s13, 3
      %p44 = por %p42, %p43
      %p45 = scmp.ne.s32.totalorder %s37, %s40
      %p46 = scmp.eq.s32.totalorder %s13, 0
      %p47 = por %p45, %p46
      %p48 = scmp.ne.s32.totalorder %s37, %s40
      %p49 = scmp.eq.s32.totalorder %s18, 3
      %p50 = por %p48, %p49
      %p51 = scmp.ne.s32.totalorder %s40, %s41
      %p52 = scmp.eq.s32.totalorder %s18, 0
      %p53 = por %p51, %p52
      %p54 = scmp.ne.s32.totalorder %s40, %s41
      %p55 = scmp.eq.s32.totalorder %s19, 3
      %p56 = por %p54, %p55
      %p58 = scmp.ne.s32.totalorder %s41, %s57
      %p59 = scmp.eq.s32.totalorder %s19, 0
      %p60 = por %p58, %p59
      %s61 = ssub.s32 %s20, %s32
      %s62 = ssub.s32 %s21, %s28
      %s63 = sor.u32 %s61, %s62
      %p64 = scmp.eq.s32.totalorder %s63, 0
      %s66 = sadd.s32 %s65, 1
      %s67 = scalar_select %p64, %s65, %s66
      %p70 = pneg %p64
      %p71 = scmp.eq.s32.totalorder %s13, 3
      %p72 = por %p70, %p71
      %p73 = scmp.ne.s32.totalorder %s65, %s68
      %p74 = scmp.eq.s32.totalorder %s13, 0
      %p75 = por %p73, %p74
      %p76 = scmp.ne.s32.totalorder %s65, %s68
      %p77 = scmp.eq.s32.totalorder %s18, 3
      %p78 = por %p76, %p77
      %p79 = scmp.ne.s32.totalorder %s68, %s69
      %p80 = scmp.eq.s32.totalorder %s18, 0
      %p81 = por %p79, %p80
      %p82 = scmp.ne.s32.totalorder %s68, %s69
      %p83 = scmp.eq.s32.totalorder %s19, 3
      %p84 = por %p82, %p83
      %p86 = scmp.ne.s32.totalorder %s69, %s85
      %p87 = scmp.eq.s32.totalorder %s19, 0
      %p88 = por %p86, %p87
      %s90 = sadd.s32 %s89, 1
      %p93 = scmp.eq.s32.totalorder %s13, 3
      %p94 = scmp.ne.s32.totalorder %s89, %s91
      %p95 = scmp.eq.s32.totalorder %s13, 0
      %p96 = por %p94, %p95
      %p97 = scmp.ne.s32.totalorder %s89, %s91
      %p98 = scmp.eq.s32.totalorder %s18, 3
      %p99 = por %p97, %p98
      %p100 = scmp.ne.s32.totalorder %s91, %s92
      %p101 = scmp.eq.s32.totalorder %s18, 0
      %p102 = por %p100, %p101
      %p103 = scmp.ne.s32.totalorder %s91, %s92
      %p104 = scmp.eq.s32.totalorder %s19, 3
      %p105 = por %p103, %p104
      %p107 = scmp.ne.s32.totalorder %s92, %s106
      %p108 = scmp.eq.s32.totalorder %s19, 0
      %p109 = por %p107, %p108
      %s111 = sadd.s32 %s110, 1
      %p114 = scmp.eq.s32.totalorder %s13, 3
      %p115 = scmp.ne.s32.totalorder %s110, %s112
      %p116 = scmp.eq.s32.totalorder %s13, 0
      %p117 = por %p115, %p116
      %p118 = scmp.ne.s32.totalorder %s110, %s112
      %p119 = scmp.eq.s32.totalorder %s18, 3
      %p120 = por %p118, %p119
      %p121 = scmp.ne.s32.totalorder %s112, %s113
      %p122 = scmp.eq.s32.totalorder %s18, 0
      %p123 = por %p121, %p122
      %p124 = scmp.ne.s32.totalorder %s112, %s113
      %p125 = scmp.eq.s32.totalorder %s19, 3
      %p126 = por %p124, %p125
      %p128 = scmp.ne.s32.totalorder %s113, %s127
      %p129 = scmp.eq.s32.totalorder %s19, 0
      %p130 = por %p128, %p129
      %s132 = sadd.s32 %s131, 1
      %p135 = scmp.eq.s32.totalorder %s13, 3
      %p136 = scmp.ne.s32.totalorder %s131, %s133
      %p137 = scmp.eq.s32.totalorder %s13, 0
      %p138 = por %p136, %p137
      %p139 = scmp.ne.s32.totalorder %s131, %s133
      %p140 = scmp.eq.s32.totalorder %s18, 3
      %p141 = por %p139, %p140
      %p142 = scmp.ne.s32.totalorder %s133, %s134
      %p143 = scmp.eq.s32.totalorder %s18, 0
      %p144 = por %p142, %p143
      %p145 = scmp.ne.s32.totalorder %s133, %s134
      %p146 = scmp.eq.s32.totalorder %s19, 3
      %p147 = por %p145, %p146
      %p149 = scmp.ne.s32.totalorder %s134, %s148
      %p150 = scmp.eq.s32.totalorder %s19, 0
      %p151 = por %p149, %p150
      %s152 = ssub.s32 %s20, %s32
      %p153 = scmp.eq.s32.totalorder %s152, 0
      %s155 = sadd.s32 %s154, 1
      %s156 = scalar_select %p153, %s154, %s155
      %p159 = pneg %p153
      %p160 = scmp.eq.s32.totalorder %s13, 3
      %p161 = por %p159, %p160
      %p162 = scmp.ne.s32.totalorder %s154, %s157
      %p163 = scmp.eq.s32.totalorder %s13, 0
      %p164 = por %p162, %p163
      %p165 = scmp.ne.s32.totalorder %s154, %s157
      %p166 = scmp.eq.s32.totalorder %s18, 3
      %p167 = por %p165, %p166
      %p168 = scmp.ne.s32.totalorder %s157, %s158
      %p169 = scmp.eq.s32.totalorder %s18, 0
      %p170 = por %p168, %p169
      %p171 = scmp.ne.s32.totalorder %s157, %s158
      %p172 = scmp.eq.s32.totalorder %s19, 3
      %p173 = por %p171, %p172
      %p175 = scmp.ne.s32.totalorder %s158, %s174
      %p176 = scmp.eq.s32.totalorder %s19, 0
      %p177 = por %p175, %p176
      %p178 = scmp.le.s32.totalorder 1, %s13
      %p179 = scmp.lt.s32.totalorder %s13, 5
      %p180 = pnand %p178, %p179
      %p181 = pneg %p180
      // Predicated region
      $region9: #{tpu_custom_call.1} parent=5 // pred_check
        _
      $region10: #{tpu_custom_call.1} parent=5 // pred_check_branch
        %183 = sbr.rel (%p180) target = $region12
      $region11: #{tpu_custom_call.1} parent=5 // pred_region
        %s184 = ssub.s32 %s13, 1
        // Predicated region
        $region13: #{tpu_custom_call.1} parent=11 // pred_check
          %p185 = pneg %p102
        $region14: #{tpu_custom_call.1} parent=11 // pred_check_branch
          %187 = sbr.rel (%p185) target = $region16
        $region15: #{tpu_custom_call.1} parent=11 // pred_region
          _
        $region16: #{tpu_custom_call.1} parent=11 // pred_fallthru
          _
        // Predicated region
        $region17: #{tpu_custom_call.1} parent=11 // pred_check
          %p188 = pneg %p123
        $region18: #{tpu_custom_call.1} parent=11 // pred_check_branch
          %190 = sbr.rel (%p188) target = $region20
        $region19: #{tpu_custom_call.1} parent=11 // pred_region
          _
        $region20: #{tpu_custom_call.1} parent=11 // pred_fallthru
          _
        // Predicated region
        $region21: #{tpu_custom_call.1} parent=11 // pred_check
          %p191 = pneg %p144
        $region22: #{tpu_custom_call.1} parent=11 // pred_check_branch
          %193 = sbr.rel (%p191) target = $region24
        $region23: #{tpu_custom_call.1} parent=11 // pred_region
          %195 = vsyncadd [#allocation5], 0
          %s197 = sshll.u32 %s4, 4
          %s198 = int_to_ptr.vmem [resolvable:$true] %s197
          %200 = dma.vmem_to_smem %s198, 16, [#allocation4], [#allocation5]
        $region24: #{tpu_custom_call.1} parent=11 // pred_fallthru
          _
      $region12: #{tpu_custom_call.1} parent=5 // pred_fallthru
        _
      %p201 = scmp.lt.s32.totalorder %s13, 4
      // Predicated region
      $region25: #{tpu_custom_call.1} parent=5 // pred_check
        %p202 = pneg %p201
      $region26: #{tpu_custom_call.1} parent=5 // pred_check_branch
        %204 = sbr.rel (%p202) target = $region28
      $region27: #{tpu_custom_call.1} parent=5 // pred_region
        // Predicated region
        $region29: #{tpu_custom_call.1} parent=27 // pred_check
          %p205 = pneg %p47
        $region30: #{tpu_custom_call.1} parent=27 // pred_check_branch
          %207 = sbr.rel (%p205) target = $region32
        $region31: #{tpu_custom_call.1} parent=27 // pred_region
          %s208 = sand.u32 %s37, 1
          %s209 = sand.u32 %s37, 1
          %s210 = smul.addr %s209, 1024
          %s211 = scalar_lea.vmem [#allocation3], %s210
          %s212 = smul.u32 8, %s20
          %s213 = smul.u32 16, %s21
          %s214 = smul.addr %s212, 32
          %s215 = sadd.s32 %s213, %s214
          %s216 = smul.addr %s215, 8
          %s217 = scalar_lea.vmem %s0, %s216
          // Predicated region
          $region33: #{tpu_custom_call.1} parent=31 // pred_check
            _
          $region34: #{tpu_custom_call.1} parent=31 // pred_check_branch
            %219 = sbr.rel (0) target = $region36
          $region35: #{tpu_custom_call.1} parent=31 // pred_region
            // Predicated region
            $region37: #{tpu_custom_call.1} parent=35 // pred_check
              _
            $region38: #{tpu_custom_call.1} parent=35 // pred_check_branch
              %221 = sbr.rel (0) target = $region40
            $region39: #{tpu_custom_call.1} parent=35 // pred_region
              // Predicated region
              $region52: #{tpu_custom_call.1} parent=39 // pred_check
                _
              $region53: #{tpu_custom_call.1} parent=39 // pred_check_branch
                %491 = sbr.rel (0) target = $region55
              $region54: #{tpu_custom_call.1} parent=39 // pred_region
                loop: start=0, step=1, limit=1
                $region56: #{tpu_custom_call.1} parent=54 // loop_pre_header
                  _
                $region57: #{tpu_custom_call.1} parent=54 // loop_header
                  %s493 = sphi 0, %s497
                  %p494 = scmp.ge.s32.totalorder %s493, 1
                  %s498 = sphi %s217, %s217
                  %s499 = sphi %s211, %s211
                $region58: #{tpu_custom_call.1} parent=54 // loop_header_branch
                  %496 = sbr.rel (%p494) target = $region62
                $region59: #{tpu_custom_call.1} parent=54 // loop_body
                  %v500 = vld [vmem:[%s498] sm:$0xff]
                  %501 = vst [vmem:[%s499] sm:$0xff] %v500
                  %v502 = vld [vmem:[%s498 + $0x8] sm:$0xff]
                  %503 = vst [vmem:[%s499 + $0x8] sm:$0xff] %v502
                  %v504 = vld [vmem:[%s498 + $0x10] sm:$0xff]
                  %505 = vst [vmem:[%s499 + $0x10] sm:$0xff] %v504
                  %v506 = vld [vmem:[%s498 + $0x18] sm:$0xff]
                  %507 = vst [vmem:[%s499 + $0x18] sm:$0xff] %v506
                  %v508 = vld [vmem:[%s498 + $0x20] sm:$0xff]
                  %509 = vst [vmem:[%s499 + $0x20] sm:$0xff] %v508
                  %v510 = vld [vmem:[%s498 + $0x28] sm:$0xff]
                  %511 = vst [vmem:[%s499 + $0x28] sm:$0xff] %v510
                  %v512 = vld [vmem:[%s498 + $0x30] sm:$0xff]
                  %513 = vst [vmem:[%s499 + $0x30] sm:$0xff] %v512
                  %v514 = vld [vmem:[%s498 + $0x38] sm:$0xff]
                  %515 = vst [vmem:[%s499 + $0x38] sm:$0xff] %v514
                  %v516 = vld [vmem:[%s498 + $0x40] sm:$0xff]
                  %517 = vst [vmem:[%s499 + $0x40] sm:$0xff] %v516
                  %v518 = vld [vmem:[%s498 + $0x48] sm:$0xff]
                  %519 = vst [vmem:[%s499 + $0x48] sm:$0xff] %v518
                  %v520 = vld [vmem:[%s498 + $0x50] sm:$0xff]
                  %521 = vst [vmem:[%s499 + $0x50] sm:$0xff] %v520
                  %v522 = vld [vmem:[%s498 + $0x58] sm:$0xff]
                  %523 = vst [vmem:[%s499 + $0x58] sm:$0xff] %v522
                  %v524 = vld [vmem:[%s498 + $0x60] sm:$0xff]
                  %525 = vst [vmem:[%s499 + $0x60] sm:$0xff] %v524
                  %v526 = vld [vmem:[%s498 + $0x68] sm:$0xff]
                  %527 = vst [vmem:[%s499 + $0x68] sm:$0xff] %v526
                  %v528 = vld [vmem:[%s498 + $0x70] sm:$0xff]
                  %529 = vst [vmem:[%s499 + $0x70] sm:$0xff] %v528
                  %v530 = vld [vmem:[%s498 + $0x78] sm:$0xff]
                  %531 = vst [vmem:[%s499 + $0x78] sm:$0xff] %v530
                  %v532 = vld [vmem:[%s498 + $0x100] sm:$0xff]
                  %533 = vst [vmem:[%s499 + $0x80] sm:$0xff] %v532
                  %v534 = vld [vmem:[%s498 + $0x108] sm:$0xff]
                  %535 = vst [vmem:[%s499 + $0x88] sm:$0xff] %v534
                  %v536 = vld [vmem:[%s498 + $0x110] sm:$0xff]
                  %537 = vst [vmem:[%s499 + $0x90] sm:$0xff] %v536
                  %v538 = vld [vmem:[%s498 + $0x118] sm:$0xff]
                  %539 = vst [vmem:[%s499 + $0x98] sm:$0xff] %v538
                  %v540 = vld [vmem:[%s498 + $0x120] sm:$0xff]
                  %541 = vst [vmem:[%s499 + $0xa0] sm:$0xff] %v540
                  %v542 = vld [vmem:[%s498 + $0x128] sm:$0xff]
                  %543 = vst [vmem:[%s499 + $0xa8] sm:$0xff] %v542
                  %v544 = vld [vmem:[%s498 + $0x130] sm:$0xff]
                  %545 = vst [vmem:[%s499 + $0xb0] sm:$0xff] %v544
                  %v546 = vld [vmem:[%s498 + $0x138] sm:$0xff]
                  %547 = vst [vmem:[%s499 + $0xb8] sm:$0xff] %v546
                  %v548 = vld [vmem:[%s498 + $0x140] sm:$0xff]
                  %549 = vst [vmem:[%s499 + $0xc0] sm:$0xff] %v548
                  %v550 = vld [vmem:[%s498 + $0x148] sm:$0xff]
                  %551 = vst [vmem:[%s499 + $0xc8] sm:$0xff] %v550
                  %v552 = vld [vmem:[%s498 + $0x150] sm:$0xff]
                  %553 = vst [vmem:[%s499 + $0xd0] sm:$0xff] %v552
                  %v554 = vld [vmem:[%s498 + $0x158] sm:$0xff]
                  %555 = vst [vmem:[%s499 + $0xd8] sm:$0xff] %v554
                  %v556 = vld [vmem:[%s498 + $0x160] sm:$0xff]
                  %557 = vst [vmem:[%s499 + $0xe0] sm:$0xff] %v556
                  %v558 = vld [vmem:[%s498 + $0x168] sm:$0xff]
                  %559 = vst [vmem:[%s499 + $0xe8] sm:$0xff] %v558
                  %v560 = vld [vmem:[%s498 + $0x170] sm:$0xff]
                  %561 = vst [vmem:[%s499 + $0xf0] sm:$0xff] %v560
                  %v562 = vld [vmem:[%s498 + $0x178] sm:$0xff]
                  %563 = vst [vmem:[%s499 + $0xf8] sm:$0xff] %v562
                  %v564 = vld [vmem:[%s498 + $0x200] sm:$0xff]
                  %565 = vst [vmem:[%s499 + $0x100] sm:$0xff] %v564
                  %v566 = vld [vmem:[%s498 + $0x208] sm:$0xff]
                  %567 = vst [vmem:[%s499 + $0x108] sm:$0xff] %v566
                  %v568 = vld [vmem:[%s498 + $0x210] sm:$0xff]
                  %569 = vst [vmem:[%s499 + $0x110] sm:$0xff] %v568
                  %v570 = vld [vmem:[%s498 + $0x218] sm:$0xff]
                  %571 = vst [vmem:[%s499 + $0x118] sm:$0xff] %v570
                  %v572 = vld [vmem:[%s498 + $0x220] sm:$0xff]
                  %573 = vst [vmem:[%s499 + $0x120] sm:$0xff] %v572
                  %v574 = vld [vmem:[%s498 + $0x228] sm:$0xff]
                  %575 = vst [vmem:[%s499 + $0x128] sm:$0xff] %v574
                  %v576 = vld [vmem:[%s498 + $0x230] sm:$0xff]
                  %577 = vst [vmem:[%s499 + $0x130] sm:$0xff] %v576
                  %v578 = vld [vmem:[%s498 + $0x238] sm:$0xff]
                  %579 = vst [vmem:[%s499 + $0x138] sm:$0xff] %v578
                  %v580 = vld [vmem:[%s498 + $0x240] sm:$0xff]
                  %581 = vst [vmem:[%s499 + $0x140] sm:$0xff] %v580
                  %v582 = vld [vmem:[%s498 + $0x248] sm:$0xff]
                  %583 = vst [vmem:[%s499 + $0x148] sm:$0xff] %v582
                  %v584 = vld [vmem:[%s498 + $0x250] sm:$0xff]
                  %585 = vst [vmem:[%s499 + $0x150] sm:$0xff] %v584
                  %v586 = vld [vmem:[%s498 + $0x258] sm:$0xff]
                  %587 = vst [vmem:[%s499 + $0x158] sm:$0xff] %v586
                  %v588 = vld [vmem:[%s498 + $0x260] sm:$0xff]
                  %589 = vst [vmem:[%s499 + $0x160] sm:$0xff] %v588
                  %v590 = vld [vmem:[%s498 + $0x268] sm:$0xff]
                  %591 = vst [vmem:[%s499 + $0x168] sm:$0xff] %v590
                  %v592 = vld [vmem:[%s498 + $0x270] sm:$0xff]
                  %593 = vst [vmem:[%s499 + $0x170] sm:$0xff] %v592
                  %v594 = vld [vmem:[%s498 + $0x278] sm:$0xff]
                  %595 = vst [vmem:[%s499 + $0x178] sm:$0xff] %v594
                  %v596 = vld [vmem:[%s498 + $0x300] sm:$0xff]
                  %597 = vst [vmem:[%s499 + $0x180] sm:$0xff] %v596
                  %v598 = vld [vmem:[%s498 + $0x308] sm:$0xff]
                  %599 = vst [vmem:[%s499 + $0x188] sm:$0xff] %v598
                  %v600 = vld [vmem:[%s498 + $0x310] sm:$0xff]
                  %601 = vst [vmem:[%s499 + $0x190] sm:$0xff] %v600
                  %v602 = vld [vmem:[%s498 + $0x318] sm:$0xff]
                  %603 = vst [vmem:[%s499 + $0x198] sm:$0xff] %v602
                  %v604 = vld [vmem:[%s498 + $0x320] sm:$0xff]
                  %605 = vst [vmem:[%s499 + $0x1a0] sm:$0xff] %v604
                  %v606 = vld [vmem:[%s498 + $0x328] sm:$0xff]
                  %607 = vst [vmem:[%s499 + $0x1a8] sm:$0xff] %v606
                  %v608 = vld [vmem:[%s498 + $0x330] sm:$0xff]
                  %609 = vst [vmem:[%s499 + $0x1b0] sm:$0xff] %v608
                  %v610 = vld [vmem:[%s498 + $0x338] sm:$0xff]
                  %611 = vst [vmem:[%s499 + $0x1b8] sm:$0xff] %v610
                  %v612 = vld [vmem:[%s498 + $0x340] sm:$0xff]
                  %613 = vst [vmem:[%s499 + $0x1c0] sm:$0xff] %v612
                  %v614 = vld [vmem:[%s498 + $0x348] sm:$0xff]
                  %615 = vst [vmem:[%s499 + $0x1c8] sm:$0xff] %v614
                  %v616 = vld [vmem:[%s498 + $0x350] sm:$0xff]
                  %617 = vst [vmem:[%s499 + $0x1d0] sm:$0xff] %v616
                  %v618 = vld [vmem:[%s498 + $0x358] sm:$0xff]
                  %619 = vst [vmem:[%s499 + $0x1d8] sm:$0xff] %v618
                  %v620 = vld [vmem:[%s498 + $0x360] sm:$0xff]
                  %621 = vst [vmem:[%s499 + $0x1e0] sm:$0xff] %v620
                  %v622 = vld [vmem:[%s498 + $0x368] sm:$0xff]
                  %623 = vst [vmem:[%s499 + $0x1e8] sm:$0xff] %v622
                  %v624 = vld [vmem:[%s498 + $0x370] sm:$0xff]
                  %625 = vst [vmem:[%s499 + $0x1f0] sm:$0xff] %v624
                  %v626 = vld [vmem:[%s498 + $0x378] sm:$0xff]
                  %627 = vst [vmem:[%s499 + $0x1f8] sm:$0xff] %v626
                  %v628 = vld [vmem:[%s498 + $0x400] sm:$0xff]
                  %629 = vst [vmem:[%s499 + $0x200] sm:$0xff] %v628
                  %v630 = vld [vmem:[%s498 + $0x408] sm:$0xff]
                  %631 = vst [vmem:[%s499 + $0x208] sm:$0xff] %v630
                  %v632 = vld [vmem:[%s498 + $0x410] sm:$0xff]
                  %633 = vst [vmem:[%s499 + $0x210] sm:$0xff] %v632
                  %v634 = vld [vmem:[%s498 + $0x418] sm:$0xff]
                  %635 = vst [vmem:[%s499 + $0x218] sm:$0xff] %v634
                  %v636 = vld [vmem:[%s498 + $0x420] sm:$0xff]
                  %637 = vst [vmem:[%s499 + $0x220] sm:$0xff] %v636
                  %v638 = vld [vmem:[%s498 + $0x428] sm:$0xff]
                  %639 = vst [vmem:[%s499 + $0x228] sm:$0xff] %v638
                  %v640 = vld [vmem:[%s498 + $0x430] sm:$0xff]
                  %641 = vst [vmem:[%s499 + $0x230] sm:$0xff] %v640
                  %v642 = vld [vmem:[%s498 + $0x438] sm:$0xff]
                  %643 = vst [vmem:[%s499 + $0x238] sm:$0xff] %v642
                  %v644 = vld [vmem:[%s498 + $0x440] sm:$0xff]
                  %645 = vst [vmem:[%s499 + $0x240] sm:$0xff] %v644
                  %v646 = vld [vmem:[%s498 + $0x448] sm:$0xff]
                  %647 = vst [vmem:[%s499 + $0x248] sm:$0xff] %v646
                  %v648 = vld [vmem:[%s498 + $0x450] sm:$0xff]
                  %649 = vst [vmem:[%s499 + $0x250] sm:$0xff] %v648
                  %v650 = vld [vmem:[%s498 + $0x458] sm:$0xff]
                  %651 = vst [vmem:[%s499 + $0x258] sm:$0xff] %v650
                  %v652 = vld [vmem:[%s498 + $0x460] sm:$0xff]
                  %653 = vst [vmem:[%s499 + $0x260] sm:$0xff] %v652
                  %v654 = vld [vmem:[%s498 + $0x468] sm:$0xff]
                  %655 = vst [vmem:[%s499 + $0x268] sm:$0xff] %v654
                  %v656 = vld [vmem:[%s498 + $0x470] sm:$0xff]
                  %657 = vst [vmem:[%s499 + $0x270] sm:$0xff] %v656
                  %v658 = vld [vmem:[%s498 + $0x478] sm:$0xff]
                  %659 = vst [vmem:[%s499 + $0x278] sm:$0xff] %v658
                  %v660 = vld [vmem:[%s498 + $0x500] sm:$0xff]
                  %661 = vst [vmem:[%s499 + $0x280] sm:$0xff] %v660
                  %v662 = vld [vmem:[%s498 + $0x508] sm:$0xff]
                  %663 = vst [vmem:[%s499 + $0x288] sm:$0xff] %v662
                  %v664 = vld [vmem:[%s498 + $0x510] sm:$0xff]
                  %665 = vst [vmem:[%s499 + $0x290] sm:$0xff] %v664
                  %v666 = vld [vmem:[%s498 + $0x518] sm:$0xff]
                  %667 = vst [vmem:[%s499 + $0x298] sm:$0xff] %v666
                  %v668 = vld [vmem:[%s498 + $0x520] sm:$0xff]
                  %669 = vst [vmem:[%s499 + $0x2a0] sm:$0xff] %v668
                  %v670 = vld [vmem:[%s498 + $0x528] sm:$0xff]
                  %671 = vst [vmem:[%s499 + $0x2a8] sm:$0xff] %v670
                  %v672 = vld [vmem:[%s498 + $0x530] sm:$0xff]
                  %673 = vst [vmem:[%s499 + $0x2b0] sm:$0xff] %v672
                  %v674 = vld [vmem:[%s498 + $0x538] sm:$0xff]
                  %675 = vst [vmem:[%s499 + $0x2b8] sm:$0xff] %v674
                  %v676 = vld [vmem:[%s498 + $0x540] sm:$0xff]
                  %677 = vst [vmem:[%s499 + $0x2c0] sm:$0xff] %v676
                  %v678 = vld [vmem:[%s498 + $0x548] sm:$0xff]
                  %679 = vst [vmem:[%s499 + $0x2c8] sm:$0xff] %v678
                  %v680 = vld [vmem:[%s498 + $0x550] sm:$0xff]
                  %681 = vst [vmem:[%s499 + $0x2d0] sm:$0xff] %v680
                  %v682 = vld [vmem:[%s498 + $0x558] sm:$0xff]
                  %683 = vst [vmem:[%s499 + $0x2d8] sm:$0xff] %v682
                  %v684 = vld [vmem:[%s498 + $0x560] sm:$0xff]
                  %685 = vst [vmem:[%s499 + $0x2e0] sm:$0xff] %v684
                  %v686 = vld [vmem:[%s498 + $0x568] sm:$0xff]
                  %687 = vst [vmem:[%s499 + $0x2e8] sm:$0xff] %v686
                  %v688 = vld [vmem:[%s498 + $0x570] sm:$0xff]
                  %689 = vst [vmem:[%s499 + $0x2f0] sm:$0xff] %v688
                  %v690 = vld [vmem:[%s498 + $0x578] sm:$0xff]
                  %691 = vst [vmem:[%s499 + $0x2f8] sm:$0xff] %v690
                  %v692 = vld [vmem:[%s498 + $0x600] sm:$0xff]
                  %693 = vst [vmem:[%s499 + $0x300] sm:$0xff] %v692
                  %v694 = vld [vmem:[%s498 + $0x608] sm:$0xff]
                  %695 = vst [vmem:[%s499 + $0x308] sm:$0xff] %v694
                  %v696 = vld [vmem:[%s498 + $0x610] sm:$0xff]
                  %697 = vst [vmem:[%s499 + $0x310] sm:$0xff] %v696
                  %v698 = vld [vmem:[%s498 + $0x618] sm:$0xff]
                  %699 = vst [vmem:[%s499 + $0x318] sm:$0xff] %v698
                  %v700 = vld [vmem:[%s498 + $0x620] sm:$0xff]
                  %701 = vst [vmem:[%s499 + $0x320] sm:$0xff] %v700
                  %v702 = vld [vmem:[%s498 + $0x628] sm:$0xff]
                  %703 = vst [vmem:[%s499 + $0x328] sm:$0xff] %v702
                  %v704 = vld [vmem:[%s498 + $0x630] sm:$0xff]
                  %705 = vst [vmem:[%s499 + $0x330] sm:$0xff] %v704
                  %v706 = vld [vmem:[%s498 + $0x638] sm:$0xff]
                  %707 = vst [vmem:[%s499 + $0x338] sm:$0xff] %v706
                  %v708 = vld [vmem:[%s498 + $0x640] sm:$0xff]
                  %709 = vst [vmem:[%s499 + $0x340] sm:$0xff] %v708
                  %v710 = vld [vmem:[%s498 + $0x648] sm:$0xff]
                  %711 = vst [vmem:[%s499 + $0x348] sm:$0xff] %v710
                  %v712 = vld [vmem:[%s498 + $0x650] sm:$0xff]
                  %713 = vst [vmem:[%s499 + $0x350] sm:$0xff] %v712
                  %v714 = vld [vmem:[%s498 + $0x658] sm:$0xff]
                  %715 = vst [vmem:[%s499 + $0x358] sm:$0xff] %v714
                  %v716 = vld [vmem:[%s498 + $0x660] sm:$0xff]
                  %717 = vst [vmem:[%s499 + $0x360] sm:$0xff] %v716
                  %v718 = vld [vmem:[%s498 + $0x668] sm:$0xff]
                  %719 = vst [vmem:[%s499 + $0x368] sm:$0xff] %v718
                  %v720 = vld [vmem:[%s498 + $0x670] sm:$0xff]
                  %721 = vst [vmem:[%s499 + $0x370] sm:$0xff] %v720
                  %v722 = vld [vmem:[%s498 + $0x678] sm:$0xff]
                  %723 = vst [vmem:[%s499 + $0x378] sm:$0xff] %v722
                  %v724 = vld [vmem:[%s498 + $0x700] sm:$0xff]
                  %725 = vst [vmem:[%s499 + $0x380] sm:$0xff] %v724
                  %v726 = vld [vmem:[%s498 + $0x708] sm:$0xff]
                  %727 = vst [vmem:[%s499 + $0x388] sm:$0xff] %v726
                  %v728 = vld [vmem:[%s498 + $0x710] sm:$0xff]
                  %729 = vst [vmem:[%s499 + $0x390] sm:$0xff] %v728
                  %v730 = vld [vmem:[%s498 + $0x718] sm:$0xff]
                  %731 = vst [vmem:[%s499 + $0x398] sm:$0xff] %v730
                  %v732 = vld [vmem:[%s498 + $0x720] sm:$0xff]
                  %733 = vst [vmem:[%s499 + $0x3a0] sm:$0xff] %v732
                  %v734 = vld [vmem:[%s498 + $0x728] sm:$0xff]
                  %735 = vst [vmem:[%s499 + $0x3a8] sm:$0xff] %v734
                  %v736 = vld [vmem:[%s498 + $0x730] sm:$0xff]
                  %737 = vst [vmem:[%s499 + $0x3b0] sm:$0xff] %v736
                  %v738 = vld [vmem:[%s498 + $0x738] sm:$0xff]
                  %739 = vst [vmem:[%s499 + $0x3b8] sm:$0xff] %v738
                  %v740 = vld [vmem:[%s498 + $0x740] sm:$0xff]
                  %741 = vst [vmem:[%s499 + $0x3c0] sm:$0xff] %v740
                  %v742 = vld [vmem:[%s498 + $0x748] sm:$0xff]
                  %743 = vst [vmem:[%s499 + $0x3c8] sm:$0xff] %v742
                  %v744 = vld [vmem:[%s498 + $0x750] sm:$0xff]
                  %745 = vst [vmem:[%s499 + $0x3d0] sm:$0xff] %v744
                  %v746 = vld [vmem:[%s498 + $0x758] sm:$0xff]
                  %747 = vst [vmem:[%s499 + $0x3d8] sm:$0xff] %v746
                  %v748 = vld [vmem:[%s498 + $0x760] sm:$0xff]
                  %749 = vst [vmem:[%s499 + $0x3e0] sm:$0xff] %v748
                  %v750 = vld [vmem:[%s498 + $0x768] sm:$0xff]
                  %751 = vst [vmem:[%s499 + $0x3e8] sm:$0xff] %v750
                  %v752 = vld [vmem:[%s498 + $0x770] sm:$0xff]
                  %753 = vst [vmem:[%s499 + $0x3f0] sm:$0xff] %v752
                  %v754 = vld [vmem:[%s498 + $0x778] sm:$0xff]
                  %755 = vst [vmem:[%s499 + $0x3f8] sm:$0xff] %v754
                $region60: #{tpu_custom_call.1} parent=54 // loop_footer
                  %s497 = sadd.s32 1, %s493
                $region61: #{tpu_custom_call.1} parent=54 // loop_footer_branch
                  %492 = sbr.rel target = $region57
                $region62: #{tpu_custom_call.1} parent=54 // loop_exit
                  _
              $region55: #{tpu_custom_call.1} parent=39 // pred_fallthru
                _
              // Predicated region
              $region63: #{tpu_custom_call.1} parent=39 // pred_check
                _
              $region64: #{tpu_custom_call.1} parent=39 // pred_check_branch
                %757 = sbr.rel target = $region66
              $region65: #{tpu_custom_call.1} parent=39 // pred_region
                _
              $region66: #{tpu_custom_call.1} parent=39 // pred_fallthru
                _
            $region40: #{tpu_custom_call.1} parent=35 // pred_fallthru
              _
            // Predicated region
            $region41: #{tpu_custom_call.1} parent=35 // pred_check
              _
            $region42: #{tpu_custom_call.1} parent=35 // pred_check_branch
              %223 = sbr.rel target = $region44
            $region43: #{tpu_custom_call.1} parent=35 // pred_region
              %s225 = ssub.s32 256, 1
              loop: start=0, step=1, limit=1
              $region45: #{tpu_custom_call.1} parent=43 // loop_pre_header
                _
              $region46: #{tpu_custom_call.1} parent=43 // loop_header
                %s227 = sphi 0, %s231
                %p228 = scmp.ge.s32.totalorder %s227, 1
                %s232 = sphi %s217, %s217
                %s233 = sphi %s211, %s211
              $region47: #{tpu_custom_call.1} parent=43 // loop_header_branch
                %230 = sbr.rel (%p228) target = $region51
              $region48: #{tpu_custom_call.1} parent=43 // loop_body
                %v234 = vld [vmem:[%s232] sm:%s225]
                %235 = vst [vmem:[%s233] sm:%s225] %v234
                %v236 = vld [vmem:[%s232 + $0x8] sm:%s225]
                %237 = vst [vmem:[%s233 + $0x8] sm:%s225] %v236
                %v238 = vld [vmem:[%s232 + $0x10] sm:%s225]
                %239 = vst [vmem:[%s233 + $0x10] sm:%s225] %v238
                %v240 = vld [vmem:[%s232 + $0x18] sm:%s225]
                %241 = vst [vmem:[%s233 + $0x18] sm:%s225] %v240
                %v242 = vld [vmem:[%s232 + $0x20] sm:%s225]
                %243 = vst [vmem:[%s233 + $0x20] sm:%s225] %v242
                %v244 = vld [vmem:[%s232 + $0x28] sm:%s225]
                %245 = vst [vmem:[%s233 + $0x28] sm:%s225] %v244
                %v246 = vld [vmem:[%s232 + $0x30] sm:%s225]
                %247 = vst [vmem:[%s233 + $0x30] sm:%s225] %v246
                %v248 = vld [vmem:[%s232 + $0x38] sm:%s225]
                %249 = vst [vmem:[%s233 + $0x38] sm:%s225] %v248
                %v250 = vld [vmem:[%s232 + $0x40] sm:%s225]
                %251 = vst [vmem:[%s233 + $0x40] sm:%s225] %v250
                %v252 = vld [vmem:[%s232 + $0x48] sm:%s225]
                %253 = vst [vmem:[%s233 + $0x48] sm:%s225] %v252
                %v254 = vld [vmem:[%s232 + $0x50] sm:%s225]
                %255 = vst [vmem:[%s233 + $0x50] sm:%s225] %v254
                %v256 = vld [vmem:[%s232 + $0x58] sm:%s225]
                %257 = vst [vmem:[%s233 + $0x58] sm:%s225] %v256
                %v258 = vld [vmem:[%s232 + $0x60] sm:%s225]
                %259 = vst [vmem:[%s233 + $0x60] sm:%s225] %v258
                %v260 = vld [vmem:[%s232 + $0x68] sm:%s225]
                %261 = vst [vmem:[%s233 + $0x68] sm:%s225] %v260
                %v262 = vld [vmem:[%s232 + $0x70] sm:%s225]
                %263 = vst [vmem:[%s233 + $0x70] sm:%s225] %v262
                %v264 = vld [vmem:[%s232 + $0x78] sm:%s225]
                %265 = vst [vmem:[%s233 + $0x78] sm:%s225] %v264
                %v266 = vld [vmem:[%s232 + $0x100] sm:%s225]
                %267 = vst [vmem:[%s233 + $0x80] sm:%s225] %v266
                %v268 = vld [vmem:[%s232 + $0x108] sm:%s225]
                %269 = vst [vmem:[%s233 + $0x88] sm:%s225] %v268
                %v270 = vld [vmem:[%s232 + $0x110] sm:%s225]
                %271 = vst [vmem:[%s233 + $0x90] sm:%s225] %v270
                %v272 = vld [vmem:[%s232 + $0x118] sm:%s225]
                %273 = vst [vmem:[%s233 + $0x98] sm:%s225] %v272
                %v274 = vld [vmem:[%s232 + $0x120] sm:%s225]
                %275 = vst [vmem:[%s233 + $0xa0] sm:%s225] %v274
                %v276 = vld [vmem:[%s232 + $0x128] sm:%s225]
                %277 = vst [vmem:[%s233 + $0xa8] sm:%s225] %v276
                %v278 = vld [vmem:[%s232 + $0x130] sm:%s225]
                %279 = vst [vmem:[%s233 + $0xb0] sm:%s225] %v278
                %v280 = vld [vmem:[%s232 + $0x138] sm:%s225]
                %281 = vst [vmem:[%s233 + $0xb8] sm:%s225] %v280
                %v282 = vld [vmem:[%s232 + $0x140] sm:%s225]
                %283 = vst [vmem:[%s233 + $0xc0] sm:%s225] %v282
                %v284 = vld [vmem:[%s232 + $0x148] sm:%s225]
                %285 = vst [vmem:[%s233 + $0xc8] sm:%s225] %v284
                %v286 = vld [vmem:[%s232 + $0x150] sm:%s225]
                %287 = vst [vmem:[%s233 + $0xd0] sm:%s225] %v286
                %v288 = vld [vmem:[%s232 + $0x158] sm:%s225]
                %289 = vst [vmem:[%s233 + $0xd8] sm:%s225] %v288
                %v290 = vld [vmem:[%s232 + $0x160] sm:%s225]
                %291 = vst [vmem:[%s233 + $0xe0] sm:%s225] %v290
                %v292 = vld [vmem:[%s232 + $0x168] sm:%s225]
                %293 = vst [vmem:[%s233 + $0xe8] sm:%s225] %v292
                %v294 = vld [vmem:[%s232 + $0x170] sm:%s225]
                %295 = vst [vmem:[%s233 + $0xf0] sm:%s225] %v294
                %v296 = vld [vmem:[%s232 + $0x178] sm:%s225]
                %297 = vst [vmem:[%s233 + $0xf8] sm:%s225] %v296
                %v298 = vld [vmem:[%s232 + $0x200] sm:%s225]
                %299 = vst [vmem:[%s233 + $0x100] sm:%s225] %v298
                %v300 = vld [vmem:[%s232 + $0x208] sm:%s225]
                %301 = vst [vmem:[%s233 + $0x108] sm:%s225] %v300
                %v302 = vld [vmem:[%s232 + $0x210] sm:%s225]
                %303 = vst [vmem:[%s233 + $0x110] sm:%s225] %v302
                %v304 = vld [vmem:[%s232 + $0x218] sm:%s225]
                %305 = vst [vmem:[%s233 + $0x118] sm:%s225] %v304
                %v306 = vld [vmem:[%s232 + $0x220] sm:%s225]
                %307 = vst [vmem:[%s233 + $0x120] sm:%s225] %v306
                %v308 = vld [vmem:[%s232 + $0x228] sm:%s225]
                %309 = vst [vmem:[%s233 + $0x128] sm:%s225] %v308
                %v310 = vld [vmem:[%s232 + $0x230] sm:%s225]
                %311 = vst [vmem:[%s233 + $0x130] sm:%s225] %v310
                %v312 = vld [vmem:[%s232 + $0x238] sm:%s225]
                %313 = vst [vmem:[%s233 + $0x138] sm:%s225] %v312
                %v314 = vld [vmem:[%s232 + $0x240] sm:%s225]
                %315 = vst [vmem:[%s233 + $0x140] sm:%s225] %v314
                %v316 = vld [vmem:[%s232 + $0x248] sm:%s225]
                %317 = vst [vmem:[%s233 + $0x148] sm:%s225] %v316
                %v318 = vld [vmem:[%s232 + $0x250] sm:%s225]
                %319 = vst [vmem:[%s233 + $0x150] sm:%s225] %v318
                %v320 = vld [vmem:[%s232 + $0x258] sm:%s225]
                %321 = vst [vmem:[%s233 + $0x158] sm:%s225] %v320
                %v322 = vld [vmem:[%s232 + $0x260] sm:%s225]
                %323 = vst [vmem:[%s233 + $0x160] sm:%s225] %v322
                %v324 = vld [vmem:[%s232 + $0x268] sm:%s225]
                %325 = vst [vmem:[%s233 + $0x168] sm:%s225] %v324
                %v326 = vld [vmem:[%s232 + $0x270] sm:%s225]
                %327 = vst [vmem:[%s233 + $0x170] sm:%s225] %v326
                %v328 = vld [vmem:[%s232 + $0x278] sm:%s225]
                %329 = vst [vmem:[%s233 + $0x178] sm:%s225] %v328
                %v330 = vld [vmem:[%s232 + $0x300] sm:%s225]
                %331 = vst [vmem:[%s233 + $0x180] sm:%s225] %v330
                %v332 = vld [vmem:[%s232 + $0x308] sm:%s225]
                %333 = vst [vmem:[%s233 + $0x188] sm:%s225] %v332
                %v334 = vld [vmem:[%s232 + $0x310] sm:%s225]
                %335 = vst [vmem:[%s233 + $0x190] sm:%s225] %v334
                %v336 = vld [vmem:[%s232 + $0x318] sm:%s225]
                %337 = vst [vmem:[%s233 + $0x198] sm:%s225] %v336
                %v338 = vld [vmem:[%s232 + $0x320] sm:%s225]
                %339 = vst [vmem:[%s233 + $0x1a0] sm:%s225] %v338
                %v340 = vld [vmem:[%s232 + $0x328] sm:%s225]
                %341 = vst [vmem:[%s233 + $0x1a8] sm:%s225] %v340
                %v342 = vld [vmem:[%s232 + $0x330] sm:%s225]
                %343 = vst [vmem:[%s233 + $0x1b0] sm:%s225] %v342
                %v344 = vld [vmem:[%s232 + $0x338] sm:%s225]
                %345 = vst [vmem:[%s233 + $0x1b8] sm:%s225] %v344
                %v346 = vld [vmem:[%s232 + $0x340] sm:%s225]
                %347 = vst [vmem:[%s233 + $0x1c0] sm:%s225] %v346
                %v348 = vld [vmem:[%s232 + $0x348] sm:%s225]
                %349 = vst [vmem:[%s233 + $0x1c8] sm:%s225] %v348
                %v350 = vld [vmem:[%s232 + $0x350] sm:%s225]
                %351 = vst [vmem:[%s233 + $0x1d0] sm:%s225] %v350
                %v352 = vld [vmem:[%s232 + $0x358] sm:%s225]
                %353 = vst [vmem:[%s233 + $0x1d8] sm:%s225] %v352
                %v354 = vld [vmem:[%s232 + $0x360] sm:%s225]
                %355 = vst [vmem:[%s233 + $0x1e0] sm:%s225] %v354
                %v356 = vld [vmem:[%s232 + $0x368] sm:%s225]
                %357 = vst [vmem:[%s233 + $0x1e8] sm:%s225] %v356
                %v358 = vld [vmem:[%s232 + $0x370] sm:%s225]
                %359 = vst [vmem:[%s233 + $0x1f0] sm:%s225] %v358
                %v360 = vld [vmem:[%s232 + $0x378] sm:%s225]
                %361 = vst [vmem:[%s233 + $0x1f8] sm:%s225] %v360
                %v362 = vld [vmem:[%s232 + $0x400] sm:%s225]
                %363 = vst [vmem:[%s233 + $0x200] sm:%s225] %v362
                %v364 = vld [vmem:[%s232 + $0x408] sm:%s225]
                %365 = vst [vmem:[%s233 + $0x208] sm:%s225] %v364
                %v366 = vld [vmem:[%s232 + $0x410] sm:%s225]
                %367 = vst [vmem:[%s233 + $0x210] sm:%s225] %v366
                %v368 = vld [vmem:[%s232 + $0x418] sm:%s225]
                %369 = vst [vmem:[%s233 + $0x218] sm:%s225] %v368
                %v370 = vld [vmem:[%s232 + $0x420] sm:%s225]
                %371 = vst [vmem:[%s233 + $0x220] sm:%s225] %v370
                %v372 = vld [vmem:[%s232 + $0x428] sm:%s225]
                %373 = vst [vmem:[%s233 + $0x228] sm:%s225] %v372
                %v374 = vld [vmem:[%s232 + $0x430] sm:%s225]
                %375 = vst [vmem:[%s233 + $0x230] sm:%s225] %v374
                %v376 = vld [vmem:[%s232 + $0x438] sm:%s225]
                %377 = vst [vmem:[%s233 + $0x238] sm:%s225] %v376
                %v378 = vld [vmem:[%s232 + $0x440] sm:%s225]
                %379 = vst [vmem:[%s233 + $0x240] sm:%s225] %v378
                %v380 = vld [vmem:[%s232 + $0x448] sm:%s225]
                %381 = vst [vmem:[%s233 + $0x248] sm:%s225] %v380
                %v382 = vld [vmem:[%s232 + $0x450] sm:%s225]
                %383 = vst [vmem:[%s233 + $0x250] sm:%s225] %v382
                %v384 = vld [vmem:[%s232 + $0x458] sm:%s225]
                %385 = vst [vmem:[%s233 + $0x258] sm:%s225] %v384
                %v386 = vld [vmem:[%s232 + $0x460] sm:%s225]
                %387 = vst [vmem:[%s233 + $0x260] sm:%s225] %v386
                %v388 = vld [vmem:[%s232 + $0x468] sm:%s225]
                %389 = vst [vmem:[%s233 + $0x268] sm:%s225] %v388
                %v390 = vld [vmem:[%s232 + $0x470] sm:%s225]
                %391 = vst [vmem:[%s233 + $0x270] sm:%s225] %v390
                %v392 = vld [vmem:[%s232 + $0x478] sm:%s225]
                %393 = vst [vmem:[%s233 + $0x278] sm:%s225] %v392
                %v394 = vld [vmem:[%s232 + $0x500] sm:%s225]
                %395 = vst [vmem:[%s233 + $0x280] sm:%s225] %v394
                %v396 = vld [vmem:[%s232 + $0x508] sm:%s225]
                %397 = vst [vmem:[%s233 + $0x288] sm:%s225] %v396
                %v398 = vld [vmem:[%s232 + $0x510] sm:%s225]
                %399 = vst [vmem:[%s233 + $0x290] sm:%s225] %v398
                %v400 = vld [vmem:[%s232 + $0x518] sm:%s225]
                %401 = vst [vmem:[%s233 + $0x298] sm:%s225] %v400
                %v402 = vld [vmem:[%s232 + $0x520] sm:%s225]
                %403 = vst [vmem:[%s233 + $0x2a0] sm:%s225] %v402
                %v404 = vld [vmem:[%s232 + $0x528] sm:%s225]
                %405 = vst [vmem:[%s233 + $0x2a8] sm:%s225] %v404
                %v406 = vld [vmem:[%s232 + $0x530] sm:%s225]
                %407 = vst [vmem:[%s233 + $0x2b0] sm:%s225] %v406
                %v408 = vld [vmem:[%s232 + $0x538] sm:%s225]
                %409 = vst [vmem:[%s233 + $0x2b8] sm:%s225] %v408
                %v410 = vld [vmem:[%s232 + $0x540] sm:%s225]
                %411 = vst [vmem:[%s233 + $0x2c0] sm:%s225] %v410
                %v412 = vld [vmem:[%s232 + $0x548] sm:%s225]
                %413 = vst [vmem:[%s233 + $0x2c8] sm:%s225] %v412
                %v414 = vld [vmem:[%s232 + $0x550] sm:%s225]
                %415 = vst [vmem:[%s233 + $0x2d0] sm:%s225] %v414
                %v416 = vld [vmem:[%s232 + $0x558] sm:%s225]
                %417 = vst [vmem:[%s233 + $0x2d8] sm:%s225] %v416
                %v418 = vld [vmem:[%s232 + $0x560] sm:%s225]
                %419 = vst [vmem:[%s233 + $0x2e0] sm:%s225] %v418
                %v420 = vld [vmem:[%s232 + $0x568] sm:%s225]
                %421 = vst [vmem:[%s233 + $0x2e8] sm:%s225] %v420
                %v422 = vld [vmem:[%s232 + $0x570] sm:%s225]
                %423 = vst [vmem:[%s233 + $0x2f0] sm:%s225] %v422
                %v424 = vld [vmem:[%s232 + $0x578] sm:%s225]
                %425 = vst [vmem:[%s233 + $0x2f8] sm:%s225] %v424
                %v426 = vld [vmem:[%s232 + $0x600] sm:%s225]
                %427 = vst [vmem:[%s233 + $0x300] sm:%s225] %v426
                %v428 = vld [vmem:[%s232 + $0x608] sm:%s225]
                %429 = vst [vmem:[%s233 + $0x308] sm:%s225] %v428
                %v430 = vld [vmem:[%s232 + $0x610] sm:%s225]
                %431 = vst [vmem:[%s233 + $0x310] sm:%s225] %v430
                %v432 = vld [vmem:[%s232 + $0x618] sm:%s225]
                %433 = vst [vmem:[%s233 + $0x318] sm:%s225] %v432
                %v434 = vld [vmem:[%s232 + $0x620] sm:%s225]
                %435 = vst [vmem:[%s233 + $0x320] sm:%s225] %v434
                %v436 = vld [vmem:[%s232 + $0x628] sm:%s225]
                %437 = vst [vmem:[%s233 + $0x328] sm:%s225] %v436
                %v438 = vld [vmem:[%s232 + $0x630] sm:%s225]
                %439 = vst [vmem:[%s233 + $0x330] sm:%s225] %v438
                %v440 = vld [vmem:[%s232 + $0x638] sm:%s225]
                %441 = vst [vmem:[%s233 + $0x338] sm:%s225] %v440
                %v442 = vld [vmem:[%s232 + $0x640] sm:%s225]
                %443 = vst [vmem:[%s233 + $0x340] sm:%s225] %v442
                %v444 = vld [vmem:[%s232 + $0x648] sm:%s225]
                %445 = vst [vmem:[%s233 + $0x348] sm:%s225] %v444
                %v446 = vld [vmem:[%s232 + $0x650] sm:%s225]
                %447 = vst [vmem:[%s233 + $0x350] sm:%s225] %v446
                %v448 = vld [vmem:[%s232 + $0x658] sm:%s225]
                %449 = vst [vmem:[%s233 + $0x358] sm:%s225] %v448
                %v450 = vld [vmem:[%s232 + $0x660] sm:%s225]
                %451 = vst [vmem:[%s233 + $0x360] sm:%s225] %v450
                %v452 = vld [vmem:[%s232 + $0x668] sm:%s225]
                %453 = vst [vmem:[%s233 + $0x368] sm:%s225] %v452
                %v454 = vld [vmem:[%s232 + $0x670] sm:%s225]
                %455 = vst [vmem:[%s233 + $0x370] sm:%s225] %v454
                %v456 = vld [vmem:[%s232 + $0x678] sm:%s225]
                %457 = vst [vmem:[%s233 + $0x378] sm:%s225] %v456
                %v458 = vld [vmem:[%s232 + $0x700] sm:%s225]
                %459 = vst [vmem:[%s233 + $0x380] sm:%s225] %v458
                %v460 = vld [vmem:[%s232 + $0x708] sm:%s225]
                %461 = vst [vmem:[%s233 + $0x388] sm:%s225] %v460
                %v462 = vld [vmem:[%s232 + $0x710] sm:%s225]
                %463 = vst [vmem:[%s233 + $0x390] sm:%s225] %v462
                %v464 = vld [vmem:[%s232 + $0x718] sm:%s225]
                %465 = vst [vmem:[%s233 + $0x398] sm:%s225] %v464
                %v466 = vld [vmem:[%s232 + $0x720] sm:%s225]
                %467 = vst [vmem:[%s233 + $0x3a0] sm:%s225] %v466
                %v468 = vld [vmem:[%s232 + $0x728] sm:%s225]
                %469 = vst [vmem:[%s233 + $0x3a8] sm:%s225] %v468
                %v470 = vld [vmem:[%s232 + $0x730] sm:%s225]
                %471 = vst [vmem:[%s233 + $0x3b0] sm:%s225] %v470
                %v472 = vld [vmem:[%s232 + $0x738] sm:%s225]
                %473 = vst [vmem:[%s233 + $0x3b8] sm:%s225] %v472
                %v474 = vld [vmem:[%s232 + $0x740] sm:%s225]
                %475 = vst [vmem:[%s233 + $0x3c0] sm:%s225] %v474
                %v476 = vld [vmem:[%s232 + $0x748] sm:%s225]
                %477 = vst [vmem:[%s233 + $0x3c8] sm:%s225] %v476
                %v478 = vld [vmem:[%s232 + $0x750] sm:%s225]
                %479 = vst [vmem:[%s233 + $0x3d0] sm:%s225] %v478
                %v480 = vld [vmem:[%s232 + $0x758] sm:%s225]
                %481 = vst [vmem:[%s233 + $0x3d8] sm:%s225] %v480
                %v482 = vld [vmem:[%s232 + $0x760] sm:%s225]
                %483 = vst [vmem:[%s233 + $0x3e0] sm:%s225] %v482
                %v484 = vld [vmem:[%s232 + $0x768] sm:%s225]
                %485 = vst [vmem:[%s233 + $0x3e8] sm:%s225] %v484
                %v486 = vld [vmem:[%s232 + $0x770] sm:%s225]
                %487 = vst [vmem:[%s233 + $0x3f0] sm:%s225] %v486
                %v488 = vld [vmem:[%s232 + $0x778] sm:%s225]
                %489 = vst [vmem:[%s233 + $0x3f8] sm:%s225] %v488
              $region49: #{tpu_custom_call.1} parent=43 // loop_footer
                %s231 = sadd.s32 1, %s227
              $region50: #{tpu_custom_call.1} parent=43 // loop_footer_branch
                %226 = sbr.rel target = $region46
              $region51: #{tpu_custom_call.1} parent=43 // loop_exit
                _
            $region44: #{tpu_custom_call.1} parent=35 // pred_fallthru
              _
          $region36: #{tpu_custom_call.1} parent=31 // pred_fallthru
            _
          %758 = vnop
        $region32: #{tpu_custom_call.1} parent=27 // pred_fallthru
          _
        // Predicated region
        $region67: #{tpu_custom_call.1} parent=27 // pred_check
          %p759 = pneg %p75
        $region68: #{tpu_custom_call.1} parent=27 // pred_check_branch
          %761 = sbr.rel (%p759) target = $region70
        $region69: #{tpu_custom_call.1} parent=27 // pred_region
          %p762 = scmp.lt.s32.totalorder %s20, 1
          %s763 = scalar_select %p762, %s20, 1
          %p764 = scmp.lt.s32.totalorder %s21, 1
          %s765 = scalar_select %p764, %s21, 1
          %s766 = smul.addr %s763, 2
          %s767 = sadd.s32 %s765, %s766
          %s768 = smul.addr %s767, 8
          %s769 = scalar_lea.vmem %s1, %s768
        $region70: #{tpu_custom_call.1} parent=27 // pred_fallthru
          _
      $region28: #{tpu_custom_call.1} parent=5 // pred_fallthru
        _
      %p770 = scmp.le.s32.totalorder 1, %s13
      %p771 = scmp.lt.s32.totalorder %s13, 5
      %p772 = pnand %p770, %p771
      %p773 = pneg %p772
      // Predicated region
      $region71: #{tpu_custom_call.1} parent=5 // pred_check
        _
      $region72: #{tpu_custom_call.1} parent=5 // pred_check_branch
        %775 = sbr.rel (%p772) target = $region74
      $region73: #{tpu_custom_call.1} parent=5 // pred_region
        %s776 = ssub.s32 %s13, 1
        %s777 = sand.u32 %s40, 1
        %s778 = sand.u32 %s40, 1
        %s779 = smul.addr %s778, 1024
        %s780 = scalar_lea.vmem [#allocation3], %s779
        // Predicated region
        $region75: #{tpu_custom_call.1} parent=73 // pred_check
          %p781 = pneg %p53
        $region76: #{tpu_custom_call.1} parent=73 // pred_check_branch
          %783 = sbr.rel (%p781) target = $region78
        $region77: #{tpu_custom_call.1} parent=73 // pred_region
          _
        $region78: #{tpu_custom_call.1} parent=73 // pred_fallthru
          _
        // Predicated region
        $region79: #{tpu_custom_call.1} parent=73 // pred_check
          %p784 = pneg %p144
        $region80: #{tpu_custom_call.1} parent=73 // pred_check_branch
          %786 = sbr.rel (%p784) target = $region82
        $region81: #{tpu_custom_call.1} parent=73 // pred_region
          %788 = dma.done [#allocation5], 16
        $region82: #{tpu_custom_call.1} parent=73 // pred_fallthru
          _
        %789 = sfence
        %s790 = sand.u32 %s40, 1
        %s791 = sand.u32 %s40, 1
        %s792 = smul.addr %s791, 1024
        %s793 = scalar_lea.vmem [#allocation3], %s792
        %p794 = pneg %p53
        %p795 = pneg %p50
        %p796 = scmp.lt.s32.totalorder %s22, 1
        %s797 = scalar_select %p796, %s22, 1
        %p798 = scmp.lt.s32.totalorder %s23, 1
        %s799 = scalar_select %p798, %s23, 1
        %s800 = smul.addr %s797, 2
        %s801 = sadd.s32 %s799, %s800
        %s802 = smul.addr %s801, 8
        %s803 = scalar_lea.vmem %s1, %s802
        %p804 = pneg %p81
        %p805 = pneg %p78
        %p806 = pneg %p102
        %p807 = pneg %p99
        %p808 = pneg %p123
        %p809 = pneg %p120
        %p810 = pneg %p144
        %p811 = pneg %p141
        %p812 = pneg %p170
        %p813 = pneg %p167
        %p814 = scmp.lt.s32.totalorder %s22, 1
        %s815 = scalar_select %p814, %s22, 1
        %s816 = smul.addr %s815, 8
        %s817 = scalar_lea.vmem %s5, %s816
        %s818 = smul.u32 8, %s22
        %s819 = smul.u32 16, %s23
        %p820 = scmp.lt.s32.totalorder %s22, 1
        %s821 = scalar_select %p820, %s22, 1
        %p822 = scmp.lt.s32.totalorder %s23, 1
        %s823 = scalar_select %p822, %s23, 1
        %s824 = smul.addr %s821, 2
        %s825 = sadd.s32 %s823, %s824
        %s826 = smul.addr %s825, 8
        %s827 = scalar_lea.vmem %s1, %s826
        %p828 = scmp.lt.s32.totalorder %s22, 1
        %s829 = scalar_select %p828, %s22, 1
        %s830 = smul.addr %s829, 8
        %s831 = scalar_lea.vmem %s5, %s830
        %p832 = scmp.eq.s32.totalorder %s23, 0
        // Predicated region
        $region83: #{tpu_custom_call.1} parent=73 // pred_check
          %p833 = pneg %p832
        $region84: #{tpu_custom_call.1} parent=73 // pred_check_branch
          %835 = sbr.rel (%p833) target = $region86
        $region85: #{tpu_custom_call.1} parent=73 // pred_region
          %vm836 = vcmask 7168
          %837 = vst.msk [vmem:[%s831] sm:$0xff] %vm836, 0.0
        $region86: #{tpu_custom_call.1} parent=73 // pred_fallthru
          _
        %v838 = vld [vmem:[%s780] sm:$0xff]
        %v839 = vld [vmem:[%s780 + $0x8] sm:$0xff]
        %v840 = vld [vmem:[%s780 + $0x10] sm:$0xff]
        %v841 = vld [vmem:[%s780 + $0x18] sm:$0xff]
        %v842 = vld [vmem:[%s780 + $0x20] sm:$0xff]
        %v843 = vld [vmem:[%s780 + $0x28] sm:$0xff]
        %v844 = vld [vmem:[%s780 + $0x30] sm:$0xff]
        %v845 = vld [vmem:[%s780 + $0x38] sm:$0xff]
        %v846 = vld [vmem:[%s780 + $0x40] sm:$0xff]
        %v847 = vld [vmem:[%s780 + $0x48] sm:$0xff]
        %v848 = vld [vmem:[%s780 + $0x50] sm:$0xff]
        %v849 = vld [vmem:[%s780 + $0x58] sm:$0xff]
        %v850 = vld [vmem:[%s780 + $0x60] sm:$0xff]
        %v851 = vld [vmem:[%s780 + $0x68] sm:$0xff]
        %v852 = vld [vmem:[%s780 + $0x70] sm:$0xff]
        %v853 = vld [vmem:[%s780 + $0x78] sm:$0xff]
        %v854 = vld [vmem:[%s780 + $0x80] sm:$0xff]
        %v855 = vld [vmem:[%s780 + $0x88] sm:$0xff]
        %v856 = vld [vmem:[%s780 + $0x90] sm:$0xff]
        %v857 = vld [vmem:[%s780 + $0x98] sm:$0xff]
        %v858 = vld [vmem:[%s780 + $0xa0] sm:$0xff]
        %v859 = vld [vmem:[%s780 + $0xa8] sm:$0xff]
        %v860 = vld [vmem:[%s780 + $0xb0] sm:$0xff]
        %v861 = vld [vmem:[%s780 + $0xb8] sm:$0xff]
        %v862 = vld [vmem:[%s780 + $0xc0] sm:$0xff]
        %v863 = vld [vmem:[%s780 + $0xc8] sm:$0xff]
        %v864 = vld [vmem:[%s780 + $0xd0] sm:$0xff]
        %v865 = vld [vmem:[%s780 + $0xd8] sm:$0xff]
        %v866 = vld [vmem:[%s780 + $0xe0] sm:$0xff]
        %v867 = vld [vmem:[%s780 + $0xe8] sm:$0xff]
        %v868 = vld [vmem:[%s780 + $0xf0] sm:$0xff]
        %v869 = vld [vmem:[%s780 + $0xf8] sm:$0xff]
        %v870 = vld [vmem:[%s780 + $0x100] sm:$0xff]
        %v871 = vld [vmem:[%s780 + $0x108] sm:$0xff]
        %v872 = vld [vmem:[%s780 + $0x110] sm:$0xff]
        %v873 = vld [vmem:[%s780 + $0x118] sm:$0xff]
        %v874 = vld [vmem:[%s780 + $0x120] sm:$0xff]
        %v875 = vld [vmem:[%s780 + $0x128] sm:$0xff]
        %v876 = vld [vmem:[%s780 + $0x130] sm:$0xff]
        %v877 = vld [vmem:[%s780 + $0x138] sm:$0xff]
        %v878 = vld [vmem:[%s780 + $0x140] sm:$0xff]
        %v879 = vld [vmem:[%s780 + $0x148] sm:$0xff]
        %v880 = vld [vmem:[%s780 + $0x150] sm:$0xff]
        %v881 = vld [vmem:[%s780 + $0x158] sm:$0xff]
        %v882 = vld [vmem:[%s780 + $0x160] sm:$0xff]
        %v883 = vld [vmem:[%s780 + $0x168] sm:$0xff]
        %v884 = vld [vmem:[%s780 + $0x170] sm:$0xff]
        %v885 = vld [vmem:[%s780 + $0x178] sm:$0xff]
        %v886 = vld [vmem:[%s780 + $0x180] sm:$0xff]
        %v887 = vld [vmem:[%s780 + $0x188] sm:$0xff]
        %v888 = vld [vmem:[%s780 + $0x190] sm:$0xff]
        %v889 = vld [vmem:[%s780 + $0x198] sm:$0xff]
        %v890 = vld [vmem:[%s780 + $0x1a0] sm:$0xff]
        %v891 = vld [vmem:[%s780 + $0x1a8] sm:$0xff]
        %v892 = vld [vmem:[%s780 + $0x1b0] sm:$0xff]
        %v893 = vld [vmem:[%s780 + $0x1b8] sm:$0xff]
        %v894 = vld [vmem:[%s780 + $0x1c0] sm:$0xff]
        %v895 = vld [vmem:[%s780 + $0x1c8] sm:$0xff]
        %v896 = vld [vmem:[%s780 + $0x1d0] sm:$0xff]
        %v897 = vld [vmem:[%s780 + $0x1d8] sm:$0xff]
        %v898 = vld [vmem:[%s780 + $0x1e0] sm:$0xff]
        %v899 = vld [vmem:[%s780 + $0x1e8] sm:$0xff]
        %v900 = vld [vmem:[%s780 + $0x1f0] sm:$0xff]
        %v901 = vld [vmem:[%s780 + $0x1f8] sm:$0xff]
        %v902 = vld [vmem:[%s780 + $0x200] sm:$0xff]
        %v903 = vld [vmem:[%s780 + $0x208] sm:$0xff]
        %v904 = vld [vmem:[%s780 + $0x210] sm:$0xff]
        %v905 = vld [vmem:[%s780 + $0x218] sm:$0xff]
        %v906 = vld [vmem:[%s780 + $0x220] sm:$0xff]
        %v907 = vld [vmem:[%s780 + $0x228] sm:$0xff]
        %v908 = vld [vmem:[%s780 + $0x230] sm:$0xff]
        %v909 = vld [vmem:[%s780 + $0x238] sm:$0xff]
        %v910 = vld [vmem:[%s780 + $0x240] sm:$0xff]
        %v911 = vld [vmem:[%s780 + $0x248] sm:$0xff]
        %v912 = vld [vmem:[%s780 + $0x250] sm:$0xff]
        %v913 = vld [vmem:[%s780 + $0x258] sm:$0xff]
        %v914 = vld [vmem:[%s780 + $0x260] sm:$0xff]
        %v915 = vld [vmem:[%s780 + $0x268] sm:$0xff]
        %v916 = vld [vmem:[%s780 + $0x270] sm:$0xff]
        %v917 = vld [vmem:[%s780 + $0x278] sm:$0xff]
        %v918 = vld [vmem:[%s780 + $0x280] sm:$0xff]
        %v919 = vld [vmem:[%s780 + $0x288] sm:$0xff]
        %v920 = vld [vmem:[%s780 + $0x290] sm:$0xff]
        %v921 = vld [vmem:[%s780 + $0x298] sm:$0xff]
        %v922 = vld [vmem:[%s780 + $0x2a0] sm:$0xff]
        %v923 = vld [vmem:[%s780 + $0x2a8] sm:$0xff]
        %v924 = vld [vmem:[%s780 + $0x2b0] sm:$0xff]
        %v925 = vld [vmem:[%s780 + $0x2b8] sm:$0xff]
        %v926 = vld [vmem:[%s780 + $0x2c0] sm:$0xff]
        %v927 = vld [vmem:[%s780 + $0x2c8] sm:$0xff]
        %v928 = vld [vmem:[%s780 + $0x2d0] sm:$0xff]
        %v929 = vld [vmem:[%s780 + $0x2d8] sm:$0xff]
        %v930 = vld [vmem:[%s780 + $0x2e0] sm:$0xff]
        %v931 = vld [vmem:[%s780 + $0x2e8] sm:$0xff]
        %v932 = vld [vmem:[%s780 + $0x2f0] sm:$0xff]
        %v933 = vld [vmem:[%s780 + $0x2f8] sm:$0xff]
        %v934 = vld [vmem:[%s780 + $0x300] sm:$0xff]
        %v935 = vld [vmem:[%s780 + $0x308] sm:$0xff]
        %v936 = vld [vmem:[%s780 + $0x310] sm:$0xff]
        %v937 = vld [vmem:[%s780 + $0x318] sm:$0xff]
        %v938 = vld [vmem:[%s780 + $0x320] sm:$0xff]
        %v939 = vld [vmem:[%s780 + $0x328] sm:$0xff]
        %v940 = vld [vmem:[%s780 + $0x330] sm:$0xff]
        %v941 = vld [vmem:[%s780 + $0x338] sm:$0xff]
        %v942 = vld [vmem:[%s780 + $0x340] sm:$0xff]
        %v943 = vld [vmem:[%s780 + $0x348] sm:$0xff]
        %v944 = vld [vmem:[%s780 + $0x350] sm:$0xff]
        %v945 = vld [vmem:[%s780 + $0x358] sm:$0xff]
        %v946 = vld [vmem:[%s780 + $0x360] sm:$0xff]
        %v947 = vld [vmem:[%s780 + $0x368] sm:$0xff]
        %v948 = vld [vmem:[%s780 + $0x370] sm:$0xff]
        %v949 = vld [vmem:[%s780 + $0x378] sm:$0xff]
        %v950 = vld [vmem:[%s780 + $0x380] sm:$0xff]
        %v951 = vld [vmem:[%s780 + $0x388] sm:$0xff]
        %v952 = vld [vmem:[%s780 + $0x390] sm:$0xff]
        %v953 = vld [vmem:[%s780 + $0x398] sm:$0xff]
        %v954 = vld [vmem:[%s780 + $0x3a0] sm:$0xff]
        %v955 = vld [vmem:[%s780 + $0x3a8] sm:$0xff]
        %v956 = vld [vmem:[%s780 + $0x3b0] sm:$0xff]
        %v957 = vld [vmem:[%s780 + $0x3b8] sm:$0xff]
        %v958 = vld [vmem:[%s780 + $0x3c0] sm:$0xff]
        %v959 = vld [vmem:[%s780 + $0x3c8] sm:$0xff]
        %v960 = vld [vmem:[%s780 + $0x3d0] sm:$0xff]
        %v961 = vld [vmem:[%s780 + $0x3d8] sm:$0xff]
        %v962 = vld [vmem:[%s780 + $0x3e0] sm:$0xff]
        %v963 = vld [vmem:[%s780 + $0x3e8] sm:$0xff]
        %v964 = vld [vmem:[%s780 + $0x3f0] sm:$0xff]
        %v965 = vld [vmem:[%s780 + $0x3f8] sm:$0xff]
        %v966 = vld [vmem:[%s827] sm:$0xff]
        %v967 = vld [vmem:[%s2] sm:$0x1]
        %s968 = sld [smem:[#allocation2]]
        %vm969 = vcmask 261120
        %v970 = vsel %vm969, %v838, 0.0
        %971 = vadd.xlane.f32.xlu0 %v970
        %v972 = vpop.xlane.xlu0 %971
        %v973 = vsel %vm969, %v839, 0.0
        %974 = vadd.xlane.f32.xlu0 %v973
        %v975 = vpop.xlane.xlu0 %974
        %v976 = vsel %vm969, %v840, 0.0
        %977 = vadd.xlane.f32.xlu0 %v976
        %v978 = vpop.xlane.xlu0 %977
        %v979 = vsel %vm969, %v841, 0.0
        %980 = vadd.xlane.f32.xlu0 %v979
        %v981 = vpop.xlane.xlu0 %980
        %v982 = vsel %vm969, %v842, 0.0
        %983 = vadd.xlane.f32.xlu0 %v982
        %v984 = vpop.xlane.xlu0 %983
        %v985 = vsel %vm969, %v843, 0.0
        %986 = vadd.xlane.f32.xlu0 %v985
        %v987 = vpop.xlane.xlu0 %986
        %v988 = vsel %vm969, %v844, 0.0
        %989 = vadd.xlane.f32.xlu0 %v988
        %v990 = vpop.xlane.xlu0 %989
        %v991 = vsel %vm969, %v845, 0.0
        %992 = vadd.xlane.f32.xlu0 %v991
        %v993 = vpop.xlane.xlu0 %992
        %v994 = vsel %vm969, %v846, 0.0
        %995 = vadd.xlane.f32.xlu0 %v994
        %v996 = vpop.xlane.xlu0 %995
        %v997 = vsel %vm969, %v847, 0.0
        %998 = vadd.xlane.f32.xlu0 %v997
        %v999 = vpop.xlane.xlu0 %998
        %v1000 = vsel %vm969, %v848, 0.0
        %1001 = vadd.xlane.f32.xlu0 %v1000
        %v1002 = vpop.xlane.xlu0 %1001
        %v1003 = vsel %vm969, %v849, 0.0
        %1004 = vadd.xlane.f32.xlu0 %v1003
        %v1005 = vpop.xlane.xlu0 %1004
        %v1006 = vsel %vm969, %v850, 0.0
        %1007 = vadd.xlane.f32.xlu0 %v1006
        %v1008 = vpop.xlane.xlu0 %1007
        %v1009 = vsel %vm969, %v851, 0.0
        %1010 = vadd.xlane.f32.xlu0 %v1009
        %v1011 = vpop.xlane.xlu0 %1010
        %v1012 = vsel %vm969, %v852, 0.0
        %1013 = vadd.xlane.f32.xlu0 %v1012
        %v1014 = vpop.xlane.xlu0 %1013
        %v1015 = vsel %vm969, %v853, 0.0
        %1016 = vadd.xlane.f32.xlu0 %v1015
        %v1017 = vpop.xlane.xlu0 %1016
        %v1018 = vsel %vm969, %v854, 0.0
        %1019 = vadd.xlane.f32.xlu0 %v1018
        %v1020 = vpop.xlane.xlu0 %1019
        %v1021 = vsel %vm969, %v855, 0.0
        %1022 = vadd.xlane.f32.xlu0 %v1021
        %v1023 = vpop.xlane.xlu0 %1022
        %v1024 = vsel %vm969, %v856, 0.0
        %1025 = vadd.xlane.f32.xlu0 %v1024
        %v1026 = vpop.xlane.xlu0 %1025
        %v1027 = vsel %vm969, %v857, 0.0
        %1028 = vadd.xlane.f32.xlu0 %v1027
        %v1029 = vpop.xlane.xlu0 %1028
        %v1030 = vsel %vm969, %v858, 0.0
        %1031 = vadd.xlane.f32.xlu0 %v1030
        %v1032 = vpop.xlane.xlu0 %1031
        %v1033 = vsel %vm969, %v859, 0.0
        %1034 = vadd.xlane.f32.xlu0 %v1033
        %v1035 = vpop.xlane.xlu0 %1034
        %v1036 = vsel %vm969, %v860, 0.0
        %1037 = vadd.xlane.f32.xlu0 %v1036
        %v1038 = vpop.xlane.xlu0 %1037
        %v1039 = vsel %vm969, %v861, 0.0
        %1040 = vadd.xlane.f32.xlu0 %v1039
        %v1041 = vpop.xlane.xlu0 %1040
        %v1042 = vsel %vm969, %v862, 0.0
        %1043 = vadd.xlane.f32.xlu0 %v1042
        %v1044 = vpop.xlane.xlu0 %1043
        %v1045 = vsel %vm969, %v863, 0.0
        %1046 = vadd.xlane.f32.xlu0 %v1045
        %v1047 = vpop.xlane.xlu0 %1046
        %v1048 = vsel %vm969, %v864, 0.0
        %1049 = vadd.xlane.f32.xlu0 %v1048
        %v1050 = vpop.xlane.xlu0 %1049
        %v1051 = vsel %vm969, %v865, 0.0
        %1052 = vadd.xlane.f32.xlu0 %v1051
        %v1053 = vpop.xlane.xlu0 %1052
        %v1054 = vsel %vm969, %v866, 0.0
        %1055 = vadd.xlane.f32.xlu0 %v1054
        %v1056 = vpop.xlane.xlu0 %1055
        %v1057 = vsel %vm969, %v867, 0.0
        %1058 = vadd.xlane.f32.xlu0 %v1057
        %v1059 = vpop.xlane.xlu0 %1058
        %v1060 = vsel %vm969, %v868, 0.0
        %1061 = vadd.xlane.f32.xlu0 %v1060
        %v1062 = vpop.xlane.xlu0 %1061
        %v1063 = vsel %vm969, %v869, 0.0
        %1064 = vadd.xlane.f32.xlu0 %v1063
        %v1065 = vpop.xlane.xlu0 %1064
        %v1066 = vsel %vm969, %v870, 0.0
        %1067 = vadd.xlane.f32.xlu0 %v1066
        %v1068 = vpop.xlane.xlu0 %1067
        %v1069 = vsel %vm969, %v871, 0.0
        %1070 = vadd.xlane.f32.xlu0 %v1069
        %v1071 = vpop.xlane.xlu0 %1070
        %v1072 = vsel %vm969, %v872, 0.0
        %1073 = vadd.xlane.f32.xlu0 %v1072
        %v1074 = vpop.xlane.xlu0 %1073
        %v1075 = vsel %vm969, %v873, 0.0
        %1076 = vadd.xlane.f32.xlu0 %v1075
        %v1077 = vpop.xlane.xlu0 %1076
        %v1078 = vsel %vm969, %v874, 0.0
        %1079 = vadd.xlane.f32.xlu0 %v1078
        %v1080 = vpop.xlane.xlu0 %1079
        %v1081 = vsel %vm969, %v875, 0.0
        %1082 = vadd.xlane.f32.xlu0 %v1081
        %v1083 = vpop.xlane.xlu0 %1082
        %v1084 = vsel %vm969, %v876, 0.0
        %1085 = vadd.xlane.f32.xlu0 %v1084
        %v1086 = vpop.xlane.xlu0 %1085
        %v1087 = vsel %vm969, %v877, 0.0
        %1088 = vadd.xlane.f32.xlu0 %v1087
        %v1089 = vpop.xlane.xlu0 %1088
        %v1090 = vsel %vm969, %v878, 0.0
        %1091 = vadd.xlane.f32.xlu0 %v1090
        %v1092 = vpop.xlane.xlu0 %1091
        %v1093 = vsel %vm969, %v879, 0.0
        %1094 = vadd.xlane.f32.xlu0 %v1093
        %v1095 = vpop.xlane.xlu0 %1094
        %v1096 = vsel %vm969, %v880, 0.0
        %1097 = vadd.xlane.f32.xlu0 %v1096
        %v1098 = vpop.xlane.xlu0 %1097
        %v1099 = vsel %vm969, %v881, 0.0
        %1100 = vadd.xlane.f32.xlu0 %v1099
        %v1101 = vpop.xlane.xlu0 %1100
        %v1102 = vsel %vm969, %v882, 0.0
        %1103 = vadd.xlane.f32.xlu0 %v1102
        %v1104 = vpop.xlane.xlu0 %1103
        %v1105 = vsel %vm969, %v883, 0.0
        %1106 = vadd.xlane.f32.xlu0 %v1105
        %v1107 = vpop.xlane.xlu0 %1106
        %v1108 = vsel %vm969, %v884, 0.0
        %1109 = vadd.xlane.f32.xlu0 %v1108
        %v1110 = vpop.xlane.xlu0 %1109
        %v1111 = vsel %vm969, %v885, 0.0
        %1112 = vadd.xlane.f32.xlu0 %v1111
        %v1113 = vpop.xlane.xlu0 %1112
        %v1114 = vsel %vm969, %v886, 0.0
        %1115 = vadd.xlane.f32.xlu0 %v1114
        %v1116 = vpop.xlane.xlu0 %1115
        %v1117 = vsel %vm969, %v887, 0.0
        %1118 = vadd.xlane.f32.xlu0 %v1117
        %v1119 = vpop.xlane.xlu0 %1118
        %v1120 = vsel %vm969, %v888, 0.0
        %1121 = vadd.xlane.f32.xlu0 %v1120
        %v1122 = vpop.xlane.xlu0 %1121
        %v1123 = vsel %vm969, %v889, 0.0
        %1124 = vadd.xlane.f32.xlu0 %v1123
        %v1125 = vpop.xlane.xlu0 %1124
        %v1126 = vsel %vm969, %v890, 0.0
        %1127 = vadd.xlane.f32.xlu0 %v1126
        %v1128 = vpop.xlane.xlu0 %1127
        %v1129 = vsel %vm969, %v891, 0.0
        %1130 = vadd.xlane.f32.xlu0 %v1129
        %v1131 = vpop.xlane.xlu0 %1130
        %v1132 = vsel %vm969, %v892, 0.0
        %1133 = vadd.xlane.f32.xlu0 %v1132
        %v1134 = vpop.xlane.xlu0 %1133
        %v1135 = vsel %vm969, %v893, 0.0
        %1136 = vadd.xlane.f32.xlu0 %v1135
        %v1137 = vpop.xlane.xlu0 %1136
        %v1138 = vsel %vm969, %v894, 0.0
        %1139 = vadd.xlane.f32.xlu0 %v1138
        %v1140 = vpop.xlane.xlu0 %1139
        %v1141 = vsel %vm969, %v895, 0.0
        %1142 = vadd.xlane.f32.xlu0 %v1141
        %v1143 = vpop.xlane.xlu0 %1142
        %v1144 = vsel %vm969, %v896, 0.0
        %1145 = vadd.xlane.f32.xlu0 %v1144
        %v1146 = vpop.xlane.xlu0 %1145
        %v1147 = vsel %vm969, %v897, 0.0
        %1148 = vadd.xlane.f32.xlu0 %v1147
        %v1149 = vpop.xlane.xlu0 %1148
        %v1150 = vsel %vm969, %v898, 0.0
        %1151 = vadd.xlane.f32.xlu0 %v1150
        %v1152 = vpop.xlane.xlu0 %1151
        %v1153 = vsel %vm969, %v899, 0.0
        %1154 = vadd.xlane.f32.xlu0 %v1153
        %v1155 = vpop.xlane.xlu0 %1154
        %v1156 = vsel %vm969, %v900, 0.0
        %1157 = vadd.xlane.f32.xlu0 %v1156
        %v1158 = vpop.xlane.xlu0 %1157
        %v1159 = vsel %vm969, %v901, 0.0
        %1160 = vadd.xlane.f32.xlu0 %v1159
        %v1161 = vpop.xlane.xlu0 %1160
        %v1162 = vsel %vm969, %v902, 0.0
        %1163 = vadd.xlane.f32.xlu0 %v1162
        %v1164 = vpop.xlane.xlu0 %1163
        %v1165 = vsel %vm969, %v903, 0.0
        %1166 = vadd.xlane.f32.xlu0 %v1165
        %v1167 = vpop.xlane.xlu0 %1166
        %v1168 = vsel %vm969, %v904, 0.0
        %1169 = vadd.xlane.f32.xlu0 %v1168
        %v1170 = vpop.xlane.xlu0 %1169
        %v1171 = vsel %vm969, %v905, 0.0
        %1172 = vadd.xlane.f32.xlu0 %v1171
        %v1173 = vpop.xlane.xlu0 %1172
        %v1174 = vsel %vm969, %v906, 0.0
        %1175 = vadd.xlane.f32.xlu0 %v1174
        %v1176 = vpop.xlane.xlu0 %1175
        %v1177 = vsel %vm969, %v907, 0.0
        %1178 = vadd.xlane.f32.xlu0 %v1177
        %v1179 = vpop.xlane.xlu0 %1178
        %v1180 = vsel %vm969, %v908, 0.0
        %1181 = vadd.xlane.f32.xlu0 %v1180
        %v1182 = vpop.xlane.xlu0 %1181
        %v1183 = vsel %vm969, %v909, 0.0
        %1184 = vadd.xlane.f32.xlu0 %v1183
        %v1185 = vpop.xlane.xlu0 %1184
        %v1186 = vsel %vm969, %v910, 0.0
        %1187 = vadd.xlane.f32.xlu0 %v1186
        %v1188 = vpop.xlane.xlu0 %1187
        %v1189 = vsel %vm969, %v911, 0.0
        %1190 = vadd.xlane.f32.xlu0 %v1189
        %v1191 = vpop.xlane.xlu0 %1190
        %v1192 = vsel %vm969, %v912, 0.0
        %1193 = vadd.xlane.f32.xlu0 %v1192
        %v1194 = vpop.xlane.xlu0 %1193
        %v1195 = vsel %vm969, %v913, 0.0
        %1196 = vadd.xlane.f32.xlu0 %v1195
        %v1197 = vpop.xlane.xlu0 %1196
        %v1198 = vsel %vm969, %v914, 0.0
        %1199 = vadd.xlane.f32.xlu0 %v1198
        %v1200 = vpop.xlane.xlu0 %1199
        %v1201 = vsel %vm969, %v915, 0.0
        %1202 = vadd.xlane.f32.xlu0 %v1201
        %v1203 = vpop.xlane.xlu0 %1202
        %v1204 = vsel %vm969, %v916, 0.0
        %1205 = vadd.xlane.f32.xlu0 %v1204
        %v1206 = vpop.xlane.xlu0 %1205
        %v1207 = vsel %vm969, %v917, 0.0
        %1208 = vadd.xlane.f32.xlu0 %v1207
        %v1209 = vpop.xlane.xlu0 %1208
        %v1210 = vsel %vm969, %v918, 0.0
        %1211 = vadd.xlane.f32.xlu0 %v1210
        %v1212 = vpop.xlane.xlu0 %1211
        %v1213 = vsel %vm969, %v919, 0.0
        %1214 = vadd.xlane.f32.xlu0 %v1213
        %v1215 = vpop.xlane.xlu0 %1214
        %v1216 = vsel %vm969, %v920, 0.0
        %1217 = vadd.xlane.f32.xlu0 %v1216
        %v1218 = vpop.xlane.xlu0 %1217
        %v1219 = vsel %vm969, %v921, 0.0
        %1220 = vadd.xlane.f32.xlu0 %v1219
        %v1221 = vpop.xlane.xlu0 %1220
        %v1222 = vsel %vm969, %v922, 0.0
        %1223 = vadd.xlane.f32.xlu0 %v1222
        %v1224 = vpop.xlane.xlu0 %1223
        %v1225 = vsel %vm969, %v923, 0.0
        %1226 = vadd.xlane.f32.xlu0 %v1225
        %v1227 = vpop.xlane.xlu0 %1226
        %v1228 = vsel %vm969, %v924, 0.0
        %1229 = vadd.xlane.f32.xlu0 %v1228
        %v1230 = vpop.xlane.xlu0 %1229
        %v1231 = vsel %vm969, %v925, 0.0
        %1232 = vadd.xlane.f32.xlu0 %v1231
        %v1233 = vpop.xlane.xlu0 %1232
        %v1234 = vsel %vm969, %v926, 0.0
        %1235 = vadd.xlane.f32.xlu0 %v1234
        %v1236 = vpop.xlane.xlu0 %1235
        %v1237 = vsel %vm969, %v927, 0.0
        %1238 = vadd.xlane.f32.xlu0 %v1237
        %v1239 = vpop.xlane.xlu0 %1238
        %v1240 = vsel %vm969, %v928, 0.0
        %1241 = vadd.xlane.f32.xlu0 %v1240
        %v1242 = vpop.xlane.xlu0 %1241
        %v1243 = vsel %vm969, %v929, 0.0
        %1244 = vadd.xlane.f32.xlu0 %v1243
        %v1245 = vpop.xlane.xlu0 %1244
        %v1246 = vsel %vm969, %v930, 0.0
        %1247 = vadd.xlane.f32.xlu0 %v1246
        %v1248 = vpop.xlane.xlu0 %1247
        %v1249 = vsel %vm969, %v931, 0.0
        %1250 = vadd.xlane.f32.xlu0 %v1249
        %v1251 = vpop.xlane.xlu0 %1250
        %v1252 = vsel %vm969, %v932, 0.0
        %1253 = vadd.xlane.f32.xlu0 %v1252
        %v1254 = vpop.xlane.xlu0 %1253
        %v1255 = vsel %vm969, %v933, 0.0
        %1256 = vadd.xlane.f32.xlu0 %v1255
        %v1257 = vpop.xlane.xlu0 %1256
        %v1258 = vsel %vm969, %v934, 0.0
        %1259 = vadd.xlane.f32.xlu0 %v1258
        %v1260 = vpop.xlane.xlu0 %1259
        %v1261 = vsel %vm969, %v935, 0.0
        %1262 = vadd.xlane.f32.xlu0 %v1261
        %v1263 = vpop.xlane.xlu0 %1262
        %v1264 = vsel %vm969, %v936, 0.0
        %1265 = vadd.xlane.f32.xlu0 %v1264
        %v1266 = vpop.xlane.xlu0 %1265
        %v1267 = vsel %vm969, %v937, 0.0
        %1268 = vadd.xlane.f32.xlu0 %v1267
        %v1269 = vpop.xlane.xlu0 %1268
        %v1270 = vsel %vm969, %v938, 0.0
        %1271 = vadd.xlane.f32.xlu0 %v1270
        %v1272 = vpop.xlane.xlu0 %1271
        %v1273 = vsel %vm969, %v939, 0.0
        %1274 = vadd.xlane.f32.xlu0 %v1273
        %v1275 = vpop.xlane.xlu0 %1274
        %v1276 = vsel %vm969, %v940, 0.0
        %1277 = vadd.xlane.f32.xlu0 %v1276
        %v1278 = vpop.xlane.xlu0 %1277
        %v1279 = vsel %vm969, %v941, 0.0
        %1280 = vadd.xlane.f32.xlu0 %v1279
        %v1281 = vpop.xlane.xlu0 %1280
        %v1282 = vsel %vm969, %v942, 0.0
        %1283 = vadd.xlane.f32.xlu0 %v1282
        %v1284 = vpop.xlane.xlu0 %1283
        %v1285 = vsel %vm969, %v943, 0.0
        %1286 = vadd.xlane.f32.xlu0 %v1285
        %v1287 = vpop.xlane.xlu0 %1286
        %v1288 = vsel %vm969, %v944, 0.0
        %1289 = vadd.xlane.f32.xlu0 %v1288
        %v1290 = vpop.xlane.xlu0 %1289
        %v1291 = vsel %vm969, %v945, 0.0
        %1292 = vadd.xlane.f32.xlu0 %v1291
        %v1293 = vpop.xlane.xlu0 %1292
        %v1294 = vsel %vm969, %v946, 0.0
        %1295 = vadd.xlane.f32.xlu0 %v1294
        %v1296 = vpop.xlane.xlu0 %1295
        %v1297 = vsel %vm969, %v947, 0.0
        %1298 = vadd.xlane.f32.xlu0 %v1297
        %v1299 = vpop.xlane.xlu0 %1298
        %v1300 = vsel %vm969, %v948, 0.0
        %1301 = vadd.xlane.f32.xlu0 %v1300
        %v1302 = vpop.xlane.xlu0 %1301
        %v1303 = vsel %vm969, %v949, 0.0
        %1304 = vadd.xlane.f32.xlu0 %v1303
        %v1305 = vpop.xlane.xlu0 %1304
        %v1306 = vsel %vm969, %v950, 0.0
        %1307 = vadd.xlane.f32.xlu0 %v1306
        %v1308 = vpop.xlane.xlu0 %1307
        %v1309 = vsel %vm969, %v951, 0.0
        %1310 = vadd.xlane.f32.xlu0 %v1309
        %v1311 = vpop.xlane.xlu0 %1310
        %v1312 = vsel %vm969, %v952, 0.0
        %1313 = vadd.xlane.f32.xlu0 %v1312
        %v1314 = vpop.xlane.xlu0 %1313
        %v1315 = vsel %vm969, %v953, 0.0
        %1316 = vadd.xlane.f32.xlu0 %v1315
        %v1317 = vpop.xlane.xlu0 %1316
        %v1318 = vsel %vm969, %v954, 0.0
        %1319 = vadd.xlane.f32.xlu0 %v1318
        %v1320 = vpop.xlane.xlu0 %1319
        %v1321 = vsel %vm969, %v955, 0.0
        %1322 = vadd.xlane.f32.xlu0 %v1321
        %v1323 = vpop.xlane.xlu0 %1322
        %v1324 = vsel %vm969, %v956, 0.0
        %1325 = vadd.xlane.f32.xlu0 %v1324
        %v1326 = vpop.xlane.xlu0 %1325
        %v1327 = vsel %vm969, %v957, 0.0
        %1328 = vadd.xlane.f32.xlu0 %v1327
        %v1329 = vpop.xlane.xlu0 %1328
        %v1330 = vsel %vm969, %v958, 0.0
        %1331 = vadd.xlane.f32.xlu0 %v1330
        %v1332 = vpop.xlane.xlu0 %1331
        %v1333 = vsel %vm969, %v959, 0.0
        %1334 = vadd.xlane.f32.xlu0 %v1333
        %v1335 = vpop.xlane.xlu0 %1334
        %v1336 = vsel %vm969, %v960, 0.0
        %1337 = vadd.xlane.f32.xlu0 %v1336
        %v1338 = vpop.xlane.xlu0 %1337
        %v1339 = vsel %vm969, %v961, 0.0
        %1340 = vadd.xlane.f32.xlu0 %v1339
        %v1341 = vpop.xlane.xlu0 %1340
        %v1342 = vsel %vm969, %v962, 0.0
        %1343 = vadd.xlane.f32.xlu0 %v1342
        %v1344 = vpop.xlane.xlu0 %1343
        %v1345 = vsel %vm969, %v963, 0.0
        %1346 = vadd.xlane.f32.xlu0 %v1345
        %v1347 = vpop.xlane.xlu0 %1346
        %v1348 = vsel %vm969, %v964, 0.0
        %1349 = vadd.xlane.f32.xlu0 %v1348
        %v1350 = vpop.xlane.xlu0 %1349
        %v1351 = vsel %vm969, %v965, 0.0
        %1352 = vadd.xlane.f32.xlu0 %v1351
        %v1353 = vpop.xlane.xlu0 %1352
        %v1354 = vrcp.pop 32.0
        %v1355 = vmul.f32 32.0, %v1354
        %v1356 = vsub.f32 1.0, %v1355
        %v1357 = vmul.f32 %v1354, %v1356
        %v1358 = vadd.f32 %v1354, %v1357
        %vm1359 = vweird.f32 %v1354
        %v1360 = vsel %vm1359, %v1354, %v1358
        %v1361 = vmul.f32 %v972, %v1360
        %v1362 = vmul.f32 %v975, %v1360
        %v1363 = vmul.f32 %v978, %v1360
        %v1364 = vmul.f32 %v981, %v1360
        %v1365 = vmul.f32 %v984, %v1360
        %v1366 = vmul.f32 %v987, %v1360
        %v1367 = vmul.f32 %v990, %v1360
        %v1368 = vmul.f32 %v993, %v1360
        %v1369 = vmul.f32 %v996, %v1360
        %v1370 = vmul.f32 %v999, %v1360
        %v1371 = vmul.f32 %v1002, %v1360
        %v1372 = vmul.f32 %v1005, %v1360
        %v1373 = vmul.f32 %v1008, %v1360
        %v1374 = vmul.f32 %v1011, %v1360
        %v1375 = vmul.f32 %v1014, %v1360
        %v1376 = vmul.f32 %v1017, %v1360
        %v1377 = vmul.f32 %v1020, %v1360
        %v1378 = vmul.f32 %v1023, %v1360
        %v1379 = vmul.f32 %v1026, %v1360
        %v1380 = vmul.f32 %v1029, %v1360
        %v1381 = vmul.f32 %v1032, %v1360
        %v1382 = vmul.f32 %v1035, %v1360
        %v1383 = vmul.f32 %v1038, %v1360
        %v1384 = vmul.f32 %v1041, %v1360
        %v1385 = vmul.f32 %v1044, %v1360
        %v1386 = vmul.f32 %v1047, %v1360
        %v1387 = vmul.f32 %v1050, %v1360
        %v1388 = vmul.f32 %v1053, %v1360
        %v1389 = vmul.f32 %v1056, %v1360
        %v1390 = vmul.f32 %v1059, %v1360
        %v1391 = vmul.f32 %v1062, %v1360
        %v1392 = vmul.f32 %v1065, %v1360
        %v1393 = vmul.f32 %v1068, %v1360
        %v1394 = vmul.f32 %v1071, %v1360
        %v1395 = vmul.f32 %v1074, %v1360
        %v1396 = vmul.f32 %v1077, %v1360
        %v1397 = vmul.f32 %v1080, %v1360
        %v1398 = vmul.f32 %v1083, %v1360
        %v1399 = vmul.f32 %v1086, %v1360
        %v1400 = vmul.f32 %v1089, %v1360
        %v1401 = vmul.f32 %v1092, %v1360
        %v1402 = vmul.f32 %v1095, %v1360
        %v1403 = vmul.f32 %v1098, %v1360
        %v1404 = vmul.f32 %v1101, %v1360
        %v1405 = vmul.f32 %v1104, %v1360
        %v1406 = vmul.f32 %v1107, %v1360
        %v1407 = vmul.f32 %v1110, %v1360
        %v1408 = vmul.f32 %v1113, %v1360
        %v1409 = vmul.f32 %v1116, %v1360
        %v1410 = vmul.f32 %v1119, %v1360
        %v1411 = vmul.f32 %v1122, %v1360
        %v1412 = vmul.f32 %v1125, %v1360
        %v1413 = vmul.f32 %v1128, %v1360
        %v1414 = vmul.f32 %v1131, %v1360
        %v1415 = vmul.f32 %v1134, %v1360
        %v1416 = vmul.f32 %v1137, %v1360
        %v1417 = vmul.f32 %v1140, %v1360
        %v1418 = vmul.f32 %v1143, %v1360
        %v1419 = vmul.f32 %v1146, %v1360
        %v1420 = vmul.f32 %v1149, %v1360
        %v1421 = vmul.f32 %v1152, %v1360
        %v1422 = vmul.f32 %v1155, %v1360
        %v1423 = vmul.f32 %v1158, %v1360
        %v1424 = vmul.f32 %v1161, %v1360
        %v1425 = vmul.f32 %v1164, %v1360
        %v1426 = vmul.f32 %v1167, %v1360
        %v1427 = vmul.f32 %v1170, %v1360
        %v1428 = vmul.f32 %v1173, %v1360
        %v1429 = vmul.f32 %v1176, %v1360
        %v1430 = vmul.f32 %v1179, %v1360
        %v1431 = vmul.f32 %v1182, %v1360
        %v1432 = vmul.f32 %v1185, %v1360
        %v1433 = vmul.f32 %v1188, %v1360
        %v1434 = vmul.f32 %v1191, %v1360
        %v1435 = vmul.f32 %v1194, %v1360
        %v1436 = vmul.f32 %v1197, %v1360
        %v1437 = vmul.f32 %v1200, %v1360
        %v1438 = vmul.f32 %v1203, %v1360
        %v1439 = vmul.f32 %v1206, %v1360
        %v1440 = vmul.f32 %v1209, %v1360
        %v1441 = vmul.f32 %v1212, %v1360
        %v1442 = vmul.f32 %v1215, %v1360
        %v1443 = vmul.f32 %v1218, %v1360
        %v1444 = vmul.f32 %v1221, %v1360
        %v1445 = vmul.f32 %v1224, %v1360
        %v1446 = vmul.f32 %v1227, %v1360
        %v1447 = vmul.f32 %v1230, %v1360
        %v1448 = vmul.f32 %v1233, %v1360
        %v1449 = vmul.f32 %v1236, %v1360
        %v1450 = vmul.f32 %v1239, %v1360
        %v1451 = vmul.f32 %v1242, %v1360
        %v1452 = vmul.f32 %v1245, %v1360
        %v1453 = vmul.f32 %v1248, %v1360
        %v1454 = vmul.f32 %v1251, %v1360
        %v1455 = vmul.f32 %v1254, %v1360
        %v1456 = vmul.f32 %v1257, %v1360
        %v1457 = vmul.f32 %v1260, %v1360
        %v1458 = vmul.f32 %v1263, %v1360
        %v1459 = vmul.f32 %v1266, %v1360
        %v1460 = vmul.f32 %v1269, %v1360
        %v1461 = vmul.f32 %v1272, %v1360
        %v1462 = vmul.f32 %v1275, %v1360
        %v1463 = vmul.f32 %v1278, %v1360
        %v1464 = vmul.f32 %v1281, %v1360
        %v1465 = vmul.f32 %v1284, %v1360
        %v1466 = vmul.f32 %v1287, %v1360
        %v1467 = vmul.f32 %v1290, %v1360
        %v1468 = vmul.f32 %v1293, %v1360
        %v1469 = vmul.f32 %v1296, %v1360
        %v1470 = vmul.f32 %v1299, %v1360
        %v1471 = vmul.f32 %v1302, %v1360
        %v1472 = vmul.f32 %v1305, %v1360
        %v1473 = vmul.f32 %v1308, %v1360
        %v1474 = vmul.f32 %v1311, %v1360
        %v1475 = vmul.f32 %v1314, %v1360
        %v1476 = vmul.f32 %v1317, %v1360
        %v1477 = vmul.f32 %v1320, %v1360
        %v1478 = vmul.f32 %v1323, %v1360
        %v1479 = vmul.f32 %v1326, %v1360
        %v1480 = vmul.f32 %v1329, %v1360
        %v1481 = vmul.f32 %v1332, %v1360
        %v1482 = vmul.f32 %v1335, %v1360
        %v1483 = vmul.f32 %v1338, %v1360
        %v1484 = vmul.f32 %v1341, %v1360
        %v1485 = vmul.f32 %v1344, %v1360
        %v1486 = vmul.f32 %v1347, %v1360
        %v1487 = vmul.f32 %v1350, %v1360
        %v1488 = vmul.f32 %v1353, %v1360
        %v1489 = vsub.f32 %v838, %v1361
        %v1490 = vsub.f32 %v839, %v1362
        %v1491 = vsub.f32 %v840, %v1363
        %v1492 = vsub.f32 %v841, %v1364
        %v1493 = vsub.f32 %v842, %v1365
        %v1494 = vsub.f32 %v843, %v1366
        %v1495 = vsub.f32 %v844, %v1367
        %v1496 = vsub.f32 %v845, %v1368
        %v1497 = vsub.f32 %v846, %v1369
        %v1498 = vsub.f32 %v847, %v1370
        %v1499 = vsub.f32 %v848, %v1371
        %v1500 = vsub.f32 %v849, %v1372
        %v1501 = vsub.f32 %v850, %v1373
        %v1502 = vsub.f32 %v851, %v1374
        %v1503 = vsub.f32 %v852, %v1375
        %v1504 = vsub.f32 %v853, %v1376
        %v1505 = vsub.f32 %v854, %v1377
        %v1506 = vsub.f32 %v855, %v1378
        %v1507 = vsub.f32 %v856, %v1379
        %v1508 = vsub.f32 %v857, %v1380
        %v1509 = vsub.f32 %v858, %v1381
        %v1510 = vsub.f32 %v859, %v1382
        %v1511 = vsub.f32 %v860, %v1383
        %v1512 = vsub.f32 %v861, %v1384
        %v1513 = vsub.f32 %v862, %v1385
        %v1514 = vsub.f32 %v863, %v1386
        %v1515 = vsub.f32 %v864, %v1387
        %v1516 = vsub.f32 %v865, %v1388
        %v1517 = vsub.f32 %v866, %v1389
        %v1518 = vsub.f32 %v867, %v1390
        %v1519 = vsub.f32 %v868, %v1391
        %v1520 = vsub.f32 %v869, %v1392
        %v1521 = vsub.f32 %v870, %v1393
        %v1522 = vsub.f32 %v871, %v1394
        %v1523 = vsub.f32 %v872, %v1395
        %v1524 = vsub.f32 %v873, %v1396
        %v1525 = vsub.f32 %v874, %v1397
        %v1526 = vsub.f32 %v875, %v1398
        %v1527 = vsub.f32 %v876, %v1399
        %v1528 = vsub.f32 %v877, %v1400
        %v1529 = vsub.f32 %v878, %v1401
        %v1530 = vsub.f32 %v879, %v1402
        %v1531 = vsub.f32 %v880, %v1403
        %v1532 = vsub.f32 %v881, %v1404
        %v1533 = vsub.f32 %v882, %v1405
        %v1534 = vsub.f32 %v883, %v1406
        %v1535 = vsub.f32 %v884, %v1407
        %v1536 = vsub.f32 %v885, %v1408
        %v1537 = vsub.f32 %v886, %v1409
        %v1538 = vsub.f32 %v887, %v1410
        %v1539 = vsub.f32 %v888, %v1411
        %v1540 = vsub.f32 %v889, %v1412
        %v1541 = vsub.f32 %v890, %v1413
        %v1542 = vsub.f32 %v891, %v1414
        %v1543 = vsub.f32 %v892, %v1415
        %v1544 = vsub.f32 %v893, %v1416
        %v1545 = vsub.f32 %v894, %v1417
        %v1546 = vsub.f32 %v895, %v1418
        %v1547 = vsub.f32 %v896, %v1419
        %v1548 = vsub.f32 %v897, %v1420
        %v1549 = vsub.f32 %v898, %v1421
        %v1550 = vsub.f32 %v899, %v1422
        %v1551 = vsub.f32 %v900, %v1423
        %v1552 = vsub.f32 %v901, %v1424
        %v1553 = vsub.f32 %v902, %v1425
        %v1554 = vsub.f32 %v903, %v1426
        %v1555 = vsub.f32 %v904, %v1427
        %v1556 = vsub.f32 %v905, %v1428
        %v1557 = vsub.f32 %v906, %v1429
        %v1558 = vsub.f32 %v907, %v1430
        %v1559 = vsub.f32 %v908, %v1431
        %v1560 = vsub.f32 %v909, %v1432
        %v1561 = vsub.f32 %v910, %v1433
        %v1562 = vsub.f32 %v911, %v1434
        %v1563 = vsub.f32 %v912, %v1435
        %v1564 = vsub.f32 %v913, %v1436
        %v1565 = vsub.f32 %v914, %v1437
        %v1566 = vsub.f32 %v915, %v1438
        %v1567 = vsub.f32 %v916, %v1439
        %v1568 = vsub.f32 %v917, %v1440
        %v1569 = vsub.f32 %v918, %v1441
        %v1570 = vsub.f32 %v919, %v1442
        %v1571 = vsub.f32 %v920, %v1443
        %v1572 = vsub.f32 %v921, %v1444
        %v1573 = vsub.f32 %v922, %v1445
        %v1574 = vsub.f32 %v923, %v1446
        %v1575 = vsub.f32 %v924, %v1447
        %v1576 = vsub.f32 %v925, %v1448
        %v1577 = vsub.f32 %v926, %v1449
        %v1578 = vsub.f32 %v927, %v1450
        %v1579 = vsub.f32 %v928, %v1451
        %v1580 = vsub.f32 %v929, %v1452
        %v1581 = vsub.f32 %v930, %v1453
        %v1582 = vsub.f32 %v931, %v1454
        %v1583 = vsub.f32 %v932, %v1455
        %v1584 = vsub.f32 %v933, %v1456
        %v1585 = vsub.f32 %v934, %v1457
        %v1586 = vsub.f32 %v935, %v1458
        %v1587 = vsub.f32 %v936, %v1459
        %v1588 = vsub.f32 %v937, %v1460
        %v1589 = vsub.f32 %v938, %v1461
        %v1590 = vsub.f32 %v939, %v1462
        %v1591 = vsub.f32 %v940, %v1463
        %v1592 = vsub.f32 %v941, %v1464
        %v1593 = vsub.f32 %v942, %v1465
        %v1594 = vsub.f32 %v943, %v1466
        %v1595 = vsub.f32 %v944, %v1467
        %v1596 = vsub.f32 %v945, %v1468
        %v1597 = vsub.f32 %v946, %v1469
        %v1598 = vsub.f32 %v947, %v1470
        %v1599 = vsub.f32 %v948, %v1471
        %v1600 = vsub.f32 %v949, %v1472
        %v1601 = vsub.f32 %v950, %v1473
        %v1602 = vsub.f32 %v951, %v1474
        %v1603 = vsub.f32 %v952, %v1475
        %v1604 = vsub.f32 %v953, %v1476
        %v1605 = vsub.f32 %v954, %v1477
        %v1606 = vsub.f32 %v955, %v1478
        %v1607 = vsub.f32 %v956, %v1479
        %v1608 = vsub.f32 %v957, %v1480
        %v1609 = vsub.f32 %v958, %v1481
        %v1610 = vsub.f32 %v959, %v1482
        %v1611 = vsub.f32 %v960, %v1483
        %v1612 = vsub.f32 %v961, %v1484
        %v1613 = vsub.f32 %v962, %v1485
        %v1614 = vsub.f32 %v963, %v1486
        %v1615 = vsub.f32 %v964, %v1487
        %v1616 = vsub.f32 %v965, %v1488
        %v1617 = vmul.f32 %v1489, %v1489
        %v1618 = vmul.f32 %v1490, %v1490
        %v1619 = vmul.f32 %v1491, %v1491
        %v1620 = vmul.f32 %v1492, %v1492
        %v1621 = vmul.f32 %v1493, %v1493
        %v1622 = vmul.f32 %v1494, %v1494
        %v1623 = vmul.f32 %v1495, %v1495
        %v1624 = vmul.f32 %v1496, %v1496
        %v1625 = vmul.f32 %v1497, %v1497
        %v1626 = vmul.f32 %v1498, %v1498
        %v1627 = vmul.f32 %v1499, %v1499
        %v1628 = vmul.f32 %v1500, %v1500
        %v1629 = vmul.f32 %v1501, %v1501
        %v1630 = vmul.f32 %v1502, %v1502
        %v1631 = vmul.f32 %v1503, %v1503
        %v1632 = vmul.f32 %v1504, %v1504
        %v1633 = vmul.f32 %v1505, %v1505
        %v1634 = vmul.f32 %v1506, %v1506
        %v1635 = vmul.f32 %v1507, %v1507
        %v1636 = vmul.f32 %v1508, %v1508
        %v1637 = vmul.f32 %v1509, %v1509
        %v1638 = vmul.f32 %v1510, %v1510
        %v1639 = vmul.f32 %v1511, %v1511
        %v1640 = vmul.f32 %v1512, %v1512
        %v1641 = vmul.f32 %v1513, %v1513
        %v1642 = vmul.f32 %v1514, %v1514
        %v1643 = vmul.f32 %v1515, %v1515
        %v1644 = vmul.f32 %v1516, %v1516
        %v1645 = vmul.f32 %v1517, %v1517
        %v1646 = vmul.f32 %v1518, %v1518
        %v1647 = vmul.f32 %v1519, %v1519
        %v1648 = vmul.f32 %v1520, %v1520
        %v1649 = vmul.f32 %v1521, %v1521
        %v1650 = vmul.f32 %v1522, %v1522
        %v1651 = vmul.f32 %v1523, %v1523
        %v1652 = vmul.f32 %v1524, %v1524
        %v1653 = vmul.f32 %v1525, %v1525
        %v1654 = vmul.f32 %v1526, %v1526
        %v1655 = vmul.f32 %v1527, %v1527
        %v1656 = vmul.f32 %v1528, %v1528
        %v1657 = vmul.f32 %v1529, %v1529
        %v1658 = vmul.f32 %v1530, %v1530
        %v1659 = vmul.f32 %v1531, %v1531
        %v1660 = vmul.f32 %v1532, %v1532
        %v1661 = vmul.f32 %v1533, %v1533
        %v1662 = vmul.f32 %v1534, %v1534
        %v1663 = vmul.f32 %v1535, %v1535
        %v1664 = vmul.f32 %v1536, %v1536
        %v1665 = vmul.f32 %v1537, %v1537
        %v1666 = vmul.f32 %v1538, %v1538
        %v1667 = vmul.f32 %v1539, %v1539
        %v1668 = vmul.f32 %v1540, %v1540
        %v1669 = vmul.f32 %v1541, %v1541
        %v1670 = vmul.f32 %v1542, %v1542
        %v1671 = vmul.f32 %v1543, %v1543
        %v1672 = vmul.f32 %v1544, %v1544
        %v1673 = vmul.f32 %v1545, %v1545
        %v1674 = vmul.f32 %v1546, %v1546
        %v1675 = vmul.f32 %v1547, %v1547
        %v1676 = vmul.f32 %v1548, %v1548
        %v1677 = vmul.f32 %v1549, %v1549
        %v1678 = vmul.f32 %v1550, %v1550
        %v1679 = vmul.f32 %v1551, %v1551
        %v1680 = vmul.f32 %v1552, %v1552
        %v1681 = vmul.f32 %v1553, %v1553
        %v1682 = vmul.f32 %v1554, %v1554
        %v1683 = vmul.f32 %v1555, %v1555
        %v1684 = vmul.f32 %v1556, %v1556
        %v1685 = vmul.f32 %v1557, %v1557
        %v1686 = vmul.f32 %v1558, %v1558
        %v1687 = vmul.f32 %v1559, %v1559
        %v1688 = vmul.f32 %v1560, %v1560
        %v1689 = vmul.f32 %v1561, %v1561
        %v1690 = vmul.f32 %v1562, %v1562
        %v1691 = vmul.f32 %v1563, %v1563
        %v1692 = vmul.f32 %v1564, %v1564
        %v1693 = vmul.f32 %v1565, %v1565
        %v1694 = vmul.f32 %v1566, %v1566
        %v1695 = vmul.f32 %v1567, %v1567
        %v1696 = vmul.f32 %v1568, %v1568
        %v1697 = vmul.f32 %v1569, %v1569
        %v1698 = vmul.f32 %v1570, %v1570
        %v1699 = vmul.f32 %v1571, %v1571
        %v1700 = vmul.f32 %v1572, %v1572
        %v1701 = vmul.f32 %v1573, %v1573
        %v1702 = vmul.f32 %v1574, %v1574
        %v1703 = vmul.f32 %v1575, %v1575
        %v1704 = vmul.f32 %v1576, %v1576
        %v1705 = vmul.f32 %v1577, %v1577
        %v1706 = vmul.f32 %v1578, %v1578
        %v1707 = vmul.f32 %v1579, %v1579
        %v1708 = vmul.f32 %v1580, %v1580
        %v1709 = vmul.f32 %v1581, %v1581
        %v1710 = vmul.f32 %v1582, %v1582
        %v1711 = vmul.f32 %v1583, %v1583
        %v1712 = vmul.f32 %v1584, %v1584
        %v1713 = vmul.f32 %v1585, %v1585
        %v1714 = vmul.f32 %v1586, %v1586
        %v1715 = vmul.f32 %v1587, %v1587
        %v1716 = vmul.f32 %v1588, %v1588
        %v1717 = vmul.f32 %v1589, %v1589
        %v1718 = vmul.f32 %v1590, %v1590
        %v1719 = vmul.f32 %v1591, %v1591
        %v1720 = vmul.f32 %v1592, %v1592
        %v1721 = vmul.f32 %v1593, %v1593
        %v1722 = vmul.f32 %v1594, %v1594
        %v1723 = vmul.f32 %v1595, %v1595
        %v1724 = vmul.f32 %v1596, %v1596
        %v1725 = vmul.f32 %v1597, %v1597
        %v1726 = vmul.f32 %v1598, %v1598
        %v1727 = vmul.f32 %v1599, %v1599
        %v1728 = vmul.f32 %v1600, %v1600
        %v1729 = vmul.f32 %v1601, %v1601
        %v1730 = vmul.f32 %v1602, %v1602
        %v1731 = vmul.f32 %v1603, %v1603
        %v1732 = vmul.f32 %v1604, %v1604
        %v1733 = vmul.f32 %v1605, %v1605
        %v1734 = vmul.f32 %v1606, %v1606
        %v1735 = vmul.f32 %v1607, %v1607
        %v1736 = vmul.f32 %v1608, %v1608
        %v1737 = vmul.f32 %v1609, %v1609
        %v1738 = vmul.f32 %v1610, %v1610
        %v1739 = vmul.f32 %v1611, %v1611
        %v1740 = vmul.f32 %v1612, %v1612
        %v1741 = vmul.f32 %v1613, %v1613
        %v1742 = vmul.f32 %v1614, %v1614
        %v1743 = vmul.f32 %v1615, %v1615
        %v1744 = vmul.f32 %v1616, %v1616
        %v1745 = vsel %vm969, %v1617, 0.0
        %1746 = vadd.xlane.f32.xlu0 %v1745
        %v1747 = vpop.xlane.xlu0 %1746
        %v1748 = vsel %vm969, %v1618, 0.0
        %1749 = vadd.xlane.f32.xlu0 %v1748
        %v1750 = vpop.xlane.xlu0 %1749
        %v1751 = vsel %vm969, %v1619, 0.0
        %1752 = vadd.xlane.f32.xlu0 %v1751
        %v1753 = vpop.xlane.xlu0 %1752
        %v1754 = vsel %vm969, %v1620, 0.0
        %1755 = vadd.xlane.f32.xlu0 %v1754
        %v1756 = vpop.xlane.xlu0 %1755
        %v1757 = vsel %vm969, %v1621, 0.0
        %1758 = vadd.xlane.f32.xlu0 %v1757
        %v1759 = vpop.xlane.xlu0 %1758
        %v1760 = vsel %vm969, %v1622, 0.0
        %1761 = vadd.xlane.f32.xlu0 %v1760
        %v1762 = vpop.xlane.xlu0 %1761
        %v1763 = vsel %vm969, %v1623, 0.0
        %1764 = vadd.xlane.f32.xlu0 %v1763
        %v1765 = vpop.xlane.xlu0 %1764
        %v1766 = vsel %vm969, %v1624, 0.0
        %1767 = vadd.xlane.f32.xlu0 %v1766
        %v1768 = vpop.xlane.xlu0 %1767
        %v1769 = vsel %vm969, %v1625, 0.0
        %1770 = vadd.xlane.f32.xlu0 %v1769
        %v1771 = vpop.xlane.xlu0 %1770
        %v1772 = vsel %vm969, %v1626, 0.0
        %1773 = vadd.xlane.f32.xlu0 %v1772
        %v1774 = vpop.xlane.xlu0 %1773
        %v1775 = vsel %vm969, %v1627, 0.0
        %1776 = vadd.xlane.f32.xlu0 %v1775
        %v1777 = vpop.xlane.xlu0 %1776
        %v1778 = vsel %vm969, %v1628, 0.0
        %1779 = vadd.xlane.f32.xlu0 %v1778
        %v1780 = vpop.xlane.xlu0 %1779
        %v1781 = vsel %vm969, %v1629, 0.0
        %1782 = vadd.xlane.f32.xlu0 %v1781
        %v1783 = vpop.xlane.xlu0 %1782
        %v1784 = vsel %vm969, %v1630, 0.0
        %1785 = vadd.xlane.f32.xlu0 %v1784
        %v1786 = vpop.xlane.xlu0 %1785
        %v1787 = vsel %vm969, %v1631, 0.0
        %1788 = vadd.xlane.f32.xlu0 %v1787
        %v1789 = vpop.xlane.xlu0 %1788
        %v1790 = vsel %vm969, %v1632, 0.0
        %1791 = vadd.xlane.f32.xlu0 %v1790
        %v1792 = vpop.xlane.xlu0 %1791
        %v1793 = vsel %vm969, %v1633, 0.0
        %1794 = vadd.xlane.f32.xlu0 %v1793
        %v1795 = vpop.xlane.xlu0 %1794
        %v1796 = vsel %vm969, %v1634, 0.0
        %1797 = vadd.xlane.f32.xlu0 %v1796
        %v1798 = vpop.xlane.xlu0 %1797
        %v1799 = vsel %vm969, %v1635, 0.0
        %1800 = vadd.xlane.f32.xlu0 %v1799
        %v1801 = vpop.xlane.xlu0 %1800
        %v1802 = vsel %vm969, %v1636, 0.0
        %1803 = vadd.xlane.f32.xlu0 %v1802
        %v1804 = vpop.xlane.xlu0 %1803
        %v1805 = vsel %vm969, %v1637, 0.0
        %1806 = vadd.xlane.f32.xlu0 %v1805
        %v1807 = vpop.xlane.xlu0 %1806
        %v1808 = vsel %vm969, %v1638, 0.0
        %1809 = vadd.xlane.f32.xlu0 %v1808
        %v1810 = vpop.xlane.xlu0 %1809
        %v1811 = vsel %vm969, %v1639, 0.0
        %1812 = vadd.xlane.f32.xlu0 %v1811
        %v1813 = vpop.xlane.xlu0 %1812
        %v1814 = vsel %vm969, %v1640, 0.0
        %1815 = vadd.xlane.f32.xlu0 %v1814
        %v1816 = vpop.xlane.xlu0 %1815
        %v1817 = vsel %vm969, %v1641, 0.0
        %1818 = vadd.xlane.f32.xlu0 %v1817
        %v1819 = vpop.xlane.xlu0 %1818
        %v1820 = vsel %vm969, %v1642, 0.0
        %1821 = vadd.xlane.f32.xlu0 %v1820
        %v1822 = vpop.xlane.xlu0 %1821
        %v1823 = vsel %vm969, %v1643, 0.0
        %1824 = vadd.xlane.f32.xlu0 %v1823
        %v1825 = vpop.xlane.xlu0 %1824
        %v1826 = vsel %vm969, %v1644, 0.0
        %1827 = vadd.xlane.f32.xlu0 %v1826
        %v1828 = vpop.xlane.xlu0 %1827
        %v1829 = vsel %vm969, %v1645, 0.0
        %1830 = vadd.xlane.f32.xlu0 %v1829
        %v1831 = vpop.xlane.xlu0 %1830
        %v1832 = vsel %vm969, %v1646, 0.0
        %1833 = vadd.xlane.f32.xlu0 %v1832
        %v1834 = vpop.xlane.xlu0 %1833
        %v1835 = vsel %vm969, %v1647, 0.0
        %1836 = vadd.xlane.f32.xlu0 %v1835
        %v1837 = vpop.xlane.xlu0 %1836
        %v1838 = vsel %vm969, %v1648, 0.0
        %1839 = vadd.xlane.f32.xlu0 %v1838
        %v1840 = vpop.xlane.xlu0 %1839
        %v1841 = vsel %vm969, %v1649, 0.0
        %1842 = vadd.xlane.f32.xlu0 %v1841
        %v1843 = vpop.xlane.xlu0 %1842
        %v1844 = vsel %vm969, %v1650, 0.0
        %1845 = vadd.xlane.f32.xlu0 %v1844
        %v1846 = vpop.xlane.xlu0 %1845
        %v1847 = vsel %vm969, %v1651, 0.0
        %1848 = vadd.xlane.f32.xlu0 %v1847
        %v1849 = vpop.xlane.xlu0 %1848
        %v1850 = vsel %vm969, %v1652, 0.0
        %1851 = vadd.xlane.f32.xlu0 %v1850
        %v1852 = vpop.xlane.xlu0 %1851
        %v1853 = vsel %vm969, %v1653, 0.0
        %1854 = vadd.xlane.f32.xlu0 %v1853
        %v1855 = vpop.xlane.xlu0 %1854
        %v1856 = vsel %vm969, %v1654, 0.0
        %1857 = vadd.xlane.f32.xlu0 %v1856
        %v1858 = vpop.xlane.xlu0 %1857
        %v1859 = vsel %vm969, %v1655, 0.0
        %1860 = vadd.xlane.f32.xlu0 %v1859
        %v1861 = vpop.xlane.xlu0 %1860
        %v1862 = vsel %vm969, %v1656, 0.0
        %1863 = vadd.xlane.f32.xlu0 %v1862
        %v1864 = vpop.xlane.xlu0 %1863
        %v1865 = vsel %vm969, %v1657, 0.0
        %1866 = vadd.xlane.f32.xlu0 %v1865
        %v1867 = vpop.xlane.xlu0 %1866
        %v1868 = vsel %vm969, %v1658, 0.0
        %1869 = vadd.xlane.f32.xlu0 %v1868
        %v1870 = vpop.xlane.xlu0 %1869
        %v1871 = vsel %vm969, %v1659, 0.0
        %1872 = vadd.xlane.f32.xlu0 %v1871
        %v1873 = vpop.xlane.xlu0 %1872
        %v1874 = vsel %vm969, %v1660, 0.0
        %1875 = vadd.xlane.f32.xlu0 %v1874
        %v1876 = vpop.xlane.xlu0 %1875
        %v1877 = vsel %vm969, %v1661, 0.0
        %1878 = vadd.xlane.f32.xlu0 %v1877
        %v1879 = vpop.xlane.xlu0 %1878
        %v1880 = vsel %vm969, %v1662, 0.0
        %1881 = vadd.xlane.f32.xlu0 %v1880
        %v1882 = vpop.xlane.xlu0 %1881
        %v1883 = vsel %vm969, %v1663, 0.0
        %1884 = vadd.xlane.f32.xlu0 %v1883
        %v1885 = vpop.xlane.xlu0 %1884
        %v1886 = vsel %vm969, %v1664, 0.0
        %1887 = vadd.xlane.f32.xlu0 %v1886
        %v1888 = vpop.xlane.xlu0 %1887
        %v1889 = vsel %vm969, %v1665, 0.0
        %1890 = vadd.xlane.f32.xlu0 %v1889
        %v1891 = vpop.xlane.xlu0 %1890
        %v1892 = vsel %vm969, %v1666, 0.0
        %1893 = vadd.xlane.f32.xlu0 %v1892
        %v1894 = vpop.xlane.xlu0 %1893
        %v1895 = vsel %vm969, %v1667, 0.0
        %1896 = vadd.xlane.f32.xlu0 %v1895
        %v1897 = vpop.xlane.xlu0 %1896
        %v1898 = vsel %vm969, %v1668, 0.0
        %1899 = vadd.xlane.f32.xlu0 %v1898
        %v1900 = vpop.xlane.xlu0 %1899
        %v1901 = vsel %vm969, %v1669, 0.0
        %1902 = vadd.xlane.f32.xlu0 %v1901
        %v1903 = vpop.xlane.xlu0 %1902
        %v1904 = vsel %vm969, %v1670, 0.0
        %1905 = vadd.xlane.f32.xlu0 %v1904
        %v1906 = vpop.xlane.xlu0 %1905
        %v1907 = vsel %vm969, %v1671, 0.0
        %1908 = vadd.xlane.f32.xlu0 %v1907
        %v1909 = vpop.xlane.xlu0 %1908
        %v1910 = vsel %vm969, %v1672, 0.0
        %1911 = vadd.xlane.f32.xlu0 %v1910
        %v1912 = vpop.xlane.xlu0 %1911
        %v1913 = vsel %vm969, %v1673, 0.0
        %1914 = vadd.xlane.f32.xlu0 %v1913
        %v1915 = vpop.xlane.xlu0 %1914
        %v1916 = vsel %vm969, %v1674, 0.0
        %1917 = vadd.xlane.f32.xlu0 %v1916
        %v1918 = vpop.xlane.xlu0 %1917
        %v1919 = vsel %vm969, %v1675, 0.0
        %1920 = vadd.xlane.f32.xlu0 %v1919
        %v1921 = vpop.xlane.xlu0 %1920
        %v1922 = vsel %vm969, %v1676, 0.0
        %1923 = vadd.xlane.f32.xlu0 %v1922
        %v1924 = vpop.xlane.xlu0 %1923
        %v1925 = vsel %vm969, %v1677, 0.0
        %1926 = vadd.xlane.f32.xlu0 %v1925
        %v1927 = vpop.xlane.xlu0 %1926
        %v1928 = vsel %vm969, %v1678, 0.0
        %1929 = vadd.xlane.f32.xlu0 %v1928
        %v1930 = vpop.xlane.xlu0 %1929
        %v1931 = vsel %vm969, %v1679, 0.0
        %1932 = vadd.xlane.f32.xlu0 %v1931
        %v1933 = vpop.xlane.xlu0 %1932
        %v1934 = vsel %vm969, %v1680, 0.0
        %1935 = vadd.xlane.f32.xlu0 %v1934
        %v1936 = vpop.xlane.xlu0 %1935
        %v1937 = vsel %vm969, %v1681, 0.0
        %1938 = vadd.xlane.f32.xlu0 %v1937
        %v1939 = vpop.xlane.xlu0 %1938
        %v1940 = vsel %vm969, %v1682, 0.0
        %1941 = vadd.xlane.f32.xlu0 %v1940
        %v1942 = vpop.xlane.xlu0 %1941
        %v1943 = vsel %vm969, %v1683, 0.0
        %1944 = vadd.xlane.f32.xlu0 %v1943
        %v1945 = vpop.xlane.xlu0 %1944
        %v1946 = vsel %vm969, %v1684, 0.0
        %1947 = vadd.xlane.f32.xlu0 %v1946
        %v1948 = vpop.xlane.xlu0 %1947
        %v1949 = vsel %vm969, %v1685, 0.0
        %1950 = vadd.xlane.f32.xlu0 %v1949
        %v1951 = vpop.xlane.xlu0 %1950
        %v1952 = vsel %vm969, %v1686, 0.0
        %1953 = vadd.xlane.f32.xlu0 %v1952
        %v1954 = vpop.xlane.xlu0 %1953
        %v1955 = vsel %vm969, %v1687, 0.0
        %1956 = vadd.xlane.f32.xlu0 %v1955
        %v1957 = vpop.xlane.xlu0 %1956
        %v1958 = vsel %vm969, %v1688, 0.0
        %1959 = vadd.xlane.f32.xlu0 %v1958
        %v1960 = vpop.xlane.xlu0 %1959
        %v1961 = vsel %vm969, %v1689, 0.0
        %1962 = vadd.xlane.f32.xlu0 %v1961
        %v1963 = vpop.xlane.xlu0 %1962
        %v1964 = vsel %vm969, %v1690, 0.0
        %1965 = vadd.xlane.f32.xlu0 %v1964
        %v1966 = vpop.xlane.xlu0 %1965
        %v1967 = vsel %vm969, %v1691, 0.0
        %1968 = vadd.xlane.f32.xlu0 %v1967
        %v1969 = vpop.xlane.xlu0 %1968
        %v1970 = vsel %vm969, %v1692, 0.0
        %1971 = vadd.xlane.f32.xlu0 %v1970
        %v1972 = vpop.xlane.xlu0 %1971
        %v1973 = vsel %vm969, %v1693, 0.0
        %1974 = vadd.xlane.f32.xlu0 %v1973
        %v1975 = vpop.xlane.xlu0 %1974
        %v1976 = vsel %vm969, %v1694, 0.0
        %1977 = vadd.xlane.f32.xlu0 %v1976
        %v1978 = vpop.xlane.xlu0 %1977
        %v1979 = vsel %vm969, %v1695, 0.0
        %1980 = vadd.xlane.f32.xlu0 %v1979
        %v1981 = vpop.xlane.xlu0 %1980
        %v1982 = vsel %vm969, %v1696, 0.0
        %1983 = vadd.xlane.f32.xlu0 %v1982
        %v1984 = vpop.xlane.xlu0 %1983
        %v1985 = vsel %vm969, %v1697, 0.0
        %1986 = vadd.xlane.f32.xlu0 %v1985
        %v1987 = vpop.xlane.xlu0 %1986
        %v1988 = vsel %vm969, %v1698, 0.0
        %1989 = vadd.xlane.f32.xlu0 %v1988
        %v1990 = vpop.xlane.xlu0 %1989
        %v1991 = vsel %vm969, %v1699, 0.0
        %1992 = vadd.xlane.f32.xlu0 %v1991
        %v1993 = vpop.xlane.xlu0 %1992
        %v1994 = vsel %vm969, %v1700, 0.0
        %1995 = vadd.xlane.f32.xlu0 %v1994
        %v1996 = vpop.xlane.xlu0 %1995
        %v1997 = vsel %vm969, %v1701, 0.0
        %1998 = vadd.xlane.f32.xlu0 %v1997
        %v1999 = vpop.xlane.xlu0 %1998
        %v2000 = vsel %vm969, %v1702, 0.0
        %2001 = vadd.xlane.f32.xlu0 %v2000
        %v2002 = vpop.xlane.xlu0 %2001
        %v2003 = vsel %vm969, %v1703, 0.0
        %2004 = vadd.xlane.f32.xlu0 %v2003
        %v2005 = vpop.xlane.xlu0 %2004
        %v2006 = vsel %vm969, %v1704, 0.0
        %2007 = vadd.xlane.f32.xlu0 %v2006
        %v2008 = vpop.xlane.xlu0 %2007
        %v2009 = vsel %vm969, %v1705, 0.0
        %2010 = vadd.xlane.f32.xlu0 %v2009
        %v2011 = vpop.xlane.xlu0 %2010
        %v2012 = vsel %vm969, %v1706, 0.0
        %2013 = vadd.xlane.f32.xlu0 %v2012
        %v2014 = vpop.xlane.xlu0 %2013
        %v2015 = vsel %vm969, %v1707, 0.0
        %2016 = vadd.xlane.f32.xlu0 %v2015
        %v2017 = vpop.xlane.xlu0 %2016
        %v2018 = vsel %vm969, %v1708, 0.0
        %2019 = vadd.xlane.f32.xlu0 %v2018
        %v2020 = vpop.xlane.xlu0 %2019
        %v2021 = vsel %vm969, %v1709, 0.0
        %2022 = vadd.xlane.f32.xlu0 %v2021
        %v2023 = vpop.xlane.xlu0 %2022
        %v2024 = vsel %vm969, %v1710, 0.0
        %2025 = vadd.xlane.f32.xlu0 %v2024
        %v2026 = vpop.xlane.xlu0 %2025
        %v2027 = vsel %vm969, %v1711, 0.0
        %2028 = vadd.xlane.f32.xlu0 %v2027
        %v2029 = vpop.xlane.xlu0 %2028
        %v2030 = vsel %vm969, %v1712, 0.0
        %2031 = vadd.xlane.f32.xlu0 %v2030
        %v2032 = vpop.xlane.xlu0 %2031
        %v2033 = vsel %vm969, %v1713, 0.0
        %2034 = vadd.xlane.f32.xlu0 %v2033
        %v2035 = vpop.xlane.xlu0 %2034
        %v2036 = vsel %vm969, %v1714, 0.0
        %2037 = vadd.xlane.f32.xlu0 %v2036
        %v2038 = vpop.xlane.xlu0 %2037
        %v2039 = vsel %vm969, %v1715, 0.0
        %2040 = vadd.xlane.f32.xlu0 %v2039
        %v2041 = vpop.xlane.xlu0 %2040
        %v2042 = vsel %vm969, %v1716, 0.0
        %2043 = vadd.xlane.f32.xlu0 %v2042
        %v2044 = vpop.xlane.xlu0 %2043
        %v2045 = vsel %vm969, %v1717, 0.0
        %2046 = vadd.xlane.f32.xlu0 %v2045
        %v2047 = vpop.xlane.xlu0 %2046
        %v2048 = vsel %vm969, %v1718, 0.0
        %2049 = vadd.xlane.f32.xlu0 %v2048
        %v2050 = vpop.xlane.xlu0 %2049
        %v2051 = vsel %vm969, %v1719, 0.0
        %2052 = vadd.xlane.f32.xlu0 %v2051
        %v2053 = vpop.xlane.xlu0 %2052
        %v2054 = vsel %vm969, %v1720, 0.0
        %2055 = vadd.xlane.f32.xlu0 %v2054
        %v2056 = vpop.xlane.xlu0 %2055
        %v2057 = vsel %vm969, %v1721, 0.0
        %2058 = vadd.xlane.f32.xlu0 %v2057
        %v2059 = vpop.xlane.xlu0 %2058
        %v2060 = vsel %vm969, %v1722, 0.0
        %2061 = vadd.xlane.f32.xlu0 %v2060
        %v2062 = vpop.xlane.xlu0 %2061
        %v2063 = vsel %vm969, %v1723, 0.0
        %2064 = vadd.xlane.f32.xlu0 %v2063
        %v2065 = vpop.xlane.xlu0 %2064
        %v2066 = vsel %vm969, %v1724, 0.0
        %2067 = vadd.xlane.f32.xlu0 %v2066
        %v2068 = vpop.xlane.xlu0 %2067
        %v2069 = vsel %vm969, %v1725, 0.0
        %2070 = vadd.xlane.f32.xlu0 %v2069
        %v2071 = vpop.xlane.xlu0 %2070
        %v2072 = vsel %vm969, %v1726, 0.0
        %2073 = vadd.xlane.f32.xlu0 %v2072
        %v2074 = vpop.xlane.xlu0 %2073
        %v2075 = vsel %vm969, %v1727, 0.0
        %2076 = vadd.xlane.f32.xlu0 %v2075
        %v2077 = vpop.xlane.xlu0 %2076
        %v2078 = vsel %vm969, %v1728, 0.0
        %2079 = vadd.xlane.f32.xlu0 %v2078
        %v2080 = vpop.xlane.xlu0 %2079
        %v2081 = vsel %vm969, %v1729, 0.0
        %2082 = vadd.xlane.f32.xlu0 %v2081
        %v2083 = vpop.xlane.xlu0 %2082
        %v2084 = vsel %vm969, %v1730, 0.0
        %2085 = vadd.xlane.f32.xlu0 %v2084
        %v2086 = vpop.xlane.xlu0 %2085
        %v2087 = vsel %vm969, %v1731, 0.0
        %2088 = vadd.xlane.f32.xlu0 %v2087
        %v2089 = vpop.xlane.xlu0 %2088
        %v2090 = vsel %vm969, %v1732, 0.0
        %2091 = vadd.xlane.f32.xlu0 %v2090
        %v2092 = vpop.xlane.xlu0 %2091
        %v2093 = vsel %vm969, %v1733, 0.0
        %2094 = vadd.xlane.f32.xlu0 %v2093
        %v2095 = vpop.xlane.xlu0 %2094
        %v2096 = vsel %vm969, %v1734, 0.0
        %2097 = vadd.xlane.f32.xlu0 %v2096
        %v2098 = vpop.xlane.xlu0 %2097
        %v2099 = vsel %vm969, %v1735, 0.0
        %2100 = vadd.xlane.f32.xlu0 %v2099
        %v2101 = vpop.xlane.xlu0 %2100
        %v2102 = vsel %vm969, %v1736, 0.0
        %2103 = vadd.xlane.f32.xlu0 %v2102
        %v2104 = vpop.xlane.xlu0 %2103
        %v2105 = vsel %vm969, %v1737, 0.0
        %2106 = vadd.xlane.f32.xlu0 %v2105
        %v2107 = vpop.xlane.xlu0 %2106
        %v2108 = vsel %vm969, %v1738, 0.0
        %2109 = vadd.xlane.f32.xlu0 %v2108
        %v2110 = vpop.xlane.xlu0 %2109
        %v2111 = vsel %vm969, %v1739, 0.0
        %2112 = vadd.xlane.f32.xlu0 %v2111
        %v2113 = vpop.xlane.xlu0 %2112
        %v2114 = vsel %vm969, %v1740, 0.0
        %2115 = vadd.xlane.f32.xlu0 %v2114
        %v2116 = vpop.xlane.xlu0 %2115
        %v2117 = vsel %vm969, %v1741, 0.0
        %2118 = vadd.xlane.f32.xlu0 %v2117
        %v2119 = vpop.xlane.xlu0 %2118
        %v2120 = vsel %vm969, %v1742, 0.0
        %2121 = vadd.xlane.f32.xlu0 %v2120
        %v2122 = vpop.xlane.xlu0 %2121
        %v2123 = vsel %vm969, %v1743, 0.0
        %2124 = vadd.xlane.f32.xlu0 %v2123
        %v2125 = vpop.xlane.xlu0 %2124
        %v2126 = vsel %vm969, %v1744, 0.0
        %2127 = vadd.xlane.f32.xlu0 %v2126
        %v2128 = vpop.xlane.xlu0 %2127
        %v2129 = vmul.f32 %v1747, %v1360
        %v2130 = vmul.f32 %v1750, %v1360
        %v2131 = vmul.f32 %v1753, %v1360
        %v2132 = vmul.f32 %v1756, %v1360
        %v2133 = vmul.f32 %v1759, %v1360
        %v2134 = vmul.f32 %v1762, %v1360
        %v2135 = vmul.f32 %v1765, %v1360
        %v2136 = vmul.f32 %v1768, %v1360
        %v2137 = vmul.f32 %v1771, %v1360
        %v2138 = vmul.f32 %v1774, %v1360
        %v2139 = vmul.f32 %v1777, %v1360
        %v2140 = vmul.f32 %v1780, %v1360
        %v2141 = vmul.f32 %v1783, %v1360
        %v2142 = vmul.f32 %v1786, %v1360
        %v2143 = vmul.f32 %v1789, %v1360
        %v2144 = vmul.f32 %v1792, %v1360
        %v2145 = vmul.f32 %v1795, %v1360
        %v2146 = vmul.f32 %v1798, %v1360
        %v2147 = vmul.f32 %v1801, %v1360
        %v2148 = vmul.f32 %v1804, %v1360
        %v2149 = vmul.f32 %v1807, %v1360
        %v2150 = vmul.f32 %v1810, %v1360
        %v2151 = vmul.f32 %v1813, %v1360
        %v2152 = vmul.f32 %v1816, %v1360
        %v2153 = vmul.f32 %v1819, %v1360
        %v2154 = vmul.f32 %v1822, %v1360
        %v2155 = vmul.f32 %v1825, %v1360
        %v2156 = vmul.f32 %v1828, %v1360
        %v2157 = vmul.f32 %v1831, %v1360
        %v2158 = vmul.f32 %v1834, %v1360
        %v2159 = vmul.f32 %v1837, %v1360
        %v2160 = vmul.f32 %v1840, %v1360
        %v2161 = vmul.f32 %v1843, %v1360
        %v2162 = vmul.f32 %v1846, %v1360
        %v2163 = vmul.f32 %v1849, %v1360
        %v2164 = vmul.f32 %v1852, %v1360
        %v2165 = vmul.f32 %v1855, %v1360
        %v2166 = vmul.f32 %v1858, %v1360
        %v2167 = vmul.f32 %v1861, %v1360
        %v2168 = vmul.f32 %v1864, %v1360
        %v2169 = vmul.f32 %v1867, %v1360
        %v2170 = vmul.f32 %v1870, %v1360
        %v2171 = vmul.f32 %v1873, %v1360
        %v2172 = vmul.f32 %v1876, %v1360
        %v2173 = vmul.f32 %v1879, %v1360
        %v2174 = vmul.f32 %v1882, %v1360
        %v2175 = vmul.f32 %v1885, %v1360
        %v2176 = vmul.f32 %v1888, %v1360
        %v2177 = vmul.f32 %v1891, %v1360
        %v2178 = vmul.f32 %v1894, %v1360
        %v2179 = vmul.f32 %v1897, %v1360
        %v2180 = vmul.f32 %v1900, %v1360
        %v2181 = vmul.f32 %v1903, %v1360
        %v2182 = vmul.f32 %v1906, %v1360
        %v2183 = vmul.f32 %v1909, %v1360
        %v2184 = vmul.f32 %v1912, %v1360
        %v2185 = vmul.f32 %v1915, %v1360
        %v2186 = vmul.f32 %v1918, %v1360
        %v2187 = vmul.f32 %v1921, %v1360
        %v2188 = vmul.f32 %v1924, %v1360
        %v2189 = vmul.f32 %v1927, %v1360
        %v2190 = vmul.f32 %v1930, %v1360
        %v2191 = vmul.f32 %v1933, %v1360
        %v2192 = vmul.f32 %v1936, %v1360
        %v2193 = vmul.f32 %v1939, %v1360
        %v2194 = vmul.f32 %v1942, %v1360
        %v2195 = vmul.f32 %v1945, %v1360
        %v2196 = vmul.f32 %v1948, %v1360
        %v2197 = vmul.f32 %v1951, %v1360
        %v2198 = vmul.f32 %v1954, %v1360
        %v2199 = vmul.f32 %v1957, %v1360
        %v2200 = vmul.f32 %v1960, %v1360
        %v2201 = vmul.f32 %v1963, %v1360
        %v2202 = vmul.f32 %v1966, %v1360
        %v2203 = vmul.f32 %v1969, %v1360
        %v2204 = vmul.f32 %v1972, %v1360
        %v2205 = vmul.f32 %v1975, %v1360
        %v2206 = vmul.f32 %v1978, %v1360
        %v2207 = vmul.f32 %v1981, %v1360
        %v2208 = vmul.f32 %v1984, %v1360
        %v2209 = vmul.f32 %v1987, %v1360
        %v2210 = vmul.f32 %v1990, %v1360
        %v2211 = vmul.f32 %v1993, %v1360
        %v2212 = vmul.f32 %v1996, %v1360
        %v2213 = vmul.f32 %v1999, %v1360
        %v2214 = vmul.f32 %v2002, %v1360
        %v2215 = vmul.f32 %v2005, %v1360
        %v2216 = vmul.f32 %v2008, %v1360
        %v2217 = vmul.f32 %v2011, %v1360
        %v2218 = vmul.f32 %v2014, %v1360
        %v2219 = vmul.f32 %v2017, %v1360
        %v2220 = vmul.f32 %v2020, %v1360
        %v2221 = vmul.f32 %v2023, %v1360
        %v2222 = vmul.f32 %v2026, %v1360
        %v2223 = vmul.f32 %v2029, %v1360
        %v2224 = vmul.f32 %v2032, %v1360
        %v2225 = vmul.f32 %v2035, %v1360
        %v2226 = vmul.f32 %v2038, %v1360
        %v2227 = vmul.f32 %v2041, %v1360
        %v2228 = vmul.f32 %v2044, %v1360
        %v2229 = vmul.f32 %v2047, %v1360
        %v2230 = vmul.f32 %v2050, %v1360
        %v2231 = vmul.f32 %v2053, %v1360
        %v2232 = vmul.f32 %v2056, %v1360
        %v2233 = vmul.f32 %v2059, %v1360
        %v2234 = vmul.f32 %v2062, %v1360
        %v2235 = vmul.f32 %v2065, %v1360
        %v2236 = vmul.f32 %v2068, %v1360
        %v2237 = vmul.f32 %v2071, %v1360
        %v2238 = vmul.f32 %v2074, %v1360
        %v2239 = vmul.f32 %v2077, %v1360
        %v2240 = vmul.f32 %v2080, %v1360
        %v2241 = vmul.f32 %v2083, %v1360
        %v2242 = vmul.f32 %v2086, %v1360
        %v2243 = vmul.f32 %v2089, %v1360
        %v2244 = vmul.f32 %v2092, %v1360
        %v2245 = vmul.f32 %v2095, %v1360
        %v2246 = vmul.f32 %v2098, %v1360
        %v2247 = vmul.f32 %v2101, %v1360
        %v2248 = vmul.f32 %v2104, %v1360
        %v2249 = vmul.f32 %v2107, %v1360
        %v2250 = vmul.f32 %v2110, %v1360
        %v2251 = vmul.f32 %v2113, %v1360
        %v2252 = vmul.f32 %v2116, %v1360
        %v2253 = vmul.f32 %v2119, %v1360
        %v2254 = vmul.f32 %v2122, %v1360
        %v2255 = vmul.f32 %v2125, %v1360
        %v2256 = vmul.f32 %v2128, %v1360
        %v2258 = vperm.slane %v967, 0
        %v2260 = vmul.f32 %v1489, %v2258
        %v2261 = vmul.f32 %v1490, %v2258
        %v2262 = vmul.f32 %v1491, %v2258
        %v2263 = vmul.f32 %v1492, %v2258
        %v2264 = vmul.f32 %v1493, %v2258
        %v2265 = vmul.f32 %v1494, %v2258
        %v2266 = vmul.f32 %v1495, %v2258
        %v2267 = vmul.f32 %v1496, %v2258
        %v2268 = vmul.f32 %v1497, %v2258
        %v2269 = vmul.f32 %v1498, %v2258
        %v2270 = vmul.f32 %v1499, %v2258
        %v2271 = vmul.f32 %v1500, %v2258
        %v2272 = vmul.f32 %v1501, %v2258
        %v2273 = vmul.f32 %v1502, %v2258
        %v2274 = vmul.f32 %v1503, %v2258
        %v2275 = vmul.f32 %v1504, %v2258
        %v2276 = vmul.f32 %v1505, %v2258
        %v2277 = vmul.f32 %v1506, %v2258
        %v2278 = vmul.f32 %v1507, %v2258
        %v2279 = vmul.f32 %v1508, %v2258
        %v2280 = vmul.f32 %v1509, %v2258
        %v2281 = vmul.f32 %v1510, %v2258
        %v2282 = vmul.f32 %v1511, %v2258
        %v2283 = vmul.f32 %v1512, %v2258
        %v2284 = vmul.f32 %v1513, %v2258
        %v2285 = vmul.f32 %v1514, %v2258
        %v2286 = vmul.f32 %v1515, %v2258
        %v2287 = vmul.f32 %v1516, %v2258
        %v2288 = vmul.f32 %v1517, %v2258
        %v2289 = vmul.f32 %v1518, %v2258
        %v2290 = vmul.f32 %v1519, %v2258
        %v2291 = vmul.f32 %v1520, %v2258
        %v2292 = vmul.f32 %v1521, %v2258
        %v2293 = vmul.f32 %v1522, %v2258
        %v2294 = vmul.f32 %v1523, %v2258
        %v2295 = vmul.f32 %v1524, %v2258
        %v2296 = vmul.f32 %v1525, %v2258
        %v2297 = vmul.f32 %v1526, %v2258
        %v2298 = vmul.f32 %v1527, %v2258
        %v2299 = vmul.f32 %v1528, %v2258
        %v2300 = vmul.f32 %v1529, %v2258
        %v2301 = vmul.f32 %v1530, %v2258
        %v2302 = vmul.f32 %v1531, %v2258
        %v2303 = vmul.f32 %v1532, %v2258
        %v2304 = vmul.f32 %v1533, %v2258
        %v2305 = vmul.f32 %v1534, %v2258
        %v2306 = vmul.f32 %v1535, %v2258
        %v2307 = vmul.f32 %v1536, %v2258
        %v2308 = vmul.f32 %v1537, %v2258
        %v2309 = vmul.f32 %v1538, %v2258
        %v2310 = vmul.f32 %v1539, %v2258
        %v2311 = vmul.f32 %v1540, %v2258
        %v2312 = vmul.f32 %v1541, %v2258
        %v2313 = vmul.f32 %v1542, %v2258
        %v2314 = vmul.f32 %v1543, %v2258
        %v2315 = vmul.f32 %v1544, %v2258
        %v2316 = vmul.f32 %v1545, %v2258
        %v2317 = vmul.f32 %v1546, %v2258
        %v2318 = vmul.f32 %v1547, %v2258
        %v2319 = vmul.f32 %v1548, %v2258
        %v2320 = vmul.f32 %v1549, %v2258
        %v2321 = vmul.f32 %v1550, %v2258
        %v2322 = vmul.f32 %v1551, %v2258
        %v2323 = vmul.f32 %v1552, %v2258
        %v2324 = vmul.f32 %v1553, %v2258
        %v2325 = vmul.f32 %v1554, %v2258
        %v2326 = vmul.f32 %v1555, %v2258
        %v2327 = vmul.f32 %v1556, %v2258
        %v2328 = vmul.f32 %v1557, %v2258
        %v2329 = vmul.f32 %v1558, %v2258
        %v2330 = vmul.f32 %v1559, %v2258
        %v2331 = vmul.f32 %v1560, %v2258
        %v2332 = vmul.f32 %v1561, %v2258
        %v2333 = vmul.f32 %v1562, %v2258
        %v2334 = vmul.f32 %v1563, %v2258
        %v2335 = vmul.f32 %v1564, %v2258
        %v2336 = vmul.f32 %v1565, %v2258
        %v2337 = vmul.f32 %v1566, %v2258
        %v2338 = vmul.f32 %v1567, %v2258
        %v2339 = vmul.f32 %v1568, %v2258
        %v2340 = vmul.f32 %v1569, %v2258
        %v2341 = vmul.f32 %v1570, %v2258
        %v2342 = vmul.f32 %v1571, %v2258
        %v2343 = vmul.f32 %v1572, %v2258
        %v2344 = vmul.f32 %v1573, %v2258
        %v2345 = vmul.f32 %v1574, %v2258
        %v2346 = vmul.f32 %v1575, %v2258
        %v2347 = vmul.f32 %v1576, %v2258
        %v2348 = vmul.f32 %v1577, %v2258
        %v2349 = vmul.f32 %v1578, %v2258
        %v2350 = vmul.f32 %v1579, %v2258
        %v2351 = vmul.f32 %v1580, %v2258
        %v2352 = vmul.f32 %v1581, %v2258
        %v2353 = vmul.f32 %v1582, %v2258
        %v2354 = vmul.f32 %v1583, %v2258
        %v2355 = vmul.f32 %v1584, %v2258
        %v2356 = vmul.f32 %v1585, %v2258
        %v2357 = vmul.f32 %v1586, %v2258
        %v2358 = vmul.f32 %v1587, %v2258
        %v2359 = vmul.f32 %v1588, %v2258
        %v2360 = vmul.f32 %v1589, %v2258
        %v2361 = vmul.f32 %v1590, %v2258
        %v2362 = vmul.f32 %v1591, %v2258
        %v2363 = vmul.f32 %v1592, %v2258
        %v2364 = vmul.f32 %v1593, %v2258
        %v2365 = vmul.f32 %v1594, %v2258
        %v2366 = vmul.f32 %v1595, %v2258
        %v2367 = vmul.f32 %v1596, %v2258
        %v2368 = vmul.f32 %v1597, %v2258
        %v2369 = vmul.f32 %v1598, %v2258
        %v2370 = vmul.f32 %v1599, %v2258
        %v2371 = vmul.f32 %v1600, %v2258
        %v2372 = vmul.f32 %v1601, %v2258
        %v2373 = vmul.f32 %v1602, %v2258
        %v2374 = vmul.f32 %v1603, %v2258
        %v2375 = vmul.f32 %v1604, %v2258
        %v2376 = vmul.f32 %v1605, %v2258
        %v2377 = vmul.f32 %v1606, %v2258
        %v2378 = vmul.f32 %v1607, %v2258
        %v2379 = vmul.f32 %v1608, %v2258
        %v2380 = vmul.f32 %v1609, %v2258
        %v2381 = vmul.f32 %v1610, %v2258
        %v2382 = vmul.f32 %v1611, %v2258
        %v2383 = vmul.f32 %v1612, %v2258
        %v2384 = vmul.f32 %v1613, %v2258
        %v2385 = vmul.f32 %v1614, %v2258
        %v2386 = vmul.f32 %v1615, %v2258
        %v2387 = vmul.f32 %v1616, %v2258
        %v2388 = vsel %vm969, %v2260, 0.0
        %2389 = vadd.xlane.f32.xlu0 %v2388
        %v2390 = vpop.xlane.xlu0 %2389
        %v2391 = vsel %vm969, %v2261, 0.0
        %2392 = vadd.xlane.f32.xlu0 %v2391
        %v2393 = vpop.xlane.xlu0 %2392
        %v2394 = vsel %vm969, %v2262, 0.0
        %2395 = vadd.xlane.f32.xlu0 %v2394
        %v2396 = vpop.xlane.xlu0 %2395
        %v2397 = vsel %vm969, %v2263, 0.0
        %2398 = vadd.xlane.f32.xlu0 %v2397
        %v2399 = vpop.xlane.xlu0 %2398
        %v2400 = vsel %vm969, %v2264, 0.0
        %2401 = vadd.xlane.f32.xlu0 %v2400
        %v2402 = vpop.xlane.xlu0 %2401
        %v2403 = vsel %vm969, %v2265, 0.0
        %2404 = vadd.xlane.f32.xlu0 %v2403
        %v2405 = vpop.xlane.xlu0 %2404
        %v2406 = vsel %vm969, %v2266, 0.0
        %2407 = vadd.xlane.f32.xlu0 %v2406
        %v2408 = vpop.xlane.xlu0 %2407
        %v2409 = vsel %vm969, %v2267, 0.0
        %2410 = vadd.xlane.f32.xlu0 %v2409
        %v2411 = vpop.xlane.xlu0 %2410
        %v2412 = vsel %vm969, %v2268, 0.0
        %2413 = vadd.xlane.f32.xlu0 %v2412
        %v2414 = vpop.xlane.xlu0 %2413
        %v2415 = vsel %vm969, %v2269, 0.0
        %2416 = vadd.xlane.f32.xlu0 %v2415
        %v2417 = vpop.xlane.xlu0 %2416
        %v2418 = vsel %vm969, %v2270, 0.0
        %2419 = vadd.xlane.f32.xlu0 %v2418
        %v2420 = vpop.xlane.xlu0 %2419
        %v2421 = vsel %vm969, %v2271, 0.0
        %2422 = vadd.xlane.f32.xlu0 %v2421
        %v2423 = vpop.xlane.xlu0 %2422
        %v2424 = vsel %vm969, %v2272, 0.0
        %2425 = vadd.xlane.f32.xlu0 %v2424
        %v2426 = vpop.xlane.xlu0 %2425
        %v2427 = vsel %vm969, %v2273, 0.0
        %2428 = vadd.xlane.f32.xlu0 %v2427
        %v2429 = vpop.xlane.xlu0 %2428
        %v2430 = vsel %vm969, %v2274, 0.0
        %2431 = vadd.xlane.f32.xlu0 %v2430
        %v2432 = vpop.xlane.xlu0 %2431
        %v2433 = vsel %vm969, %v2275, 0.0
        %2434 = vadd.xlane.f32.xlu0 %v2433
        %v2435 = vpop.xlane.xlu0 %2434
        %v2436 = vsel %vm969, %v2276, 0.0
        %2437 = vadd.xlane.f32.xlu0 %v2436
        %v2438 = vpop.xlane.xlu0 %2437
        %v2439 = vsel %vm969, %v2277, 0.0
        %2440 = vadd.xlane.f32.xlu0 %v2439
        %v2441 = vpop.xlane.xlu0 %2440
        %v2442 = vsel %vm969, %v2278, 0.0
        %2443 = vadd.xlane.f32.xlu0 %v2442
        %v2444 = vpop.xlane.xlu0 %2443
        %v2445 = vsel %vm969, %v2279, 0.0
        %2446 = vadd.xlane.f32.xlu0 %v2445
        %v2447 = vpop.xlane.xlu0 %2446
        %v2448 = vsel %vm969, %v2280, 0.0
        %2449 = vadd.xlane.f32.xlu0 %v2448
        %v2450 = vpop.xlane.xlu0 %2449
        %v2451 = vsel %vm969, %v2281, 0.0
        %2452 = vadd.xlane.f32.xlu0 %v2451
        %v2453 = vpop.xlane.xlu0 %2452
        %v2454 = vsel %vm969, %v2282, 0.0
        %2455 = vadd.xlane.f32.xlu0 %v2454
        %v2456 = vpop.xlane.xlu0 %2455
        %v2457 = vsel %vm969, %v2283, 0.0
        %2458 = vadd.xlane.f32.xlu0 %v2457
        %v2459 = vpop.xlane.xlu0 %2458
        %v2460 = vsel %vm969, %v2284, 0.0
        %2461 = vadd.xlane.f32.xlu0 %v2460
        %v2462 = vpop.xlane.xlu0 %2461
        %v2463 = vsel %vm969, %v2285, 0.0
        %2464 = vadd.xlane.f32.xlu0 %v2463
        %v2465 = vpop.xlane.xlu0 %2464
        %v2466 = vsel %vm969, %v2286, 0.0
        %2467 = vadd.xlane.f32.xlu0 %v2466
        %v2468 = vpop.xlane.xlu0 %2467
        %v2469 = vsel %vm969, %v2287, 0.0
        %2470 = vadd.xlane.f32.xlu0 %v2469
        %v2471 = vpop.xlane.xlu0 %2470
        %v2472 = vsel %vm969, %v2288, 0.0
        %2473 = vadd.xlane.f32.xlu0 %v2472
        %v2474 = vpop.xlane.xlu0 %2473
        %v2475 = vsel %vm969, %v2289, 0.0
        %2476 = vadd.xlane.f32.xlu0 %v2475
        %v2477 = vpop.xlane.xlu0 %2476
        %v2478 = vsel %vm969, %v2290, 0.0
        %2479 = vadd.xlane.f32.xlu0 %v2478
        %v2480 = vpop.xlane.xlu0 %2479
        %v2481 = vsel %vm969, %v2291, 0.0
        %2482 = vadd.xlane.f32.xlu0 %v2481
        %v2483 = vpop.xlane.xlu0 %2482
        %v2484 = vsel %vm969, %v2292, 0.0
        %2485 = vadd.xlane.f32.xlu0 %v2484
        %v2486 = vpop.xlane.xlu0 %2485
        %v2487 = vsel %vm969, %v2293, 0.0
        %2488 = vadd.xlane.f32.xlu0 %v2487
        %v2489 = vpop.xlane.xlu0 %2488
        %v2490 = vsel %vm969, %v2294, 0.0
        %2491 = vadd.xlane.f32.xlu0 %v2490
        %v2492 = vpop.xlane.xlu0 %2491
        %v2493 = vsel %vm969, %v2295, 0.0
        %2494 = vadd.xlane.f32.xlu0 %v2493
        %v2495 = vpop.xlane.xlu0 %2494
        %v2496 = vsel %vm969, %v2296, 0.0
        %2497 = vadd.xlane.f32.xlu0 %v2496
        %v2498 = vpop.xlane.xlu0 %2497
        %v2499 = vsel %vm969, %v2297, 0.0
        %2500 = vadd.xlane.f32.xlu0 %v2499
        %v2501 = vpop.xlane.xlu0 %2500
        %v2502 = vsel %vm969, %v2298, 0.0
        %2503 = vadd.xlane.f32.xlu0 %v2502
        %v2504 = vpop.xlane.xlu0 %2503
        %v2505 = vsel %vm969, %v2299, 0.0
        %2506 = vadd.xlane.f32.xlu0 %v2505
        %v2507 = vpop.xlane.xlu0 %2506
        %v2508 = vsel %vm969, %v2300, 0.0
        %2509 = vadd.xlane.f32.xlu0 %v2508
        %v2510 = vpop.xlane.xlu0 %2509
        %v2511 = vsel %vm969, %v2301, 0.0
        %2512 = vadd.xlane.f32.xlu0 %v2511
        %v2513 = vpop.xlane.xlu0 %2512
        %v2514 = vsel %vm969, %v2302, 0.0
        %2515 = vadd.xlane.f32.xlu0 %v2514
        %v2516 = vpop.xlane.xlu0 %2515
        %v2517 = vsel %vm969, %v2303, 0.0
        %2518 = vadd.xlane.f32.xlu0 %v2517
        %v2519 = vpop.xlane.xlu0 %2518
        %v2520 = vsel %vm969, %v2304, 0.0
        %2521 = vadd.xlane.f32.xlu0 %v2520
        %v2522 = vpop.xlane.xlu0 %2521
        %v2523 = vsel %vm969, %v2305, 0.0
        %2524 = vadd.xlane.f32.xlu0 %v2523
        %v2525 = vpop.xlane.xlu0 %2524
        %v2526 = vsel %vm969, %v2306, 0.0
        %2527 = vadd.xlane.f32.xlu0 %v2526
        %v2528 = vpop.xlane.xlu0 %2527
        %v2529 = vsel %vm969, %v2307, 0.0
        %2530 = vadd.xlane.f32.xlu0 %v2529
        %v2531 = vpop.xlane.xlu0 %2530
        %v2532 = vsel %vm969, %v2308, 0.0
        %2533 = vadd.xlane.f32.xlu0 %v2532
        %v2534 = vpop.xlane.xlu0 %2533
        %v2535 = vsel %vm969, %v2309, 0.0
        %2536 = vadd.xlane.f32.xlu0 %v2535
        %v2537 = vpop.xlane.xlu0 %2536
        %v2538 = vsel %vm969, %v2310, 0.0
        %2539 = vadd.xlane.f32.xlu0 %v2538
        %v2540 = vpop.xlane.xlu0 %2539
        %v2541 = vsel %vm969, %v2311, 0.0
        %2542 = vadd.xlane.f32.xlu0 %v2541
        %v2543 = vpop.xlane.xlu0 %2542
        %v2544 = vsel %vm969, %v2312, 0.0
        %2545 = vadd.xlane.f32.xlu0 %v2544
        %v2546 = vpop.xlane.xlu0 %2545
        %v2547 = vsel %vm969, %v2313, 0.0
        %2548 = vadd.xlane.f32.xlu0 %v2547
        %v2549 = vpop.xlane.xlu0 %2548
        %v2550 = vsel %vm969, %v2314, 0.0
        %2551 = vadd.xlane.f32.xlu0 %v2550
        %v2552 = vpop.xlane.xlu0 %2551
        %v2553 = vsel %vm969, %v2315, 0.0
        %2554 = vadd.xlane.f32.xlu0 %v2553
        %v2555 = vpop.xlane.xlu0 %2554
        %v2556 = vsel %vm969, %v2316, 0.0
        %2557 = vadd.xlane.f32.xlu0 %v2556
        %v2558 = vpop.xlane.xlu0 %2557
        %v2559 = vsel %vm969, %v2317, 0.0
        %2560 = vadd.xlane.f32.xlu0 %v2559
        %v2561 = vpop.xlane.xlu0 %2560
        %v2562 = vsel %vm969, %v2318, 0.0
        %2563 = vadd.xlane.f32.xlu0 %v2562
        %v2564 = vpop.xlane.xlu0 %2563
        %v2565 = vsel %vm969, %v2319, 0.0
        %2566 = vadd.xlane.f32.xlu0 %v2565
        %v2567 = vpop.xlane.xlu0 %2566
        %v2568 = vsel %vm969, %v2320, 0.0
        %2569 = vadd.xlane.f32.xlu0 %v2568
        %v2570 = vpop.xlane.xlu0 %2569
        %v2571 = vsel %vm969, %v2321, 0.0
        %2572 = vadd.xlane.f32.xlu0 %v2571
        %v2573 = vpop.xlane.xlu0 %2572
        %v2574 = vsel %vm969, %v2322, 0.0
        %2575 = vadd.xlane.f32.xlu0 %v2574
        %v2576 = vpop.xlane.xlu0 %2575
        %v2577 = vsel %vm969, %v2323, 0.0
        %2578 = vadd.xlane.f32.xlu0 %v2577
        %v2579 = vpop.xlane.xlu0 %2578
        %v2580 = vsel %vm969, %v2324, 0.0
        %2581 = vadd.xlane.f32.xlu0 %v2580
        %v2582 = vpop.xlane.xlu0 %2581
        %v2583 = vsel %vm969, %v2325, 0.0
        %2584 = vadd.xlane.f32.xlu0 %v2583
        %v2585 = vpop.xlane.xlu0 %2584
        %v2586 = vsel %vm969, %v2326, 0.0
        %2587 = vadd.xlane.f32.xlu0 %v2586
        %v2588 = vpop.xlane.xlu0 %2587
        %v2589 = vsel %vm969, %v2327, 0.0
        %2590 = vadd.xlane.f32.xlu0 %v2589
        %v2591 = vpop.xlane.xlu0 %2590
        %v2592 = vsel %vm969, %v2328, 0.0
        %2593 = vadd.xlane.f32.xlu0 %v2592
        %v2594 = vpop.xlane.xlu0 %2593
        %v2595 = vsel %vm969, %v2329, 0.0
        %2596 = vadd.xlane.f32.xlu0 %v2595
        %v2597 = vpop.xlane.xlu0 %2596
        %v2598 = vsel %vm969, %v2330, 0.0
        %2599 = vadd.xlane.f32.xlu0 %v2598
        %v2600 = vpop.xlane.xlu0 %2599
        %v2601 = vsel %vm969, %v2331, 0.0
        %2602 = vadd.xlane.f32.xlu0 %v2601
        %v2603 = vpop.xlane.xlu0 %2602
        %v2604 = vsel %vm969, %v2332, 0.0
        %2605 = vadd.xlane.f32.xlu0 %v2604
        %v2606 = vpop.xlane.xlu0 %2605
        %v2607 = vsel %vm969, %v2333, 0.0
        %2608 = vadd.xlane.f32.xlu0 %v2607
        %v2609 = vpop.xlane.xlu0 %2608
        %v2610 = vsel %vm969, %v2334, 0.0
        %2611 = vadd.xlane.f32.xlu0 %v2610
        %v2612 = vpop.xlane.xlu0 %2611
        %v2613 = vsel %vm969, %v2335, 0.0
        %2614 = vadd.xlane.f32.xlu0 %v2613
        %v2615 = vpop.xlane.xlu0 %2614
        %v2616 = vsel %vm969, %v2336, 0.0
        %2617 = vadd.xlane.f32.xlu0 %v2616
        %v2618 = vpop.xlane.xlu0 %2617
        %v2619 = vsel %vm969, %v2337, 0.0
        %2620 = vadd.xlane.f32.xlu0 %v2619
        %v2621 = vpop.xlane.xlu0 %2620
        %v2622 = vsel %vm969, %v2338, 0.0
        %2623 = vadd.xlane.f32.xlu0 %v2622
        %v2624 = vpop.xlane.xlu0 %2623
        %v2625 = vsel %vm969, %v2339, 0.0
        %2626 = vadd.xlane.f32.xlu0 %v2625
        %v2627 = vpop.xlane.xlu0 %2626
        %v2628 = vsel %vm969, %v2340, 0.0
        %2629 = vadd.xlane.f32.xlu0 %v2628
        %v2630 = vpop.xlane.xlu0 %2629
        %v2631 = vsel %vm969, %v2341, 0.0
        %2632 = vadd.xlane.f32.xlu0 %v2631
        %v2633 = vpop.xlane.xlu0 %2632
        %v2634 = vsel %vm969, %v2342, 0.0
        %2635 = vadd.xlane.f32.xlu0 %v2634
        %v2636 = vpop.xlane.xlu0 %2635
        %v2637 = vsel %vm969, %v2343, 0.0
        %2638 = vadd.xlane.f32.xlu0 %v2637
        %v2639 = vpop.xlane.xlu0 %2638
        %v2640 = vsel %vm969, %v2344, 0.0
        %2641 = vadd.xlane.f32.xlu0 %v2640
        %v2642 = vpop.xlane.xlu0 %2641
        %v2643 = vsel %vm969, %v2345, 0.0
        %2644 = vadd.xlane.f32.xlu0 %v2643
        %v2645 = vpop.xlane.xlu0 %2644
        %v2646 = vsel %vm969, %v2346, 0.0
        %2647 = vadd.xlane.f32.xlu0 %v2646
        %v2648 = vpop.xlane.xlu0 %2647
        %v2649 = vsel %vm969, %v2347, 0.0
        %2650 = vadd.xlane.f32.xlu0 %v2649
        %v2651 = vpop.xlane.xlu0 %2650
        %v2652 = vsel %vm969, %v2348, 0.0
        %2653 = vadd.xlane.f32.xlu0 %v2652
        %v2654 = vpop.xlane.xlu0 %2653
        %v2655 = vsel %vm969, %v2349, 0.0
        %2656 = vadd.xlane.f32.xlu0 %v2655
        %v2657 = vpop.xlane.xlu0 %2656
        %v2658 = vsel %vm969, %v2350, 0.0
        %2659 = vadd.xlane.f32.xlu0 %v2658
        %v2660 = vpop.xlane.xlu0 %2659
        %v2661 = vsel %vm969, %v2351, 0.0
        %2662 = vadd.xlane.f32.xlu0 %v2661
        %v2663 = vpop.xlane.xlu0 %2662
        %v2664 = vsel %vm969, %v2352, 0.0
        %2665 = vadd.xlane.f32.xlu0 %v2664
        %v2666 = vpop.xlane.xlu0 %2665
        %v2667 = vsel %vm969, %v2353, 0.0
        %2668 = vadd.xlane.f32.xlu0 %v2667
        %v2669 = vpop.xlane.xlu0 %2668
        %v2670 = vsel %vm969, %v2354, 0.0
        %2671 = vadd.xlane.f32.xlu0 %v2670
        %v2672 = vpop.xlane.xlu0 %2671
        %v2673 = vsel %vm969, %v2355, 0.0
        %2674 = vadd.xlane.f32.xlu0 %v2673
        %v2675 = vpop.xlane.xlu0 %2674
        %v2676 = vsel %vm969, %v2356, 0.0
        %2677 = vadd.xlane.f32.xlu0 %v2676
        %v2678 = vpop.xlane.xlu0 %2677
        %v2679 = vsel %vm969, %v2357, 0.0
        %2680 = vadd.xlane.f32.xlu0 %v2679
        %v2681 = vpop.xlane.xlu0 %2680
        %v2682 = vsel %vm969, %v2358, 0.0
        %2683 = vadd.xlane.f32.xlu0 %v2682
        %v2684 = vpop.xlane.xlu0 %2683
        %v2685 = vsel %vm969, %v2359, 0.0
        %2686 = vadd.xlane.f32.xlu0 %v2685
        %v2687 = vpop.xlane.xlu0 %2686
        %v2688 = vsel %vm969, %v2360, 0.0
        %2689 = vadd.xlane.f32.xlu0 %v2688
        %v2690 = vpop.xlane.xlu0 %2689
        %v2691 = vsel %vm969, %v2361, 0.0
        %2692 = vadd.xlane.f32.xlu0 %v2691
        %v2693 = vpop.xlane.xlu0 %2692
        %v2694 = vsel %vm969, %v2362, 0.0
        %2695 = vadd.xlane.f32.xlu0 %v2694
        %v2696 = vpop.xlane.xlu0 %2695
        %v2697 = vsel %vm969, %v2363, 0.0
        %2698 = vadd.xlane.f32.xlu0 %v2697
        %v2699 = vpop.xlane.xlu0 %2698
        %v2700 = vsel %vm969, %v2364, 0.0
        %2701 = vadd.xlane.f32.xlu0 %v2700
        %v2702 = vpop.xlane.xlu0 %2701
        %v2703 = vsel %vm969, %v2365, 0.0
        %2704 = vadd.xlane.f32.xlu0 %v2703
        %v2705 = vpop.xlane.xlu0 %2704
        %v2706 = vsel %vm969, %v2366, 0.0
        %2707 = vadd.xlane.f32.xlu0 %v2706
        %v2708 = vpop.xlane.xlu0 %2707
        %v2709 = vsel %vm969, %v2367, 0.0
        %2710 = vadd.xlane.f32.xlu0 %v2709
        %v2711 = vpop.xlane.xlu0 %2710
        %v2712 = vsel %vm969, %v2368, 0.0
        %2713 = vadd.xlane.f32.xlu0 %v2712
        %v2714 = vpop.xlane.xlu0 %2713
        %v2715 = vsel %vm969, %v2369, 0.0
        %2716 = vadd.xlane.f32.xlu0 %v2715
        %v2717 = vpop.xlane.xlu0 %2716
        %v2718 = vsel %vm969, %v2370, 0.0
        %2719 = vadd.xlane.f32.xlu0 %v2718
        %v2720 = vpop.xlane.xlu0 %2719
        %v2721 = vsel %vm969, %v2371, 0.0
        %2722 = vadd.xlane.f32.xlu0 %v2721
        %v2723 = vpop.xlane.xlu0 %2722
        %v2724 = vsel %vm969, %v2372, 0.0
        %2725 = vadd.xlane.f32.xlu0 %v2724
        %v2726 = vpop.xlane.xlu0 %2725
        %v2727 = vsel %vm969, %v2373, 0.0
        %2728 = vadd.xlane.f32.xlu0 %v2727
        %v2729 = vpop.xlane.xlu0 %2728
        %v2730 = vsel %vm969, %v2374, 0.0
        %2731 = vadd.xlane.f32.xlu0 %v2730
        %v2732 = vpop.xlane.xlu0 %2731
        %v2733 = vsel %vm969, %v2375, 0.0
        %2734 = vadd.xlane.f32.xlu0 %v2733
        %v2735 = vpop.xlane.xlu0 %2734
        %v2736 = vsel %vm969, %v2376, 0.0
        %2737 = vadd.xlane.f32.xlu0 %v2736
        %v2738 = vpop.xlane.xlu0 %2737
        %v2739 = vsel %vm969, %v2377, 0.0
        %2740 = vadd.xlane.f32.xlu0 %v2739
        %v2741 = vpop.xlane.xlu0 %2740
        %v2742 = vsel %vm969, %v2378, 0.0
        %2743 = vadd.xlane.f32.xlu0 %v2742
        %v2744 = vpop.xlane.xlu0 %2743
        %v2745 = vsel %vm969, %v2379, 0.0
        %2746 = vadd.xlane.f32.xlu0 %v2745
        %v2747 = vpop.xlane.xlu0 %2746
        %v2748 = vsel %vm969, %v2380, 0.0
        %2749 = vadd.xlane.f32.xlu0 %v2748
        %v2750 = vpop.xlane.xlu0 %2749
        %v2751 = vsel %vm969, %v2381, 0.0
        %2752 = vadd.xlane.f32.xlu0 %v2751
        %v2753 = vpop.xlane.xlu0 %2752
        %v2754 = vsel %vm969, %v2382, 0.0
        %2755 = vadd.xlane.f32.xlu0 %v2754
        %v2756 = vpop.xlane.xlu0 %2755
        %v2757 = vsel %vm969, %v2383, 0.0
        %2758 = vadd.xlane.f32.xlu0 %v2757
        %v2759 = vpop.xlane.xlu0 %2758
        %v2760 = vsel %vm969, %v2384, 0.0
        %2761 = vadd.xlane.f32.xlu0 %v2760
        %v2762 = vpop.xlane.xlu0 %2761
        %v2763 = vsel %vm969, %v2385, 0.0
        %2764 = vadd.xlane.f32.xlu0 %v2763
        %v2765 = vpop.xlane.xlu0 %2764
        %v2766 = vsel %vm969, %v2386, 0.0
        %2767 = vadd.xlane.f32.xlu0 %v2766
        %v2768 = vpop.xlane.xlu0 %2767
        %v2769 = vsel %vm969, %v2387, 0.0
        %2770 = vadd.xlane.f32.xlu0 %v2769
        %v2771 = vpop.xlane.xlu0 %2770
        %v2772 = vadd.f32 %v2129, 1e-05
        %v2773 = vadd.f32 %v2130, 1e-05
        %v2774 = vadd.f32 %v2131, 1e-05
        %v2775 = vadd.f32 %v2132, 1e-05
        %v2776 = vadd.f32 %v2133, 1e-05
        %v2777 = vadd.f32 %v2134, 1e-05
        %v2778 = vadd.f32 %v2135, 1e-05
        %v2779 = vadd.f32 %v2136, 1e-05
        %v2780 = vadd.f32 %v2137, 1e-05
        %v2781 = vadd.f32 %v2138, 1e-05
        %v2782 = vadd.f32 %v2139, 1e-05
        %v2783 = vadd.f32 %v2140, 1e-05
        %v2784 = vadd.f32 %v2141, 1e-05
        %v2785 = vadd.f32 %v2142, 1e-05
        %v2786 = vadd.f32 %v2143, 1e-05
        %v2787 = vadd.f32 %v2144, 1e-05
        %v2788 = vadd.f32 %v2145, 1e-05
        %v2789 = vadd.f32 %v2146, 1e-05
        %v2790 = vadd.f32 %v2147, 1e-05
        %v2791 = vadd.f32 %v2148, 1e-05
        %v2792 = vadd.f32 %v2149, 1e-05
        %v2793 = vadd.f32 %v2150, 1e-05
        %v2794 = vadd.f32 %v2151, 1e-05
        %v2795 = vadd.f32 %v2152, 1e-05
        %v2796 = vadd.f32 %v2153, 1e-05
        %v2797 = vadd.f32 %v2154, 1e-05
        %v2798 = vadd.f32 %v2155, 1e-05
        %v2799 = vadd.f32 %v2156, 1e-05
        %v2800 = vadd.f32 %v2157, 1e-05
        %v2801 = vadd.f32 %v2158, 1e-05
        %v2802 = vadd.f32 %v2159, 1e-05
        %v2803 = vadd.f32 %v2160, 1e-05
        %v2804 = vadd.f32 %v2161, 1e-05
        %v2805 = vadd.f32 %v2162, 1e-05
        %v2806 = vadd.f32 %v2163, 1e-05
        %v2807 = vadd.f32 %v2164, 1e-05
        %v2808 = vadd.f32 %v2165, 1e-05
        %v2809 = vadd.f32 %v2166, 1e-05
        %v2810 = vadd.f32 %v2167, 1e-05
        %v2811 = vadd.f32 %v2168, 1e-05
        %v2812 = vadd.f32 %v2169, 1e-05
        %v2813 = vadd.f32 %v2170, 1e-05
        %v2814 = vadd.f32 %v2171, 1e-05
        %v2815 = vadd.f32 %v2172, 1e-05
        %v2816 = vadd.f32 %v2173, 1e-05
        %v2817 = vadd.f32 %v2174, 1e-05
        %v2818 = vadd.f32 %v2175, 1e-05
        %v2819 = vadd.f32 %v2176, 1e-05
        %v2820 = vadd.f32 %v2177, 1e-05
        %v2821 = vadd.f32 %v2178, 1e-05
        %v2822 = vadd.f32 %v2179, 1e-05
        %v2823 = vadd.f32 %v2180, 1e-05
        %v2824 = vadd.f32 %v2181, 1e-05
        %v2825 = vadd.f32 %v2182, 1e-05
        %v2826 = vadd.f32 %v2183, 1e-05
        %v2827 = vadd.f32 %v2184, 1e-05
        %v2828 = vadd.f32 %v2185, 1e-05
        %v2829 = vadd.f32 %v2186, 1e-05
        %v2830 = vadd.f32 %v2187, 1e-05
        %v2831 = vadd.f32 %v2188, 1e-05
        %v2832 = vadd.f32 %v2189, 1e-05
        %v2833 = vadd.f32 %v2190, 1e-05
        %v2834 = vadd.f32 %v2191, 1e-05
        %v2835 = vadd.f32 %v2192, 1e-05
        %v2836 = vadd.f32 %v2193, 1e-05
        %v2837 = vadd.f32 %v2194, 1e-05
        %v2838 = vadd.f32 %v2195, 1e-05
        %v2839 = vadd.f32 %v2196, 1e-05
        %v2840 = vadd.f32 %v2197, 1e-05
        %v2841 = vadd.f32 %v2198, 1e-05
        %v2842 = vadd.f32 %v2199, 1e-05
        %v2843 = vadd.f32 %v2200, 1e-05
        %v2844 = vadd.f32 %v2201, 1e-05
        %v2845 = vadd.f32 %v2202, 1e-05
        %v2846 = vadd.f32 %v2203, 1e-05
        %v2847 = vadd.f32 %v2204, 1e-05
        %v2848 = vadd.f32 %v2205, 1e-05
        %v2849 = vadd.f32 %v2206, 1e-05
        %v2850 = vadd.f32 %v2207, 1e-05
        %v2851 = vadd.f32 %v2208, 1e-05
        %v2852 = vadd.f32 %v2209, 1e-05
        %v2853 = vadd.f32 %v2210, 1e-05
        %v2854 = vadd.f32 %v2211, 1e-05
        %v2855 = vadd.f32 %v2212, 1e-05
        %v2856 = vadd.f32 %v2213, 1e-05
        %v2857 = vadd.f32 %v2214, 1e-05
        %v2858 = vadd.f32 %v2215, 1e-05
        %v2859 = vadd.f32 %v2216, 1e-05
        %v2860 = vadd.f32 %v2217, 1e-05
        %v2861 = vadd.f32 %v2218, 1e-05
        %v2862 = vadd.f32 %v2219, 1e-05
        %v2863 = vadd.f32 %v2220, 1e-05
        %v2864 = vadd.f32 %v2221, 1e-05
        %v2865 = vadd.f32 %v2222, 1e-05
        %v2866 = vadd.f32 %v2223, 1e-05
        %v2867 = vadd.f32 %v2224, 1e-05
        %v2868 = vadd.f32 %v2225, 1e-05
        %v2869 = vadd.f32 %v2226, 1e-05
        %v2870 = vadd.f32 %v2227, 1e-05
        %v2871 = vadd.f32 %v2228, 1e-05
        %v2872 = vadd.f32 %v2229, 1e-05
        %v2873 = vadd.f32 %v2230, 1e-05
        %v2874 = vadd.f32 %v2231, 1e-05
        %v2875 = vadd.f32 %v2232, 1e-05
        %v2876 = vadd.f32 %v2233, 1e-05
        %v2877 = vadd.f32 %v2234, 1e-05
        %v2878 = vadd.f32 %v2235, 1e-05
        %v2879 = vadd.f32 %v2236, 1e-05
        %v2880 = vadd.f32 %v2237, 1e-05
        %v2881 = vadd.f32 %v2238, 1e-05
        %v2882 = vadd.f32 %v2239, 1e-05
        %v2883 = vadd.f32 %v2240, 1e-05
        %v2884 = vadd.f32 %v2241, 1e-05
        %v2885 = vadd.f32 %v2242, 1e-05
        %v2886 = vadd.f32 %v2243, 1e-05
        %v2887 = vadd.f32 %v2244, 1e-05
        %v2888 = vadd.f32 %v2245, 1e-05
        %v2889 = vadd.f32 %v2246, 1e-05
        %v2890 = vadd.f32 %v2247, 1e-05
        %v2891 = vadd.f32 %v2248, 1e-05
        %v2892 = vadd.f32 %v2249, 1e-05
        %v2893 = vadd.f32 %v2250, 1e-05
        %v2894 = vadd.f32 %v2251, 1e-05
        %v2895 = vadd.f32 %v2252, 1e-05
        %v2896 = vadd.f32 %v2253, 1e-05
        %v2897 = vadd.f32 %v2254, 1e-05
        %v2898 = vadd.f32 %v2255, 1e-05
        %v2899 = vadd.f32 %v2256, 1e-05
        %v2900 = vrsqrt.pop %v2772
        %v2901 = vmul.f32 %v2900, %v2772
        %v2902 = vmul.f32 %v2901, %v2900
        %v2903 = vmul.f32 0.5, %v2902
        %v2904 = vsub.f32 1.5, %v2903
        %v2905 = vmul.f32 %v2900, %v2904
        %vm2906 = vweird.f32 %v2772
        %vm2907 = vweird.f32 %v2900
        %vm2908 = vmor %vm2906, %vm2907
        %v2909 = vsel %vm2908, %v2900, %v2905
        %v2910 = vrsqrt.pop %v2773
        %v2911 = vmul.f32 %v2910, %v2773
        %v2912 = vmul.f32 %v2911, %v2910
        %v2913 = vmul.f32 0.5, %v2912
        %v2914 = vsub.f32 1.5, %v2913
        %v2915 = vmul.f32 %v2910, %v2914
        %vm2916 = vweird.f32 %v2773
        %vm2917 = vweird.f32 %v2910
        %vm2918 = vmor %vm2916, %vm2917
        %v2919 = vsel %vm2918, %v2910, %v2915
        %v2920 = vrsqrt.pop %v2774
        %v2921 = vmul.f32 %v2920, %v2774
        %v2922 = vmul.f32 %v2921, %v2920
        %v2923 = vmul.f32 0.5, %v2922
        %v2924 = vsub.f32 1.5, %v2923
        %v2925 = vmul.f32 %v2920, %v2924
        %vm2926 = vweird.f32 %v2774
        %vm2927 = vweird.f32 %v2920
        %vm2928 = vmor %vm2926, %vm2927
        %v2929 = vsel %vm2928, %v2920, %v2925
        %v2930 = vrsqrt.pop %v2775
        %v2931 = vmul.f32 %v2930, %v2775
        %v2932 = vmul.f32 %v2931, %v2930
        %v2933 = vmul.f32 0.5, %v2932
        %v2934 = vsub.f32 1.5, %v2933
        %v2935 = vmul.f32 %v2930, %v2934
        %vm2936 = vweird.f32 %v2775
        %vm2937 = vweird.f32 %v2930
        %vm2938 = vmor %vm2936, %vm2937
        %v2939 = vsel %vm2938, %v2930, %v2935
        %v2940 = vrsqrt.pop %v2776
        %v2941 = vmul.f32 %v2940, %v2776
        %v2942 = vmul.f32 %v2941, %v2940
        %v2943 = vmul.f32 0.5, %v2942
        %v2944 = vsub.f32 1.5, %v2943
        %v2945 = vmul.f32 %v2940, %v2944
        %vm2946 = vweird.f32 %v2776
        %vm2947 = vweird.f32 %v2940
        %vm2948 = vmor %vm2946, %vm2947
        %v2949 = vsel %vm2948, %v2940, %v2945
        %v2950 = vrsqrt.pop %v2777
        %v2951 = vmul.f32 %v2950, %v2777
        %v2952 = vmul.f32 %v2951, %v2950
        %v2953 = vmul.f32 0.5, %v2952
        %v2954 = vsub.f32 1.5, %v2953
        %v2955 = vmul.f32 %v2950, %v2954
        %vm2956 = vweird.f32 %v2777
        %vm2957 = vweird.f32 %v2950
        %vm2958 = vmor %vm2956, %vm2957
        %v2959 = vsel %vm2958, %v2950, %v2955
        %v2960 = vrsqrt.pop %v2778
        %v2961 = vmul.f32 %v2960, %v2778
        %v2962 = vmul.f32 %v2961, %v2960
        %v2963 = vmul.f32 0.5, %v2962
        %v2964 = vsub.f32 1.5, %v2963
        %v2965 = vmul.f32 %v2960, %v2964
        %vm2966 = vweird.f32 %v2778
        %vm2967 = vweird.f32 %v2960
        %vm2968 = vmor %vm2966, %vm2967
        %v2969 = vsel %vm2968, %v2960, %v2965
        %v2970 = vrsqrt.pop %v2779
        %v2971 = vmul.f32 %v2970, %v2779
        %v2972 = vmul.f32 %v2971, %v2970
        %v2973 = vmul.f32 0.5, %v2972
        %v2974 = vsub.f32 1.5, %v2973
        %v2975 = vmul.f32 %v2970, %v2974
        %vm2976 = vweird.f32 %v2779
        %vm2977 = vweird.f32 %v2970
        %vm2978 = vmor %vm2976, %vm2977
        %v2979 = vsel %vm2978, %v2970, %v2975
        %v2980 = vrsqrt.pop %v2780
        %v2981 = vmul.f32 %v2980, %v2780
        %v2982 = vmul.f32 %v2981, %v2980
        %v2983 = vmul.f32 0.5, %v2982
        %v2984 = vsub.f32 1.5, %v2983
        %v2985 = vmul.f32 %v2980, %v2984
        %vm2986 = vweird.f32 %v2780
        %vm2987 = vweird.f32 %v2980
        %vm2988 = vmor %vm2986, %vm2987
        %v2989 = vsel %vm2988, %v2980, %v2985
        %v2990 = vrsqrt.pop %v2781
        %v2991 = vmul.f32 %v2990, %v2781
        %v2992 = vmul.f32 %v2991, %v2990
        %v2993 = vmul.f32 0.5, %v2992
        %v2994 = vsub.f32 1.5, %v2993
        %v2995 = vmul.f32 %v2990, %v2994
        %vm2996 = vweird.f32 %v2781
        %vm2997 = vweird.f32 %v2990
        %vm2998 = vmor %vm2996, %vm2997
        %v2999 = vsel %vm2998, %v2990, %v2995
        %v3000 = vrsqrt.pop %v2782
        %v3001 = vmul.f32 %v3000, %v2782
        %v3002 = vmul.f32 %v3001, %v3000
        %v3003 = vmul.f32 0.5, %v3002
        %v3004 = vsub.f32 1.5, %v3003
        %v3005 = vmul.f32 %v3000, %v3004
        %vm3006 = vweird.f32 %v2782
        %vm3007 = vweird.f32 %v3000
        %vm3008 = vmor %vm3006, %vm3007
        %v3009 = vsel %vm3008, %v3000, %v3005
        %v3010 = vrsqrt.pop %v2783
        %v3011 = vmul.f32 %v3010, %v2783
        %v3012 = vmul.f32 %v3011, %v3010
        %v3013 = vmul.f32 0.5, %v3012
        %v3014 = vsub.f32 1.5, %v3013
        %v3015 = vmul.f32 %v3010, %v3014
        %vm3016 = vweird.f32 %v2783
        %vm3017 = vweird.f32 %v3010
        %vm3018 = vmor %vm3016, %vm3017
        %v3019 = vsel %vm3018, %v3010, %v3015
        %v3020 = vrsqrt.pop %v2784
        %v3021 = vmul.f32 %v3020, %v2784
        %v3022 = vmul.f32 %v3021, %v3020
        %v3023 = vmul.f32 0.5, %v3022
        %v3024 = vsub.f32 1.5, %v3023
        %v3025 = vmul.f32 %v3020, %v3024
        %vm3026 = vweird.f32 %v2784
        %vm3027 = vweird.f32 %v3020
        %vm3028 = vmor %vm3026, %vm3027
        %v3029 = vsel %vm3028, %v3020, %v3025
        %v3030 = vrsqrt.pop %v2785
        %v3031 = vmul.f32 %v3030, %v2785
        %v3032 = vmul.f32 %v3031, %v3030
        %v3033 = vmul.f32 0.5, %v3032
        %v3034 = vsub.f32 1.5, %v3033
        %v3035 = vmul.f32 %v3030, %v3034
        %vm3036 = vweird.f32 %v2785
        %vm3037 = vweird.f32 %v3030
        %vm3038 = vmor %vm3036, %vm3037
        %v3039 = vsel %vm3038, %v3030, %v3035
        %v3040 = vrsqrt.pop %v2786
        %v3041 = vmul.f32 %v3040, %v2786
        %v3042 = vmul.f32 %v3041, %v3040
        %v3043 = vmul.f32 0.5, %v3042
        %v3044 = vsub.f32 1.5, %v3043
        %v3045 = vmul.f32 %v3040, %v3044
        %vm3046 = vweird.f32 %v2786
        %vm3047 = vweird.f32 %v3040
        %vm3048 = vmor %vm3046, %vm3047
        %v3049 = vsel %vm3048, %v3040, %v3045
        %v3050 = vrsqrt.pop %v2787
        %v3051 = vmul.f32 %v3050, %v2787
        %v3052 = vmul.f32 %v3051, %v3050
        %v3053 = vmul.f32 0.5, %v3052
        %v3054 = vsub.f32 1.5, %v3053
        %v3055 = vmul.f32 %v3050, %v3054
        %vm3056 = vweird.f32 %v2787
        %vm3057 = vweird.f32 %v3050
        %vm3058 = vmor %vm3056, %vm3057
        %v3059 = vsel %vm3058, %v3050, %v3055
        %v3060 = vrsqrt.pop %v2788
        %v3061 = vmul.f32 %v3060, %v2788
        %v3062 = vmul.f32 %v3061, %v3060
        %v3063 = vmul.f32 0.5, %v3062
        %v3064 = vsub.f32 1.5, %v3063
        %v3065 = vmul.f32 %v3060, %v3064
        %vm3066 = vweird.f32 %v2788
        %vm3067 = vweird.f32 %v3060
        %vm3068 = vmor %vm3066, %vm3067
        %v3069 = vsel %vm3068, %v3060, %v3065
        %v3070 = vrsqrt.pop %v2789
        %v3071 = vmul.f32 %v3070, %v2789
        %v3072 = vmul.f32 %v3071, %v3070
        %v3073 = vmul.f32 0.5, %v3072
        %v3074 = vsub.f32 1.5, %v3073
        %v3075 = vmul.f32 %v3070, %v3074
        %vm3076 = vweird.f32 %v2789
        %vm3077 = vweird.f32 %v3070
        %vm3078 = vmor %vm3076, %vm3077
        %v3079 = vsel %vm3078, %v3070, %v3075
        %v3080 = vrsqrt.pop %v2790
        %v3081 = vmul.f32 %v3080, %v2790
        %v3082 = vmul.f32 %v3081, %v3080
        %v3083 = vmul.f32 0.5, %v3082
        %v3084 = vsub.f32 1.5, %v3083
        %v3085 = vmul.f32 %v3080, %v3084
        %vm3086 = vweird.f32 %v2790
        %vm3087 = vweird.f32 %v3080
        %vm3088 = vmor %vm3086, %vm3087
        %v3089 = vsel %vm3088, %v3080, %v3085
        %v3090 = vrsqrt.pop %v2791
        %v3091 = vmul.f32 %v3090, %v2791
        %v3092 = vmul.f32 %v3091, %v3090
        %v3093 = vmul.f32 0.5, %v3092
        %v3094 = vsub.f32 1.5, %v3093
        %v3095 = vmul.f32 %v3090, %v3094
        %vm3096 = vweird.f32 %v2791
        %vm3097 = vweird.f32 %v3090
        %vm3098 = vmor %vm3096, %vm3097
        %v3099 = vsel %vm3098, %v3090, %v3095
        %v3100 = vrsqrt.pop %v2792
        %v3101 = vmul.f32 %v3100, %v2792
        %v3102 = vmul.f32 %v3101, %v3100
        %v3103 = vmul.f32 0.5, %v3102
        %v3104 = vsub.f32 1.5, %v3103
        %v3105 = vmul.f32 %v3100, %v3104
        %vm3106 = vweird.f32 %v2792
        %vm3107 = vweird.f32 %v3100
        %vm3108 = vmor %vm3106, %vm3107
        %v3109 = vsel %vm3108, %v3100, %v3105
        %v3110 = vrsqrt.pop %v2793
        %v3111 = vmul.f32 %v3110, %v2793
        %v3112 = vmul.f32 %v3111, %v3110
        %v3113 = vmul.f32 0.5, %v3112
        %v3114 = vsub.f32 1.5, %v3113
        %v3115 = vmul.f32 %v3110, %v3114
        %vm3116 = vweird.f32 %v2793
        %vm3117 = vweird.f32 %v3110
        %vm3118 = vmor %vm3116, %vm3117
        %v3119 = vsel %vm3118, %v3110, %v3115
        %v3120 = vrsqrt.pop %v2794
        %v3121 = vmul.f32 %v3120, %v2794
        %v3122 = vmul.f32 %v3121, %v3120
        %v3123 = vmul.f32 0.5, %v3122
        %v3124 = vsub.f32 1.5, %v3123
        %v3125 = vmul.f32 %v3120, %v3124
        %vm3126 = vweird.f32 %v2794
        %vm3127 = vweird.f32 %v3120
        %vm3128 = vmor %vm3126, %vm3127
        %v3129 = vsel %vm3128, %v3120, %v3125
        %v3130 = vrsqrt.pop %v2795
        %v3131 = vmul.f32 %v3130, %v2795
        %v3132 = vmul.f32 %v3131, %v3130
        %v3133 = vmul.f32 0.5, %v3132
        %v3134 = vsub.f32 1.5, %v3133
        %v3135 = vmul.f32 %v3130, %v3134
        %vm3136 = vweird.f32 %v2795
        %vm3137 = vweird.f32 %v3130
        %vm3138 = vmor %vm3136, %vm3137
        %v3139 = vsel %vm3138, %v3130, %v3135
        %v3140 = vrsqrt.pop %v2796
        %v3141 = vmul.f32 %v3140, %v2796
        %v3142 = vmul.f32 %v3141, %v3140
        %v3143 = vmul.f32 0.5, %v3142
        %v3144 = vsub.f32 1.5, %v3143
        %v3145 = vmul.f32 %v3140, %v3144
        %vm3146 = vweird.f32 %v2796
        %vm3147 = vweird.f32 %v3140
        %vm3148 = vmor %vm3146, %vm3147
        %v3149 = vsel %vm3148, %v3140, %v3145
        %v3150 = vrsqrt.pop %v2797
        %v3151 = vmul.f32 %v3150, %v2797
        %v3152 = vmul.f32 %v3151, %v3150
        %v3153 = vmul.f32 0.5, %v3152
        %v3154 = vsub.f32 1.5, %v3153
        %v3155 = vmul.f32 %v3150, %v3154
        %vm3156 = vweird.f32 %v2797
        %vm3157 = vweird.f32 %v3150
        %vm3158 = vmor %vm3156, %vm3157
        %v3159 = vsel %vm3158, %v3150, %v3155
        %v3160 = vrsqrt.pop %v2798
        %v3161 = vmul.f32 %v3160, %v2798
        %v3162 = vmul.f32 %v3161, %v3160
        %v3163 = vmul.f32 0.5, %v3162
        %v3164 = vsub.f32 1.5, %v3163
        %v3165 = vmul.f32 %v3160, %v3164
        %vm3166 = vweird.f32 %v2798
        %vm3167 = vweird.f32 %v3160
        %vm3168 = vmor %vm3166, %vm3167
        %v3169 = vsel %vm3168, %v3160, %v3165
        %v3170 = vrsqrt.pop %v2799
        %v3171 = vmul.f32 %v3170, %v2799
        %v3172 = vmul.f32 %v3171, %v3170
        %v3173 = vmul.f32 0.5, %v3172
        %v3174 = vsub.f32 1.5, %v3173
        %v3175 = vmul.f32 %v3170, %v3174
        %vm3176 = vweird.f32 %v2799
        %vm3177 = vweird.f32 %v3170
        %vm3178 = vmor %vm3176, %vm3177
        %v3179 = vsel %vm3178, %v3170, %v3175
        %v3180 = vrsqrt.pop %v2800
        %v3181 = vmul.f32 %v3180, %v2800
        %v3182 = vmul.f32 %v3181, %v3180
        %v3183 = vmul.f32 0.5, %v3182
        %v3184 = vsub.f32 1.5, %v3183
        %v3185 = vmul.f32 %v3180, %v3184
        %vm3186 = vweird.f32 %v2800
        %vm3187 = vweird.f32 %v3180
        %vm3188 = vmor %vm3186, %vm3187
        %v3189 = vsel %vm3188, %v3180, %v3185
        %v3190 = vrsqrt.pop %v2801
        %v3191 = vmul.f32 %v3190, %v2801
        %v3192 = vmul.f32 %v3191, %v3190
        %v3193 = vmul.f32 0.5, %v3192
        %v3194 = vsub.f32 1.5, %v3193
        %v3195 = vmul.f32 %v3190, %v3194
        %vm3196 = vweird.f32 %v2801
        %vm3197 = vweird.f32 %v3190
        %vm3198 = vmor %vm3196, %vm3197
        %v3199 = vsel %vm3198, %v3190, %v3195
        %v3200 = vrsqrt.pop %v2802
        %v3201 = vmul.f32 %v3200, %v2802
        %v3202 = vmul.f32 %v3201, %v3200
        %v3203 = vmul.f32 0.5, %v3202
        %v3204 = vsub.f32 1.5, %v3203
        %v3205 = vmul.f32 %v3200, %v3204
        %vm3206 = vweird.f32 %v2802
        %vm3207 = vweird.f32 %v3200
        %vm3208 = vmor %vm3206, %vm3207
        %v3209 = vsel %vm3208, %v3200, %v3205
        %v3210 = vrsqrt.pop %v2803
        %v3211 = vmul.f32 %v3210, %v2803
        %v3212 = vmul.f32 %v3211, %v3210
        %v3213 = vmul.f32 0.5, %v3212
        %v3214 = vsub.f32 1.5, %v3213
        %v3215 = vmul.f32 %v3210, %v3214
        %vm3216 = vweird.f32 %v2803
        %vm3217 = vweird.f32 %v3210
        %vm3218 = vmor %vm3216, %vm3217
        %v3219 = vsel %vm3218, %v3210, %v3215
        %v3220 = vrsqrt.pop %v2804
        %v3221 = vmul.f32 %v3220, %v2804
        %v3222 = vmul.f32 %v3221, %v3220
        %v3223 = vmul.f32 0.5, %v3222
        %v3224 = vsub.f32 1.5, %v3223
        %v3225 = vmul.f32 %v3220, %v3224
        %vm3226 = vweird.f32 %v2804
        %vm3227 = vweird.f32 %v3220
        %vm3228 = vmor %vm3226, %vm3227
        %v3229 = vsel %vm3228, %v3220, %v3225
        %v3230 = vrsqrt.pop %v2805
        %v3231 = vmul.f32 %v3230, %v2805
        %v3232 = vmul.f32 %v3231, %v3230
        %v3233 = vmul.f32 0.5, %v3232
        %v3234 = vsub.f32 1.5, %v3233
        %v3235 = vmul.f32 %v3230, %v3234
        %vm3236 = vweird.f32 %v2805
        %vm3237 = vweird.f32 %v3230
        %vm3238 = vmor %vm3236, %vm3237
        %v3239 = vsel %vm3238, %v3230, %v3235
        %v3240 = vrsqrt.pop %v2806
        %v3241 = vmul.f32 %v3240, %v2806
        %v3242 = vmul.f32 %v3241, %v3240
        %v3243 = vmul.f32 0.5, %v3242
        %v3244 = vsub.f32 1.5, %v3243
        %v3245 = vmul.f32 %v3240, %v3244
        %vm3246 = vweird.f32 %v2806
        %vm3247 = vweird.f32 %v3240
        %vm3248 = vmor %vm3246, %vm3247
        %v3249 = vsel %vm3248, %v3240, %v3245
        %v3250 = vrsqrt.pop %v2807
        %v3251 = vmul.f32 %v3250, %v2807
        %v3252 = vmul.f32 %v3251, %v3250
        %v3253 = vmul.f32 0.5, %v3252
        %v3254 = vsub.f32 1.5, %v3253
        %v3255 = vmul.f32 %v3250, %v3254
        %vm3256 = vweird.f32 %v2807
        %vm3257 = vweird.f32 %v3250
        %vm3258 = vmor %vm3256, %vm3257
        %v3259 = vsel %vm3258, %v3250, %v3255
        %v3260 = vrsqrt.pop %v2808
        %v3261 = vmul.f32 %v3260, %v2808
        %v3262 = vmul.f32 %v3261, %v3260
        %v3263 = vmul.f32 0.5, %v3262
        %v3264 = vsub.f32 1.5, %v3263
        %v3265 = vmul.f32 %v3260, %v3264
        %vm3266 = vweird.f32 %v2808
        %vm3267 = vweird.f32 %v3260
        %vm3268 = vmor %vm3266, %vm3267
        %v3269 = vsel %vm3268, %v3260, %v3265
        %v3270 = vrsqrt.pop %v2809
        %v3271 = vmul.f32 %v3270, %v2809
        %v3272 = vmul.f32 %v3271, %v3270
        %v3273 = vmul.f32 0.5, %v3272
        %v3274 = vsub.f32 1.5, %v3273
        %v3275 = vmul.f32 %v3270, %v3274
        %vm3276 = vweird.f32 %v2809
        %vm3277 = vweird.f32 %v3270
        %vm3278 = vmor %vm3276, %vm3277
        %v3279 = vsel %vm3278, %v3270, %v3275
        %v3280 = vrsqrt.pop %v2810
        %v3281 = vmul.f32 %v3280, %v2810
        %v3282 = vmul.f32 %v3281, %v3280
        %v3283 = vmul.f32 0.5, %v3282
        %v3284 = vsub.f32 1.5, %v3283
        %v3285 = vmul.f32 %v3280, %v3284
        %vm3286 = vweird.f32 %v2810
        %vm3287 = vweird.f32 %v3280
        %vm3288 = vmor %vm3286, %vm3287
        %v3289 = vsel %vm3288, %v3280, %v3285
        %v3290 = vrsqrt.pop %v2811
        %v3291 = vmul.f32 %v3290, %v2811
        %v3292 = vmul.f32 %v3291, %v3290
        %v3293 = vmul.f32 0.5, %v3292
        %v3294 = vsub.f32 1.5, %v3293
        %v3295 = vmul.f32 %v3290, %v3294
        %vm3296 = vweird.f32 %v2811
        %vm3297 = vweird.f32 %v3290
        %vm3298 = vmor %vm3296, %vm3297
        %v3299 = vsel %vm3298, %v3290, %v3295
        %v3300 = vrsqrt.pop %v2812
        %v3301 = vmul.f32 %v3300, %v2812
        %v3302 = vmul.f32 %v3301, %v3300
        %v3303 = vmul.f32 0.5, %v3302
        %v3304 = vsub.f32 1.5, %v3303
        %v3305 = vmul.f32 %v3300, %v3304
        %vm3306 = vweird.f32 %v2812
        %vm3307 = vweird.f32 %v3300
        %vm3308 = vmor %vm3306, %vm3307
        %v3309 = vsel %vm3308, %v3300, %v3305
        %v3310 = vrsqrt.pop %v2813
        %v3311 = vmul.f32 %v3310, %v2813
        %v3312 = vmul.f32 %v3311, %v3310
        %v3313 = vmul.f32 0.5, %v3312
        %v3314 = vsub.f32 1.5, %v3313
        %v3315 = vmul.f32 %v3310, %v3314
        %vm3316 = vweird.f32 %v2813
        %vm3317 = vweird.f32 %v3310
        %vm3318 = vmor %vm3316, %vm3317
        %v3319 = vsel %vm3318, %v3310, %v3315
        %v3320 = vrsqrt.pop %v2814
        %v3321 = vmul.f32 %v3320, %v2814
        %v3322 = vmul.f32 %v3321, %v3320
        %v3323 = vmul.f32 0.5, %v3322
        %v3324 = vsub.f32 1.5, %v3323
        %v3325 = vmul.f32 %v3320, %v3324
        %vm3326 = vweird.f32 %v2814
        %vm3327 = vweird.f32 %v3320
        %vm3328 = vmor %vm3326, %vm3327
        %v3329 = vsel %vm3328, %v3320, %v3325
        %v3330 = vrsqrt.pop %v2815
        %v3331 = vmul.f32 %v3330, %v2815
        %v3332 = vmul.f32 %v3331, %v3330
        %v3333 = vmul.f32 0.5, %v3332
        %v3334 = vsub.f32 1.5, %v3333
        %v3335 = vmul.f32 %v3330, %v3334
        %vm3336 = vweird.f32 %v2815
        %vm3337 = vweird.f32 %v3330
        %vm3338 = vmor %vm3336, %vm3337
        %v3339 = vsel %vm3338, %v3330, %v3335
        %v3340 = vrsqrt.pop %v2816
        %v3341 = vmul.f32 %v3340, %v2816
        %v3342 = vmul.f32 %v3341, %v3340
        %v3343 = vmul.f32 0.5, %v3342
        %v3344 = vsub.f32 1.5, %v3343
        %v3345 = vmul.f32 %v3340, %v3344
        %vm3346 = vweird.f32 %v2816
        %vm3347 = vweird.f32 %v3340
        %vm3348 = vmor %vm3346, %vm3347
        %v3349 = vsel %vm3348, %v3340, %v3345
        %v3350 = vrsqrt.pop %v2817
        %v3351 = vmul.f32 %v3350, %v2817
        %v3352 = vmul.f32 %v3351, %v3350
        %v3353 = vmul.f32 0.5, %v3352
        %v3354 = vsub.f32 1.5, %v3353
        %v3355 = vmul.f32 %v3350, %v3354
        %vm3356 = vweird.f32 %v2817
        %vm3357 = vweird.f32 %v3350
        %vm3358 = vmor %vm3356, %vm3357
        %v3359 = vsel %vm3358, %v3350, %v3355
        %v3360 = vrsqrt.pop %v2818
        %v3361 = vmul.f32 %v3360, %v2818
        %v3362 = vmul.f32 %v3361, %v3360
        %v3363 = vmul.f32 0.5, %v3362
        %v3364 = vsub.f32 1.5, %v3363
        %v3365 = vmul.f32 %v3360, %v3364
        %vm3366 = vweird.f32 %v2818
        %vm3367 = vweird.f32 %v3360
        %vm3368 = vmor %vm3366, %vm3367
        %v3369 = vsel %vm3368, %v3360, %v3365
        %v3370 = vrsqrt.pop %v2819
        %v3371 = vmul.f32 %v3370, %v2819
        %v3372 = vmul.f32 %v3371, %v3370
        %v3373 = vmul.f32 0.5, %v3372
        %v3374 = vsub.f32 1.5, %v3373
        %v3375 = vmul.f32 %v3370, %v3374
        %vm3376 = vweird.f32 %v2819
        %vm3377 = vweird.f32 %v3370
        %vm3378 = vmor %vm3376, %vm3377
        %v3379 = vsel %vm3378, %v3370, %v3375
        %v3380 = vrsqrt.pop %v2820
        %v3381 = vmul.f32 %v3380, %v2820
        %v3382 = vmul.f32 %v3381, %v3380
        %v3383 = vmul.f32 0.5, %v3382
        %v3384 = vsub.f32 1.5, %v3383
        %v3385 = vmul.f32 %v3380, %v3384
        %vm3386 = vweird.f32 %v2820
        %vm3387 = vweird.f32 %v3380
        %vm3388 = vmor %vm3386, %vm3387
        %v3389 = vsel %vm3388, %v3380, %v3385
        %v3390 = vrsqrt.pop %v2821
        %v3391 = vmul.f32 %v3390, %v2821
        %v3392 = vmul.f32 %v3391, %v3390
        %v3393 = vmul.f32 0.5, %v3392
        %v3394 = vsub.f32 1.5, %v3393
        %v3395 = vmul.f32 %v3390, %v3394
        %vm3396 = vweird.f32 %v2821
        %vm3397 = vweird.f32 %v3390
        %vm3398 = vmor %vm3396, %vm3397
        %v3399 = vsel %vm3398, %v3390, %v3395
        %v3400 = vrsqrt.pop %v2822
        %v3401 = vmul.f32 %v3400, %v2822
        %v3402 = vmul.f32 %v3401, %v3400
        %v3403 = vmul.f32 0.5, %v3402
        %v3404 = vsub.f32 1.5, %v3403
        %v3405 = vmul.f32 %v3400, %v3404
        %vm3406 = vweird.f32 %v2822
        %vm3407 = vweird.f32 %v3400
        %vm3408 = vmor %vm3406, %vm3407
        %v3409 = vsel %vm3408, %v3400, %v3405
        %v3410 = vrsqrt.pop %v2823
        %v3411 = vmul.f32 %v3410, %v2823
        %v3412 = vmul.f32 %v3411, %v3410
        %v3413 = vmul.f32 0.5, %v3412
        %v3414 = vsub.f32 1.5, %v3413
        %v3415 = vmul.f32 %v3410, %v3414
        %vm3416 = vweird.f32 %v2823
        %vm3417 = vweird.f32 %v3410
        %vm3418 = vmor %vm3416, %vm3417
        %v3419 = vsel %vm3418, %v3410, %v3415
        %v3420 = vrsqrt.pop %v2824
        %v3421 = vmul.f32 %v3420, %v2824
        %v3422 = vmul.f32 %v3421, %v3420
        %v3423 = vmul.f32 0.5, %v3422
        %v3424 = vsub.f32 1.5, %v3423
        %v3425 = vmul.f32 %v3420, %v3424
        %vm3426 = vweird.f32 %v2824
        %vm3427 = vweird.f32 %v3420
        %vm3428 = vmor %vm3426, %vm3427
        %v3429 = vsel %vm3428, %v3420, %v3425
        %v3430 = vrsqrt.pop %v2825
        %v3431 = vmul.f32 %v3430, %v2825
        %v3432 = vmul.f32 %v3431, %v3430
        %v3433 = vmul.f32 0.5, %v3432
        %v3434 = vsub.f32 1.5, %v3433
        %v3435 = vmul.f32 %v3430, %v3434
        %vm3436 = vweird.f32 %v2825
        %vm3437 = vweird.f32 %v3430
        %vm3438 = vmor %vm3436, %vm3437
        %v3439 = vsel %vm3438, %v3430, %v3435
        %v3440 = vrsqrt.pop %v2826
        %v3441 = vmul.f32 %v3440, %v2826
        %v3442 = vmul.f32 %v3441, %v3440
        %v3443 = vmul.f32 0.5, %v3442
        %v3444 = vsub.f32 1.5, %v3443
        %v3445 = vmul.f32 %v3440, %v3444
        %vm3446 = vweird.f32 %v2826
        %vm3447 = vweird.f32 %v3440
        %vm3448 = vmor %vm3446, %vm3447
        %v3449 = vsel %vm3448, %v3440, %v3445
        %v3450 = vrsqrt.pop %v2827
        %v3451 = vmul.f32 %v3450, %v2827
        %v3452 = vmul.f32 %v3451, %v3450
        %v3453 = vmul.f32 0.5, %v3452
        %v3454 = vsub.f32 1.5, %v3453
        %v3455 = vmul.f32 %v3450, %v3454
        %vm3456 = vweird.f32 %v2827
        %vm3457 = vweird.f32 %v3450
        %vm3458 = vmor %vm3456, %vm3457
        %v3459 = vsel %vm3458, %v3450, %v3455
        %v3460 = vrsqrt.pop %v2828
        %v3461 = vmul.f32 %v3460, %v2828
        %v3462 = vmul.f32 %v3461, %v3460
        %v3463 = vmul.f32 0.5, %v3462
        %v3464 = vsub.f32 1.5, %v3463
        %v3465 = vmul.f32 %v3460, %v3464
        %vm3466 = vweird.f32 %v2828
        %vm3467 = vweird.f32 %v3460
        %vm3468 = vmor %vm3466, %vm3467
        %v3469 = vsel %vm3468, %v3460, %v3465
        %v3470 = vrsqrt.pop %v2829
        %v3471 = vmul.f32 %v3470, %v2829
        %v3472 = vmul.f32 %v3471, %v3470
        %v3473 = vmul.f32 0.5, %v3472
        %v3474 = vsub.f32 1.5, %v3473
        %v3475 = vmul.f32 %v3470, %v3474
        %vm3476 = vweird.f32 %v2829
        %vm3477 = vweird.f32 %v3470
        %vm3478 = vmor %vm3476, %vm3477
        %v3479 = vsel %vm3478, %v3470, %v3475
        %v3480 = vrsqrt.pop %v2830
        %v3481 = vmul.f32 %v3480, %v2830
        %v3482 = vmul.f32 %v3481, %v3480
        %v3483 = vmul.f32 0.5, %v3482
        %v3484 = vsub.f32 1.5, %v3483
        %v3485 = vmul.f32 %v3480, %v3484
        %vm3486 = vweird.f32 %v2830
        %vm3487 = vweird.f32 %v3480
        %vm3488 = vmor %vm3486, %vm3487
        %v3489 = vsel %vm3488, %v3480, %v3485
        %v3490 = vrsqrt.pop %v2831
        %v3491 = vmul.f32 %v3490, %v2831
        %v3492 = vmul.f32 %v3491, %v3490
        %v3493 = vmul.f32 0.5, %v3492
        %v3494 = vsub.f32 1.5, %v3493
        %v3495 = vmul.f32 %v3490, %v3494
        %vm3496 = vweird.f32 %v2831
        %vm3497 = vweird.f32 %v3490
        %vm3498 = vmor %vm3496, %vm3497
        %v3499 = vsel %vm3498, %v3490, %v3495
        %v3500 = vrsqrt.pop %v2832
        %v3501 = vmul.f32 %v3500, %v2832
        %v3502 = vmul.f32 %v3501, %v3500
        %v3503 = vmul.f32 0.5, %v3502
        %v3504 = vsub.f32 1.5, %v3503
        %v3505 = vmul.f32 %v3500, %v3504
        %vm3506 = vweird.f32 %v2832
        %vm3507 = vweird.f32 %v3500
        %vm3508 = vmor %vm3506, %vm3507
        %v3509 = vsel %vm3508, %v3500, %v3505
        %v3510 = vrsqrt.pop %v2833
        %v3511 = vmul.f32 %v3510, %v2833
        %v3512 = vmul.f32 %v3511, %v3510
        %v3513 = vmul.f32 0.5, %v3512
        %v3514 = vsub.f32 1.5, %v3513
        %v3515 = vmul.f32 %v3510, %v3514
        %vm3516 = vweird.f32 %v2833
        %vm3517 = vweird.f32 %v3510
        %vm3518 = vmor %vm3516, %vm3517
        %v3519 = vsel %vm3518, %v3510, %v3515
        %v3520 = vrsqrt.pop %v2834
        %v3521 = vmul.f32 %v3520, %v2834
        %v3522 = vmul.f32 %v3521, %v3520
        %v3523 = vmul.f32 0.5, %v3522
        %v3524 = vsub.f32 1.5, %v3523
        %v3525 = vmul.f32 %v3520, %v3524
        %vm3526 = vweird.f32 %v2834
        %vm3527 = vweird.f32 %v3520
        %vm3528 = vmor %vm3526, %vm3527
        %v3529 = vsel %vm3528, %v3520, %v3525
        %v3530 = vrsqrt.pop %v2835
        %v3531 = vmul.f32 %v3530, %v2835
        %v3532 = vmul.f32 %v3531, %v3530
        %v3533 = vmul.f32 0.5, %v3532
        %v3534 = vsub.f32 1.5, %v3533
        %v3535 = vmul.f32 %v3530, %v3534
        %vm3536 = vweird.f32 %v2835
        %vm3537 = vweird.f32 %v3530
        %vm3538 = vmor %vm3536, %vm3537
        %v3539 = vsel %vm3538, %v3530, %v3535
        %v3540 = vrsqrt.pop %v2836
        %v3541 = vmul.f32 %v3540, %v2836
        %v3542 = vmul.f32 %v3541, %v3540
        %v3543 = vmul.f32 0.5, %v3542
        %v3544 = vsub.f32 1.5, %v3543
        %v3545 = vmul.f32 %v3540, %v3544
        %vm3546 = vweird.f32 %v2836
        %vm3547 = vweird.f32 %v3540
        %vm3548 = vmor %vm3546, %vm3547
        %v3549 = vsel %vm3548, %v3540, %v3545
        %v3550 = vrsqrt.pop %v2837
        %v3551 = vmul.f32 %v3550, %v2837
        %v3552 = vmul.f32 %v3551, %v3550
        %v3553 = vmul.f32 0.5, %v3552
        %v3554 = vsub.f32 1.5, %v3553
        %v3555 = vmul.f32 %v3550, %v3554
        %vm3556 = vweird.f32 %v2837
        %vm3557 = vweird.f32 %v3550
        %vm3558 = vmor %vm3556, %vm3557
        %v3559 = vsel %vm3558, %v3550, %v3555
        %v3560 = vrsqrt.pop %v2838
        %v3561 = vmul.f32 %v3560, %v2838
        %v3562 = vmul.f32 %v3561, %v3560
        %v3563 = vmul.f32 0.5, %v3562
        %v3564 = vsub.f32 1.5, %v3563
        %v3565 = vmul.f32 %v3560, %v3564
        %vm3566 = vweird.f32 %v2838
        %vm3567 = vweird.f32 %v3560
        %vm3568 = vmor %vm3566, %vm3567
        %v3569 = vsel %vm3568, %v3560, %v3565
        %v3570 = vrsqrt.pop %v2839
        %v3571 = vmul.f32 %v3570, %v2839
        %v3572 = vmul.f32 %v3571, %v3570
        %v3573 = vmul.f32 0.5, %v3572
        %v3574 = vsub.f32 1.5, %v3573
        %v3575 = vmul.f32 %v3570, %v3574
        %vm3576 = vweird.f32 %v2839
        %vm3577 = vweird.f32 %v3570
        %vm3578 = vmor %vm3576, %vm3577
        %v3579 = vsel %vm3578, %v3570, %v3575
        %v3580 = vrsqrt.pop %v2840
        %v3581 = vmul.f32 %v3580, %v2840
        %v3582 = vmul.f32 %v3581, %v3580
        %v3583 = vmul.f32 0.5, %v3582
        %v3584 = vsub.f32 1.5, %v3583
        %v3585 = vmul.f32 %v3580, %v3584
        %vm3586 = vweird.f32 %v2840
        %vm3587 = vweird.f32 %v3580
        %vm3588 = vmor %vm3586, %vm3587
        %v3589 = vsel %vm3588, %v3580, %v3585
        %v3590 = vrsqrt.pop %v2841
        %v3591 = vmul.f32 %v3590, %v2841
        %v3592 = vmul.f32 %v3591, %v3590
        %v3593 = vmul.f32 0.5, %v3592
        %v3594 = vsub.f32 1.5, %v3593
        %v3595 = vmul.f32 %v3590, %v3594
        %vm3596 = vweird.f32 %v2841
        %vm3597 = vweird.f32 %v3590
        %vm3598 = vmor %vm3596, %vm3597
        %v3599 = vsel %vm3598, %v3590, %v3595
        %v3600 = vrsqrt.pop %v2842
        %v3601 = vmul.f32 %v3600, %v2842
        %v3602 = vmul.f32 %v3601, %v3600
        %v3603 = vmul.f32 0.5, %v3602
        %v3604 = vsub.f32 1.5, %v3603
        %v3605 = vmul.f32 %v3600, %v3604
        %vm3606 = vweird.f32 %v2842
        %vm3607 = vweird.f32 %v3600
        %vm3608 = vmor %vm3606, %vm3607
        %v3609 = vsel %vm3608, %v3600, %v3605
        %v3610 = vrsqrt.pop %v2843
        %v3611 = vmul.f32 %v3610, %v2843
        %v3612 = vmul.f32 %v3611, %v3610
        %v3613 = vmul.f32 0.5, %v3612
        %v3614 = vsub.f32 1.5, %v3613
        %v3615 = vmul.f32 %v3610, %v3614
        %vm3616 = vweird.f32 %v2843
        %vm3617 = vweird.f32 %v3610
        %vm3618 = vmor %vm3616, %vm3617
        %v3619 = vsel %vm3618, %v3610, %v3615
        %v3620 = vrsqrt.pop %v2844
        %v3621 = vmul.f32 %v3620, %v2844
        %v3622 = vmul.f32 %v3621, %v3620
        %v3623 = vmul.f32 0.5, %v3622
        %v3624 = vsub.f32 1.5, %v3623
        %v3625 = vmul.f32 %v3620, %v3624
        %vm3626 = vweird.f32 %v2844
        %vm3627 = vweird.f32 %v3620
        %vm3628 = vmor %vm3626, %vm3627
        %v3629 = vsel %vm3628, %v3620, %v3625
        %v3630 = vrsqrt.pop %v2845
        %v3631 = vmul.f32 %v3630, %v2845
        %v3632 = vmul.f32 %v3631, %v3630
        %v3633 = vmul.f32 0.5, %v3632
        %v3634 = vsub.f32 1.5, %v3633
        %v3635 = vmul.f32 %v3630, %v3634
        %vm3636 = vweird.f32 %v2845
        %vm3637 = vweird.f32 %v3630
        %vm3638 = vmor %vm3636, %vm3637
        %v3639 = vsel %vm3638, %v3630, %v3635
        %v3640 = vrsqrt.pop %v2846
        %v3641 = vmul.f32 %v3640, %v2846
        %v3642 = vmul.f32 %v3641, %v3640
        %v3643 = vmul.f32 0.5, %v3642
        %v3644 = vsub.f32 1.5, %v3643
        %v3645 = vmul.f32 %v3640, %v3644
        %vm3646 = vweird.f32 %v2846
        %vm3647 = vweird.f32 %v3640
        %vm3648 = vmor %vm3646, %vm3647
        %v3649 = vsel %vm3648, %v3640, %v3645
        %v3650 = vrsqrt.pop %v2847
        %v3651 = vmul.f32 %v3650, %v2847
        %v3652 = vmul.f32 %v3651, %v3650
        %v3653 = vmul.f32 0.5, %v3652
        %v3654 = vsub.f32 1.5, %v3653
        %v3655 = vmul.f32 %v3650, %v3654
        %vm3656 = vweird.f32 %v2847
        %vm3657 = vweird.f32 %v3650
        %vm3658 = vmor %vm3656, %vm3657
        %v3659 = vsel %vm3658, %v3650, %v3655
        %v3660 = vrsqrt.pop %v2848
        %v3661 = vmul.f32 %v3660, %v2848
        %v3662 = vmul.f32 %v3661, %v3660
        %v3663 = vmul.f32 0.5, %v3662
        %v3664 = vsub.f32 1.5, %v3663
        %v3665 = vmul.f32 %v3660, %v3664
        %vm3666 = vweird.f32 %v2848
        %vm3667 = vweird.f32 %v3660
        %vm3668 = vmor %vm3666, %vm3667
        %v3669 = vsel %vm3668, %v3660, %v3665
        %v3670 = vrsqrt.pop %v2849
        %v3671 = vmul.f32 %v3670, %v2849
        %v3672 = vmul.f32 %v3671, %v3670
        %v3673 = vmul.f32 0.5, %v3672
        %v3674 = vsub.f32 1.5, %v3673
        %v3675 = vmul.f32 %v3670, %v3674
        %vm3676 = vweird.f32 %v2849
        %vm3677 = vweird.f32 %v3670
        %vm3678 = vmor %vm3676, %vm3677
        %v3679 = vsel %vm3678, %v3670, %v3675
        %v3680 = vrsqrt.pop %v2850
        %v3681 = vmul.f32 %v3680, %v2850
        %v3682 = vmul.f32 %v3681, %v3680
        %v3683 = vmul.f32 0.5, %v3682
        %v3684 = vsub.f32 1.5, %v3683
        %v3685 = vmul.f32 %v3680, %v3684
        %vm3686 = vweird.f32 %v2850
        %vm3687 = vweird.f32 %v3680
        %vm3688 = vmor %vm3686, %vm3687
        %v3689 = vsel %vm3688, %v3680, %v3685
        %v3690 = vrsqrt.pop %v2851
        %v3691 = vmul.f32 %v3690, %v2851
        %v3692 = vmul.f32 %v3691, %v3690
        %v3693 = vmul.f32 0.5, %v3692
        %v3694 = vsub.f32 1.5, %v3693
        %v3695 = vmul.f32 %v3690, %v3694
        %vm3696 = vweird.f32 %v2851
        %vm3697 = vweird.f32 %v3690
        %vm3698 = vmor %vm3696, %vm3697
        %v3699 = vsel %vm3698, %v3690, %v3695
        %v3700 = vrsqrt.pop %v2852
        %v3701 = vmul.f32 %v3700, %v2852
        %v3702 = vmul.f32 %v3701, %v3700
        %v3703 = vmul.f32 0.5, %v3702
        %v3704 = vsub.f32 1.5, %v3703
        %v3705 = vmul.f32 %v3700, %v3704
        %vm3706 = vweird.f32 %v2852
        %vm3707 = vweird.f32 %v3700
        %vm3708 = vmor %vm3706, %vm3707
        %v3709 = vsel %vm3708, %v3700, %v3705
        %v3710 = vrsqrt.pop %v2853
        %v3711 = vmul.f32 %v3710, %v2853
        %v3712 = vmul.f32 %v3711, %v3710
        %v3713 = vmul.f32 0.5, %v3712
        %v3714 = vsub.f32 1.5, %v3713
        %v3715 = vmul.f32 %v3710, %v3714
        %vm3716 = vweird.f32 %v2853
        %vm3717 = vweird.f32 %v3710
        %vm3718 = vmor %vm3716, %vm3717
        %v3719 = vsel %vm3718, %v3710, %v3715
        %v3720 = vrsqrt.pop %v2854
        %v3721 = vmul.f32 %v3720, %v2854
        %v3722 = vmul.f32 %v3721, %v3720
        %v3723 = vmul.f32 0.5, %v3722
        %v3724 = vsub.f32 1.5, %v3723
        %v3725 = vmul.f32 %v3720, %v3724
        %vm3726 = vweird.f32 %v2854
        %vm3727 = vweird.f32 %v3720
        %vm3728 = vmor %vm3726, %vm3727
        %v3729 = vsel %vm3728, %v3720, %v3725
        %v3730 = vrsqrt.pop %v2855
        %v3731 = vmul.f32 %v3730, %v2855
        %v3732 = vmul.f32 %v3731, %v3730
        %v3733 = vmul.f32 0.5, %v3732
        %v3734 = vsub.f32 1.5, %v3733
        %v3735 = vmul.f32 %v3730, %v3734
        %vm3736 = vweird.f32 %v2855
        %vm3737 = vweird.f32 %v3730
        %vm3738 = vmor %vm3736, %vm3737
        %v3739 = vsel %vm3738, %v3730, %v3735
        %v3740 = vrsqrt.pop %v2856
        %v3741 = vmul.f32 %v3740, %v2856
        %v3742 = vmul.f32 %v3741, %v3740
        %v3743 = vmul.f32 0.5, %v3742
        %v3744 = vsub.f32 1.5, %v3743
        %v3745 = vmul.f32 %v3740, %v3744
        %vm3746 = vweird.f32 %v2856
        %vm3747 = vweird.f32 %v3740
        %vm3748 = vmor %vm3746, %vm3747
        %v3749 = vsel %vm3748, %v3740, %v3745
        %v3750 = vrsqrt.pop %v2857
        %v3751 = vmul.f32 %v3750, %v2857
        %v3752 = vmul.f32 %v3751, %v3750
        %v3753 = vmul.f32 0.5, %v3752
        %v3754 = vsub.f32 1.5, %v3753
        %v3755 = vmul.f32 %v3750, %v3754
        %vm3756 = vweird.f32 %v2857
        %vm3757 = vweird.f32 %v3750
        %vm3758 = vmor %vm3756, %vm3757
        %v3759 = vsel %vm3758, %v3750, %v3755
        %v3760 = vrsqrt.pop %v2858
        %v3761 = vmul.f32 %v3760, %v2858
        %v3762 = vmul.f32 %v3761, %v3760
        %v3763 = vmul.f32 0.5, %v3762
        %v3764 = vsub.f32 1.5, %v3763
        %v3765 = vmul.f32 %v3760, %v3764
        %vm3766 = vweird.f32 %v2858
        %vm3767 = vweird.f32 %v3760
        %vm3768 = vmor %vm3766, %vm3767
        %v3769 = vsel %vm3768, %v3760, %v3765
        %v3770 = vrsqrt.pop %v2859
        %v3771 = vmul.f32 %v3770, %v2859
        %v3772 = vmul.f32 %v3771, %v3770
        %v3773 = vmul.f32 0.5, %v3772
        %v3774 = vsub.f32 1.5, %v3773
        %v3775 = vmul.f32 %v3770, %v3774
        %vm3776 = vweird.f32 %v2859
        %vm3777 = vweird.f32 %v3770
        %vm3778 = vmor %vm3776, %vm3777
        %v3779 = vsel %vm3778, %v3770, %v3775
        %v3780 = vrsqrt.pop %v2860
        %v3781 = vmul.f32 %v3780, %v2860
        %v3782 = vmul.f32 %v3781, %v3780
        %v3783 = vmul.f32 0.5, %v3782
        %v3784 = vsub.f32 1.5, %v3783
        %v3785 = vmul.f32 %v3780, %v3784
        %vm3786 = vweird.f32 %v2860
        %vm3787 = vweird.f32 %v3780
        %vm3788 = vmor %vm3786, %vm3787
        %v3789 = vsel %vm3788, %v3780, %v3785
        %v3790 = vrsqrt.pop %v2861
        %v3791 = vmul.f32 %v3790, %v2861
        %v3792 = vmul.f32 %v3791, %v3790
        %v3793 = vmul.f32 0.5, %v3792
        %v3794 = vsub.f32 1.5, %v3793
        %v3795 = vmul.f32 %v3790, %v3794
        %vm3796 = vweird.f32 %v2861
        %vm3797 = vweird.f32 %v3790
        %vm3798 = vmor %vm3796, %vm3797
        %v3799 = vsel %vm3798, %v3790, %v3795
        %v3800 = vrsqrt.pop %v2862
        %v3801 = vmul.f32 %v3800, %v2862
        %v3802 = vmul.f32 %v3801, %v3800
        %v3803 = vmul.f32 0.5, %v3802
        %v3804 = vsub.f32 1.5, %v3803
        %v3805 = vmul.f32 %v3800, %v3804
        %vm3806 = vweird.f32 %v2862
        %vm3807 = vweird.f32 %v3800
        %vm3808 = vmor %vm3806, %vm3807
        %v3809 = vsel %vm3808, %v3800, %v3805
        %v3810 = vrsqrt.pop %v2863
        %v3811 = vmul.f32 %v3810, %v2863
        %v3812 = vmul.f32 %v3811, %v3810
        %v3813 = vmul.f32 0.5, %v3812
        %v3814 = vsub.f32 1.5, %v3813
        %v3815 = vmul.f32 %v3810, %v3814
        %vm3816 = vweird.f32 %v2863
        %vm3817 = vweird.f32 %v3810
        %vm3818 = vmor %vm3816, %vm3817
        %v3819 = vsel %vm3818, %v3810, %v3815
        %v3820 = vrsqrt.pop %v2864
        %v3821 = vmul.f32 %v3820, %v2864
        %v3822 = vmul.f32 %v3821, %v3820
        %v3823 = vmul.f32 0.5, %v3822
        %v3824 = vsub.f32 1.5, %v3823
        %v3825 = vmul.f32 %v3820, %v3824
        %vm3826 = vweird.f32 %v2864
        %vm3827 = vweird.f32 %v3820
        %vm3828 = vmor %vm3826, %vm3827
        %v3829 = vsel %vm3828, %v3820, %v3825
        %v3830 = vrsqrt.pop %v2865
        %v3831 = vmul.f32 %v3830, %v2865
        %v3832 = vmul.f32 %v3831, %v3830
        %v3833 = vmul.f32 0.5, %v3832
        %v3834 = vsub.f32 1.5, %v3833
        %v3835 = vmul.f32 %v3830, %v3834
        %vm3836 = vweird.f32 %v2865
        %vm3837 = vweird.f32 %v3830
        %vm3838 = vmor %vm3836, %vm3837
        %v3839 = vsel %vm3838, %v3830, %v3835
        %v3840 = vrsqrt.pop %v2866
        %v3841 = vmul.f32 %v3840, %v2866
        %v3842 = vmul.f32 %v3841, %v3840
        %v3843 = vmul.f32 0.5, %v3842
        %v3844 = vsub.f32 1.5, %v3843
        %v3845 = vmul.f32 %v3840, %v3844
        %vm3846 = vweird.f32 %v2866
        %vm3847 = vweird.f32 %v3840
        %vm3848 = vmor %vm3846, %vm3847
        %v3849 = vsel %vm3848, %v3840, %v3845
        %v3850 = vrsqrt.pop %v2867
        %v3851 = vmul.f32 %v3850, %v2867
        %v3852 = vmul.f32 %v3851, %v3850
        %v3853 = vmul.f32 0.5, %v3852
        %v3854 = vsub.f32 1.5, %v3853
        %v3855 = vmul.f32 %v3850, %v3854
        %vm3856 = vweird.f32 %v2867
        %vm3857 = vweird.f32 %v3850
        %vm3858 = vmor %vm3856, %vm3857
        %v3859 = vsel %vm3858, %v3850, %v3855
        %v3860 = vrsqrt.pop %v2868
        %v3861 = vmul.f32 %v3860, %v2868
        %v3862 = vmul.f32 %v3861, %v3860
        %v3863 = vmul.f32 0.5, %v3862
        %v3864 = vsub.f32 1.5, %v3863
        %v3865 = vmul.f32 %v3860, %v3864
        %vm3866 = vweird.f32 %v2868
        %vm3867 = vweird.f32 %v3860
        %vm3868 = vmor %vm3866, %vm3867
        %v3869 = vsel %vm3868, %v3860, %v3865
        %v3870 = vrsqrt.pop %v2869
        %v3871 = vmul.f32 %v3870, %v2869
        %v3872 = vmul.f32 %v3871, %v3870
        %v3873 = vmul.f32 0.5, %v3872
        %v3874 = vsub.f32 1.5, %v3873
        %v3875 = vmul.f32 %v3870, %v3874
        %vm3876 = vweird.f32 %v2869
        %vm3877 = vweird.f32 %v3870
        %vm3878 = vmor %vm3876, %vm3877
        %v3879 = vsel %vm3878, %v3870, %v3875
        %v3880 = vrsqrt.pop %v2870
        %v3881 = vmul.f32 %v3880, %v2870
        %v3882 = vmul.f32 %v3881, %v3880
        %v3883 = vmul.f32 0.5, %v3882
        %v3884 = vsub.f32 1.5, %v3883
        %v3885 = vmul.f32 %v3880, %v3884
        %vm3886 = vweird.f32 %v2870
        %vm3887 = vweird.f32 %v3880
        %vm3888 = vmor %vm3886, %vm3887
        %v3889 = vsel %vm3888, %v3880, %v3885
        %v3890 = vrsqrt.pop %v2871
        %v3891 = vmul.f32 %v3890, %v2871
        %v3892 = vmul.f32 %v3891, %v3890
        %v3893 = vmul.f32 0.5, %v3892
        %v3894 = vsub.f32 1.5, %v3893
        %v3895 = vmul.f32 %v3890, %v3894
        %vm3896 = vweird.f32 %v2871
        %vm3897 = vweird.f32 %v3890
        %vm3898 = vmor %vm3896, %vm3897
        %v3899 = vsel %vm3898, %v3890, %v3895
        %v3900 = vrsqrt.pop %v2872
        %v3901 = vmul.f32 %v3900, %v2872
        %v3902 = vmul.f32 %v3901, %v3900
        %v3903 = vmul.f32 0.5, %v3902
        %v3904 = vsub.f32 1.5, %v3903
        %v3905 = vmul.f32 %v3900, %v3904
        %vm3906 = vweird.f32 %v2872
        %vm3907 = vweird.f32 %v3900
        %vm3908 = vmor %vm3906, %vm3907
        %v3909 = vsel %vm3908, %v3900, %v3905
        %v3910 = vrsqrt.pop %v2873
        %v3911 = vmul.f32 %v3910, %v2873
        %v3912 = vmul.f32 %v3911, %v3910
        %v3913 = vmul.f32 0.5, %v3912
        %v3914 = vsub.f32 1.5, %v3913
        %v3915 = vmul.f32 %v3910, %v3914
        %vm3916 = vweird.f32 %v2873
        %vm3917 = vweird.f32 %v3910
        %vm3918 = vmor %vm3916, %vm3917
        %v3919 = vsel %vm3918, %v3910, %v3915
        %v3920 = vrsqrt.pop %v2874
        %v3921 = vmul.f32 %v3920, %v2874
        %v3922 = vmul.f32 %v3921, %v3920
        %v3923 = vmul.f32 0.5, %v3922
        %v3924 = vsub.f32 1.5, %v3923
        %v3925 = vmul.f32 %v3920, %v3924
        %vm3926 = vweird.f32 %v2874
        %vm3927 = vweird.f32 %v3920
        %vm3928 = vmor %vm3926, %vm3927
        %v3929 = vsel %vm3928, %v3920, %v3925
        %v3930 = vrsqrt.pop %v2875
        %v3931 = vmul.f32 %v3930, %v2875
        %v3932 = vmul.f32 %v3931, %v3930
        %v3933 = vmul.f32 0.5, %v3932
        %v3934 = vsub.f32 1.5, %v3933
        %v3935 = vmul.f32 %v3930, %v3934
        %vm3936 = vweird.f32 %v2875
        %vm3937 = vweird.f32 %v3930
        %vm3938 = vmor %vm3936, %vm3937
        %v3939 = vsel %vm3938, %v3930, %v3935
        %v3940 = vrsqrt.pop %v2876
        %v3941 = vmul.f32 %v3940, %v2876
        %v3942 = vmul.f32 %v3941, %v3940
        %v3943 = vmul.f32 0.5, %v3942
        %v3944 = vsub.f32 1.5, %v3943
        %v3945 = vmul.f32 %v3940, %v3944
        %vm3946 = vweird.f32 %v2876
        %vm3947 = vweird.f32 %v3940
        %vm3948 = vmor %vm3946, %vm3947
        %v3949 = vsel %vm3948, %v3940, %v3945
        %v3950 = vrsqrt.pop %v2877
        %v3951 = vmul.f32 %v3950, %v2877
        %v3952 = vmul.f32 %v3951, %v3950
        %v3953 = vmul.f32 0.5, %v3952
        %v3954 = vsub.f32 1.5, %v3953
        %v3955 = vmul.f32 %v3950, %v3954
        %vm3956 = vweird.f32 %v2877
        %vm3957 = vweird.f32 %v3950
        %vm3958 = vmor %vm3956, %vm3957
        %v3959 = vsel %vm3958, %v3950, %v3955
        %v3960 = vrsqrt.pop %v2878
        %v3961 = vmul.f32 %v3960, %v2878
        %v3962 = vmul.f32 %v3961, %v3960
        %v3963 = vmul.f32 0.5, %v3962
        %v3964 = vsub.f32 1.5, %v3963
        %v3965 = vmul.f32 %v3960, %v3964
        %vm3966 = vweird.f32 %v2878
        %vm3967 = vweird.f32 %v3960
        %vm3968 = vmor %vm3966, %vm3967
        %v3969 = vsel %vm3968, %v3960, %v3965
        %v3970 = vrsqrt.pop %v2879
        %v3971 = vmul.f32 %v3970, %v2879
        %v3972 = vmul.f32 %v3971, %v3970
        %v3973 = vmul.f32 0.5, %v3972
        %v3974 = vsub.f32 1.5, %v3973
        %v3975 = vmul.f32 %v3970, %v3974
        %vm3976 = vweird.f32 %v2879
        %vm3977 = vweird.f32 %v3970
        %vm3978 = vmor %vm3976, %vm3977
        %v3979 = vsel %vm3978, %v3970, %v3975
        %v3980 = vrsqrt.pop %v2880
        %v3981 = vmul.f32 %v3980, %v2880
        %v3982 = vmul.f32 %v3981, %v3980
        %v3983 = vmul.f32 0.5, %v3982
        %v3984 = vsub.f32 1.5, %v3983
        %v3985 = vmul.f32 %v3980, %v3984
        %vm3986 = vweird.f32 %v2880
        %vm3987 = vweird.f32 %v3980
        %vm3988 = vmor %vm3986, %vm3987
        %v3989 = vsel %vm3988, %v3980, %v3985
        %v3990 = vrsqrt.pop %v2881
        %v3991 = vmul.f32 %v3990, %v2881
        %v3992 = vmul.f32 %v3991, %v3990
        %v3993 = vmul.f32 0.5, %v3992
        %v3994 = vsub.f32 1.5, %v3993
        %v3995 = vmul.f32 %v3990, %v3994
        %vm3996 = vweird.f32 %v2881
        %vm3997 = vweird.f32 %v3990
        %vm3998 = vmor %vm3996, %vm3997
        %v3999 = vsel %vm3998, %v3990, %v3995
        %v4000 = vrsqrt.pop %v2882
        %v4001 = vmul.f32 %v4000, %v2882
        %v4002 = vmul.f32 %v4001, %v4000
        %v4003 = vmul.f32 0.5, %v4002
        %v4004 = vsub.f32 1.5, %v4003
        %v4005 = vmul.f32 %v4000, %v4004
        %vm4006 = vweird.f32 %v2882
        %vm4007 = vweird.f32 %v4000
        %vm4008 = vmor %vm4006, %vm4007
        %v4009 = vsel %vm4008, %v4000, %v4005
        %v4010 = vrsqrt.pop %v2883
        %v4011 = vmul.f32 %v4010, %v2883
        %v4012 = vmul.f32 %v4011, %v4010
        %v4013 = vmul.f32 0.5, %v4012
        %v4014 = vsub.f32 1.5, %v4013
        %v4015 = vmul.f32 %v4010, %v4014
        %vm4016 = vweird.f32 %v2883
        %vm4017 = vweird.f32 %v4010
        %vm4018 = vmor %vm4016, %vm4017
        %v4019 = vsel %vm4018, %v4010, %v4015
        %v4020 = vrsqrt.pop %v2884
        %v4021 = vmul.f32 %v4020, %v2884
        %v4022 = vmul.f32 %v4021, %v4020
        %v4023 = vmul.f32 0.5, %v4022
        %v4024 = vsub.f32 1.5, %v4023
        %v4025 = vmul.f32 %v4020, %v4024
        %vm4026 = vweird.f32 %v2884
        %vm4027 = vweird.f32 %v4020
        %vm4028 = vmor %vm4026, %vm4027
        %v4029 = vsel %vm4028, %v4020, %v4025
        %v4030 = vrsqrt.pop %v2885
        %v4031 = vmul.f32 %v4030, %v2885
        %v4032 = vmul.f32 %v4031, %v4030
        %v4033 = vmul.f32 0.5, %v4032
        %v4034 = vsub.f32 1.5, %v4033
        %v4035 = vmul.f32 %v4030, %v4034
        %vm4036 = vweird.f32 %v2885
        %vm4037 = vweird.f32 %v4030
        %vm4038 = vmor %vm4036, %vm4037
        %v4039 = vsel %vm4038, %v4030, %v4035
        %v4040 = vrsqrt.pop %v2886
        %v4041 = vmul.f32 %v4040, %v2886
        %v4042 = vmul.f32 %v4041, %v4040
        %v4043 = vmul.f32 0.5, %v4042
        %v4044 = vsub.f32 1.5, %v4043
        %v4045 = vmul.f32 %v4040, %v4044
        %vm4046 = vweird.f32 %v2886
        %vm4047 = vweird.f32 %v4040
        %vm4048 = vmor %vm4046, %vm4047
        %v4049 = vsel %vm4048, %v4040, %v4045
        %v4050 = vrsqrt.pop %v2887
        %v4051 = vmul.f32 %v4050, %v2887
        %v4052 = vmul.f32 %v4051, %v4050
        %v4053 = vmul.f32 0.5, %v4052
        %v4054 = vsub.f32 1.5, %v4053
        %v4055 = vmul.f32 %v4050, %v4054
        %vm4056 = vweird.f32 %v2887
        %vm4057 = vweird.f32 %v4050
        %vm4058 = vmor %vm4056, %vm4057
        %v4059 = vsel %vm4058, %v4050, %v4055
        %v4060 = vrsqrt.pop %v2888
        %v4061 = vmul.f32 %v4060, %v2888
        %v4062 = vmul.f32 %v4061, %v4060
        %v4063 = vmul.f32 0.5, %v4062
        %v4064 = vsub.f32 1.5, %v4063
        %v4065 = vmul.f32 %v4060, %v4064
        %vm4066 = vweird.f32 %v2888
        %vm4067 = vweird.f32 %v4060
        %vm4068 = vmor %vm4066, %vm4067
        %v4069 = vsel %vm4068, %v4060, %v4065
        %v4070 = vrsqrt.pop %v2889
        %v4071 = vmul.f32 %v4070, %v2889
        %v4072 = vmul.f32 %v4071, %v4070
        %v4073 = vmul.f32 0.5, %v4072
        %v4074 = vsub.f32 1.5, %v4073
        %v4075 = vmul.f32 %v4070, %v4074
        %vm4076 = vweird.f32 %v2889
        %vm4077 = vweird.f32 %v4070
        %vm4078 = vmor %vm4076, %vm4077
        %v4079 = vsel %vm4078, %v4070, %v4075
        %v4080 = vrsqrt.pop %v2890
        %v4081 = vmul.f32 %v4080, %v2890
        %v4082 = vmul.f32 %v4081, %v4080
        %v4083 = vmul.f32 0.5, %v4082
        %v4084 = vsub.f32 1.5, %v4083
        %v4085 = vmul.f32 %v4080, %v4084
        %vm4086 = vweird.f32 %v2890
        %vm4087 = vweird.f32 %v4080
        %vm4088 = vmor %vm4086, %vm4087
        %v4089 = vsel %vm4088, %v4080, %v4085
        %v4090 = vrsqrt.pop %v2891
        %v4091 = vmul.f32 %v4090, %v2891
        %v4092 = vmul.f32 %v4091, %v4090
        %v4093 = vmul.f32 0.5, %v4092
        %v4094 = vsub.f32 1.5, %v4093
        %v4095 = vmul.f32 %v4090, %v4094
        %vm4096 = vweird.f32 %v2891
        %vm4097 = vweird.f32 %v4090
        %vm4098 = vmor %vm4096, %vm4097
        %v4099 = vsel %vm4098, %v4090, %v4095
        %v4100 = vrsqrt.pop %v2892
        %v4101 = vmul.f32 %v4100, %v2892
        %v4102 = vmul.f32 %v4101, %v4100
        %v4103 = vmul.f32 0.5, %v4102
        %v4104 = vsub.f32 1.5, %v4103
        %v4105 = vmul.f32 %v4100, %v4104
        %vm4106 = vweird.f32 %v2892
        %vm4107 = vweird.f32 %v4100
        %vm4108 = vmor %vm4106, %vm4107
        %v4109 = vsel %vm4108, %v4100, %v4105
        %v4110 = vrsqrt.pop %v2893
        %v4111 = vmul.f32 %v4110, %v2893
        %v4112 = vmul.f32 %v4111, %v4110
        %v4113 = vmul.f32 0.5, %v4112
        %v4114 = vsub.f32 1.5, %v4113
        %v4115 = vmul.f32 %v4110, %v4114
        %vm4116 = vweird.f32 %v2893
        %vm4117 = vweird.f32 %v4110
        %vm4118 = vmor %vm4116, %vm4117
        %v4119 = vsel %vm4118, %v4110, %v4115
        %v4120 = vrsqrt.pop %v2894
        %v4121 = vmul.f32 %v4120, %v2894
        %v4122 = vmul.f32 %v4121, %v4120
        %v4123 = vmul.f32 0.5, %v4122
        %v4124 = vsub.f32 1.5, %v4123
        %v4125 = vmul.f32 %v4120, %v4124
        %vm4126 = vweird.f32 %v2894
        %vm4127 = vweird.f32 %v4120
        %vm4128 = vmor %vm4126, %vm4127
        %v4129 = vsel %vm4128, %v4120, %v4125
        %v4130 = vrsqrt.pop %v2895
        %v4131 = vmul.f32 %v4130, %v2895
        %v4132 = vmul.f32 %v4131, %v4130
        %v4133 = vmul.f32 0.5, %v4132
        %v4134 = vsub.f32 1.5, %v4133
        %v4135 = vmul.f32 %v4130, %v4134
        %vm4136 = vweird.f32 %v2895
        %vm4137 = vweird.f32 %v4130
        %vm4138 = vmor %vm4136, %vm4137
        %v4139 = vsel %vm4138, %v4130, %v4135
        %v4140 = vrsqrt.pop %v2896
        %v4141 = vmul.f32 %v4140, %v2896
        %v4142 = vmul.f32 %v4141, %v4140
        %v4143 = vmul.f32 0.5, %v4142
        %v4144 = vsub.f32 1.5, %v4143
        %v4145 = vmul.f32 %v4140, %v4144
        %vm4146 = vweird.f32 %v2896
        %vm4147 = vweird.f32 %v4140
        %vm4148 = vmor %vm4146, %vm4147
        %v4149 = vsel %vm4148, %v4140, %v4145
        %v4150 = vrsqrt.pop %v2897
        %v4151 = vmul.f32 %v4150, %v2897
        %v4152 = vmul.f32 %v4151, %v4150
        %v4153 = vmul.f32 0.5, %v4152
        %v4154 = vsub.f32 1.5, %v4153
        %v4155 = vmul.f32 %v4150, %v4154
        %vm4156 = vweird.f32 %v2897
        %vm4157 = vweird.f32 %v4150
        %vm4158 = vmor %vm4156, %vm4157
        %v4159 = vsel %vm4158, %v4150, %v4155
        %v4160 = vrsqrt.pop %v2898
        %v4161 = vmul.f32 %v4160, %v2898
        %v4162 = vmul.f32 %v4161, %v4160
        %v4163 = vmul.f32 0.5, %v4162
        %v4164 = vsub.f32 1.5, %v4163
        %v4165 = vmul.f32 %v4160, %v4164
        %vm4166 = vweird.f32 %v2898
        %vm4167 = vweird.f32 %v4160
        %vm4168 = vmor %vm4166, %vm4167
        %v4169 = vsel %vm4168, %v4160, %v4165
        %v4170 = vrsqrt.pop %v2899
        %v4171 = vmul.f32 %v4170, %v2899
        %v4172 = vmul.f32 %v4171, %v4170
        %v4173 = vmul.f32 0.5, %v4172
        %v4174 = vsub.f32 1.5, %v4173
        %v4175 = vmul.f32 %v4170, %v4174
        %vm4176 = vweird.f32 %v2899
        %vm4177 = vweird.f32 %v4170
        %vm4178 = vmor %vm4176, %vm4177
        %v4179 = vsel %vm4178, %v4170, %v4175
        %v4180 = vmul.f32 %v2390, %v2909
        %v4181 = vmul.f32 %v2393, %v2919
        %v4182 = vmul.f32 %v2396, %v2929
        %v4183 = vmul.f32 %v2399, %v2939
        %v4184 = vmul.f32 %v2402, %v2949
        %v4185 = vmul.f32 %v2405, %v2959
        %v4186 = vmul.f32 %v2408, %v2969
        %v4187 = vmul.f32 %v2411, %v2979
        %v4188 = vmul.f32 %v2414, %v2989
        %v4189 = vmul.f32 %v2417, %v2999
        %v4190 = vmul.f32 %v2420, %v3009
        %v4191 = vmul.f32 %v2423, %v3019
        %v4192 = vmul.f32 %v2426, %v3029
        %v4193 = vmul.f32 %v2429, %v3039
        %v4194 = vmul.f32 %v2432, %v3049
        %v4195 = vmul.f32 %v2435, %v3059
        %v4196 = vmul.f32 %v2438, %v3069
        %v4197 = vmul.f32 %v2441, %v3079
        %v4198 = vmul.f32 %v2444, %v3089
        %v4199 = vmul.f32 %v2447, %v3099
        %v4200 = vmul.f32 %v2450, %v3109
        %v4201 = vmul.f32 %v2453, %v3119
        %v4202 = vmul.f32 %v2456, %v3129
        %v4203 = vmul.f32 %v2459, %v3139
        %v4204 = vmul.f32 %v2462, %v3149
        %v4205 = vmul.f32 %v2465, %v3159
        %v4206 = vmul.f32 %v2468, %v3169
        %v4207 = vmul.f32 %v2471, %v3179
        %v4208 = vmul.f32 %v2474, %v3189
        %v4209 = vmul.f32 %v2477, %v3199
        %v4210 = vmul.f32 %v2480, %v3209
        %v4211 = vmul.f32 %v2483, %v3219
        %v4212 = vmul.f32 %v2486, %v3229
        %v4213 = vmul.f32 %v2489, %v3239
        %v4214 = vmul.f32 %v2492, %v3249
        %v4215 = vmul.f32 %v2495, %v3259
        %v4216 = vmul.f32 %v2498, %v3269
        %v4217 = vmul.f32 %v2501, %v3279
        %v4218 = vmul.f32 %v2504, %v3289
        %v4219 = vmul.f32 %v2507, %v3299
        %v4220 = vmul.f32 %v2510, %v3309
        %v4221 = vmul.f32 %v2513, %v3319
        %v4222 = vmul.f32 %v2516, %v3329
        %v4223 = vmul.f32 %v2519, %v3339
        %v4224 = vmul.f32 %v2522, %v3349
        %v4225 = vmul.f32 %v2525, %v3359
        %v4226 = vmul.f32 %v2528, %v3369
        %v4227 = vmul.f32 %v2531, %v3379
        %v4228 = vmul.f32 %v2534, %v3389
        %v4229 = vmul.f32 %v2537, %v3399
        %v4230 = vmul.f32 %v2540, %v3409
        %v4231 = vmul.f32 %v2543, %v3419
        %v4232 = vmul.f32 %v2546, %v3429
        %v4233 = vmul.f32 %v2549, %v3439
        %v4234 = vmul.f32 %v2552, %v3449
        %v4235 = vmul.f32 %v2555, %v3459
        %v4236 = vmul.f32 %v2558, %v3469
        %v4237 = vmul.f32 %v2561, %v3479
        %v4238 = vmul.f32 %v2564, %v3489
        %v4239 = vmul.f32 %v2567, %v3499
        %v4240 = vmul.f32 %v2570, %v3509
        %v4241 = vmul.f32 %v2573, %v3519
        %v4242 = vmul.f32 %v2576, %v3529
        %v4243 = vmul.f32 %v2579, %v3539
        %v4244 = vmul.f32 %v2582, %v3549
        %v4245 = vmul.f32 %v2585, %v3559
        %v4246 = vmul.f32 %v2588, %v3569
        %v4247 = vmul.f32 %v2591, %v3579
        %v4248 = vmul.f32 %v2594, %v3589
        %v4249 = vmul.f32 %v2597, %v3599
        %v4250 = vmul.f32 %v2600, %v3609
        %v4251 = vmul.f32 %v2603, %v3619
        %v4252 = vmul.f32 %v2606, %v3629
        %v4253 = vmul.f32 %v2609, %v3639
        %v4254 = vmul.f32 %v2612, %v3649
        %v4255 = vmul.f32 %v2615, %v3659
        %v4256 = vmul.f32 %v2618, %v3669
        %v4257 = vmul.f32 %v2621, %v3679
        %v4258 = vmul.f32 %v2624, %v3689
        %v4259 = vmul.f32 %v2627, %v3699
        %v4260 = vmul.f32 %v2630, %v3709
        %v4261 = vmul.f32 %v2633, %v3719
        %v4262 = vmul.f32 %v2636, %v3729
        %v4263 = vmul.f32 %v2639, %v3739
        %v4264 = vmul.f32 %v2642, %v3749
        %v4265 = vmul.f32 %v2645, %v3759
        %v4266 = vmul.f32 %v2648, %v3769
        %v4267 = vmul.f32 %v2651, %v3779
        %v4268 = vmul.f32 %v2654, %v3789
        %v4269 = vmul.f32 %v2657, %v3799
        %v4270 = vmul.f32 %v2660, %v3809
        %v4271 = vmul.f32 %v2663, %v3819
        %v4272 = vmul.f32 %v2666, %v3829
        %v4273 = vmul.f32 %v2669, %v3839
        %v4274 = vmul.f32 %v2672, %v3849
        %v4275 = vmul.f32 %v2675, %v3859
        %v4276 = vmul.f32 %v2678, %v3869
        %v4277 = vmul.f32 %v2681, %v3879
        %v4278 = vmul.f32 %v2684, %v3889
        %v4279 = vmul.f32 %v2687, %v3899
        %v4280 = vmul.f32 %v2690, %v3909
        %v4281 = vmul.f32 %v2693, %v3919
        %v4282 = vmul.f32 %v2696, %v3929
        %v4283 = vmul.f32 %v2699, %v3939
        %v4284 = vmul.f32 %v2702, %v3949
        %v4285 = vmul.f32 %v2705, %v3959
        %v4286 = vmul.f32 %v2708, %v3969
        %v4287 = vmul.f32 %v2711, %v3979
        %v4288 = vmul.f32 %v2714, %v3989
        %v4289 = vmul.f32 %v2717, %v3999
        %v4290 = vmul.f32 %v2720, %v4009
        %v4291 = vmul.f32 %v2723, %v4019
        %v4292 = vmul.f32 %v2726, %v4029
        %v4293 = vmul.f32 %v2729, %v4039
        %v4294 = vmul.f32 %v2732, %v4049
        %v4295 = vmul.f32 %v2735, %v4059
        %v4296 = vmul.f32 %v2738, %v4069
        %v4297 = vmul.f32 %v2741, %v4079
        %v4298 = vmul.f32 %v2744, %v4089
        %v4299 = vmul.f32 %v2747, %v4099
        %v4300 = vmul.f32 %v2750, %v4109
        %v4301 = vmul.f32 %v2753, %v4119
        %v4302 = vmul.f32 %v2756, %v4129
        %v4303 = vmul.f32 %v2759, %v4139
        %v4304 = vmul.f32 %v2762, %v4149
        %v4305 = vmul.f32 %v2765, %v4159
        %v4306 = vmul.f32 %v2768, %v4169
        %v4307 = vmul.f32 %v2771, %v4179
        %v4308 = vstv %s968
        %v4309 = vadd.f32 %v4180, %v4308
        %v4310 = vadd.f32 %v4181, %v4308
        %v4311 = vadd.f32 %v4182, %v4308
        %v4312 = vadd.f32 %v4183, %v4308
        %v4313 = vadd.f32 %v4184, %v4308
        %v4314 = vadd.f32 %v4185, %v4308
        %v4315 = vadd.f32 %v4186, %v4308
        %v4316 = vadd.f32 %v4187, %v4308
        %v4317 = vadd.f32 %v4188, %v4308
        %v4318 = vadd.f32 %v4189, %v4308
        %v4319 = vadd.f32 %v4190, %v4308
        %v4320 = vadd.f32 %v4191, %v4308
        %v4321 = vadd.f32 %v4192, %v4308
        %v4322 = vadd.f32 %v4193, %v4308
        %v4323 = vadd.f32 %v4194, %v4308
        %v4324 = vadd.f32 %v4195, %v4308
        %v4325 = vadd.f32 %v4196, %v4308
        %v4326 = vadd.f32 %v4197, %v4308
        %v4327 = vadd.f32 %v4198, %v4308
        %v4328 = vadd.f32 %v4199, %v4308
        %v4329 = vadd.f32 %v4200, %v4308
        %v4330 = vadd.f32 %v4201, %v4308
        %v4331 = vadd.f32 %v4202, %v4308
        %v4332 = vadd.f32 %v4203, %v4308
        %v4333 = vadd.f32 %v4204, %v4308
        %v4334 = vadd.f32 %v4205, %v4308
        %v4335 = vadd.f32 %v4206, %v4308
        %v4336 = vadd.f32 %v4207, %v4308
        %v4337 = vadd.f32 %v4208, %v4308
        %v4338 = vadd.f32 %v4209, %v4308
        %v4339 = vadd.f32 %v4210, %v4308
        %v4340 = vadd.f32 %v4211, %v4308
        %v4341 = vadd.f32 %v4212, %v4308
        %v4342 = vadd.f32 %v4213, %v4308
        %v4343 = vadd.f32 %v4214, %v4308
        %v4344 = vadd.f32 %v4215, %v4308
        %v4345 = vadd.f32 %v4216, %v4308
        %v4346 = vadd.f32 %v4217, %v4308
        %v4347 = vadd.f32 %v4218, %v4308
        %v4348 = vadd.f32 %v4219, %v4308
        %v4349 = vadd.f32 %v4220, %v4308
        %v4350 = vadd.f32 %v4221, %v4308
        %v4351 = vadd.f32 %v4222, %v4308
        %v4352 = vadd.f32 %v4223, %v4308
        %v4353 = vadd.f32 %v4224, %v4308
        %v4354 = vadd.f32 %v4225, %v4308
        %v4355 = vadd.f32 %v4226, %v4308
        %v4356 = vadd.f32 %v4227, %v4308
        %v4357 = vadd.f32 %v4228, %v4308
        %v4358 = vadd.f32 %v4229, %v4308
        %v4359 = vadd.f32 %v4230, %v4308
        %v4360 = vadd.f32 %v4231, %v4308
        %v4361 = vadd.f32 %v4232, %v4308
        %v4362 = vadd.f32 %v4233, %v4308
        %v4363 = vadd.f32 %v4234, %v4308
        %v4364 = vadd.f32 %v4235, %v4308
        %v4365 = vadd.f32 %v4236, %v4308
        %v4366 = vadd.f32 %v4237, %v4308
        %v4367 = vadd.f32 %v4238, %v4308
        %v4368 = vadd.f32 %v4239, %v4308
        %v4369 = vadd.f32 %v4240, %v4308
        %v4370 = vadd.f32 %v4241, %v4308
        %v4371 = vadd.f32 %v4242, %v4308
        %v4372 = vadd.f32 %v4243, %v4308
        %v4373 = vadd.f32 %v4244, %v4308
        %v4374 = vadd.f32 %v4245, %v4308
        %v4375 = vadd.f32 %v4246, %v4308
        %v4376 = vadd.f32 %v4247, %v4308
        %v4377 = vadd.f32 %v4248, %v4308
        %v4378 = vadd.f32 %v4249, %v4308
        %v4379 = vadd.f32 %v4250, %v4308
        %v4380 = vadd.f32 %v4251, %v4308
        %v4381 = vadd.f32 %v4252, %v4308
        %v4382 = vadd.f32 %v4253, %v4308
        %v4383 = vadd.f32 %v4254, %v4308
        %v4384 = vadd.f32 %v4255, %v4308
        %v4385 = vadd.f32 %v4256, %v4308
        %v4386 = vadd.f32 %v4257, %v4308
        %v4387 = vadd.f32 %v4258, %v4308
        %v4388 = vadd.f32 %v4259, %v4308
        %v4389 = vadd.f32 %v4260, %v4308
        %v4390 = vadd.f32 %v4261, %v4308
        %v4391 = vadd.f32 %v4262, %v4308
        %v4392 = vadd.f32 %v4263, %v4308
        %v4393 = vadd.f32 %v4264, %v4308
        %v4394 = vadd.f32 %v4265, %v4308
        %v4395 = vadd.f32 %v4266, %v4308
        %v4396 = vadd.f32 %v4267, %v4308
        %v4397 = vadd.f32 %v4268, %v4308
        %v4398 = vadd.f32 %v4269, %v4308
        %v4399 = vadd.f32 %v4270, %v4308
        %v4400 = vadd.f32 %v4271, %v4308
        %v4401 = vadd.f32 %v4272, %v4308
        %v4402 = vadd.f32 %v4273, %v4308
        %v4403 = vadd.f32 %v4274, %v4308
        %v4404 = vadd.f32 %v4275, %v4308
        %v4405 = vadd.f32 %v4276, %v4308
        %v4406 = vadd.f32 %v4277, %v4308
        %v4407 = vadd.f32 %v4278, %v4308
        %v4408 = vadd.f32 %v4279, %v4308
        %v4409 = vadd.f32 %v4280, %v4308
        %v4410 = vadd.f32 %v4281, %v4308
        %v4411 = vadd.f32 %v4282, %v4308
        %v4412 = vadd.f32 %v4283, %v4308
        %v4413 = vadd.f32 %v4284, %v4308
        %v4414 = vadd.f32 %v4285, %v4308
        %v4415 = vadd.f32 %v4286, %v4308
        %v4416 = vadd.f32 %v4287, %v4308
        %v4417 = vadd.f32 %v4288, %v4308
        %v4418 = vadd.f32 %v4289, %v4308
        %v4419 = vadd.f32 %v4290, %v4308
        %v4420 = vadd.f32 %v4291, %v4308
        %v4421 = vadd.f32 %v4292, %v4308
        %v4422 = vadd.f32 %v4293, %v4308
        %v4423 = vadd.f32 %v4294, %v4308
        %v4424 = vadd.f32 %v4295, %v4308
        %v4425 = vadd.f32 %v4296, %v4308
        %v4426 = vadd.f32 %v4297, %v4308
        %v4427 = vadd.f32 %v4298, %v4308
        %v4428 = vadd.f32 %v4299, %v4308
        %v4429 = vadd.f32 %v4300, %v4308
        %v4430 = vadd.f32 %v4301, %v4308
        %v4431 = vadd.f32 %v4302, %v4308
        %v4432 = vadd.f32 %v4303, %v4308
        %v4433 = vadd.f32 %v4304, %v4308
        %v4434 = vadd.f32 %v4305, %v4308
        %v4435 = vadd.f32 %v4306, %v4308
        %v4436 = vadd.f32 %v4307, %v4308
        %vm4437 = vcmp.ne.s32.totalorder %v966, 0
        %v4566 = vlaneseq
        %v4567 = vand.u32 %v4566, 127
        %v4568 = vperm.slane %v4309, %v4567
        %v4569 = vadd.s32 %v4567, 4294967288
        %v4570 = vperm.slane %v4310, %v4569
        %vm4571 = vcmask 130112
        %v4572 = vsel %vm4571, %v4570, %v4568
        %v4573 = vadd.s32 %v4567, 4294967280
        %v4574 = vperm.slane %v4311, %v4573
        %vm4575 = vcmask 195712
        %v4576 = vsel %vm4575, %v4574, %v4572
        %v4577 = vadd.s32 %v4567, 4294967272
        %v4578 = vperm.slane %v4312, %v4577
        %vm4579 = vcmask 261312
        %v4580 = vsel %vm4579, %v4578, %v4576
        %v4581 = vadd.s32 %v4567, 4294967264
        %v4582 = vperm.slane %v4313, %v4581
        %vm4583 = vcmask 326912
        %v4584 = vsel %vm4583, %v4582, %v4580
        %v4585 = vadd.s32 %v4567, 4294967256
        %v4586 = vperm.slane %v4314, %v4585
        %vm4587 = vcmask 392512
        %v4588 = vsel %vm4587, %v4586, %v4584
        %v4589 = vadd.s32 %v4567, 4294967248
        %v4590 = vperm.slane %v4315, %v4589
        %vm4591 = vcmask 458112
        %v4592 = vsel %vm4591, %v4590, %v4588
        %v4593 = vadd.s32 %v4567, 4294967240
        %v4594 = vperm.slane %v4316, %v4593
        %vm4595 = vcmask 523712
        %v4596 = vsel %vm4595, %v4594, %v4592
        %v4597 = vadd.s32 %v4567, 4294967232
        %v4598 = vperm.slane %v4317, %v4597
        %vm4599 = vcmask 589312
        %v4600 = vsel %vm4599, %v4598, %v4596
        %v4601 = vadd.s32 %v4567, 4294967224
        %v4602 = vperm.slane %v4318, %v4601
        %vm4603 = vcmask 654912
        %v4604 = vsel %vm4603, %v4602, %v4600
        %v4605 = vadd.s32 %v4567, 4294967216
        %v4606 = vperm.slane %v4319, %v4605
        %vm4607 = vcmask 720512
        %v4608 = vsel %vm4607, %v4606, %v4604
        %v4609 = vadd.s32 %v4567, 4294967208
        %v4610 = vperm.slane %v4320, %v4609
        %vm4611 = vcmask 786112
        %v4612 = vsel %vm4611, %v4610, %v4608
        %v4613 = vadd.s32 %v4567, 4294967200
        %v4614 = vperm.slane %v4321, %v4613
        %vm4615 = vcmask 851712
        %v4616 = vsel %vm4615, %v4614, %v4612
        %v4617 = vadd.s32 %v4567, 4294967192
        %v4618 = vperm.slane %v4322, %v4617
        %vm4619 = vcmask 917312
        %v4620 = vsel %vm4619, %v4618, %v4616
        %v4621 = vadd.s32 %v4567, 4294967184
        %v4622 = vperm.slane %v4323, %v4621
        %vm4623 = vcmask 982912
        %v4624 = vsel %vm4623, %v4622, %v4620
        %v4625 = vadd.s32 %v4567, 4294967176
        %v4626 = vperm.slane %v4324, %v4625
        %vm4627 = vcmask 1048512
        %v4628 = vsel %vm4627, %v4626, %v4624
        %v4629 = vperm.slane %v4325, %v4567
        %v4630 = vperm.slane %v4326, %v4569
        %v4631 = vsel %vm4571, %v4630, %v4629
        %v4632 = vperm.slane %v4327, %v4573
        %v4633 = vsel %vm4575, %v4632, %v4631
        %v4634 = vperm.slane %v4328, %v4577
        %v4635 = vsel %vm4579, %v4634, %v4633
        %v4636 = vperm.slane %v4329, %v4581
        %v4637 = vsel %vm4583, %v4636, %v4635
        %v4638 = vperm.slane %v4330, %v4585
        %v4639 = vsel %vm4587, %v4638, %v4637
        %v4640 = vperm.slane %v4331, %v4589
        %v4641 = vsel %vm4591, %v4640, %v4639
        %v4642 = vperm.slane %v4332, %v4593
        %v4643 = vsel %vm4595, %v4642, %v4641
        %v4644 = vperm.slane %v4333, %v4597
        %v4645 = vsel %vm4599, %v4644, %v4643
        %v4646 = vperm.slane %v4334, %v4601
        %v4647 = vsel %vm4603, %v4646, %v4645
        %v4648 = vperm.slane %v4335, %v4605
        %v4649 = vsel %vm4607, %v4648, %v4647
        %v4650 = vperm.slane %v4336, %v4609
        %v4651 = vsel %vm4611, %v4650, %v4649
        %v4652 = vperm.slane %v4337, %v4613
        %v4653 = vsel %vm4615, %v4652, %v4651
        %v4654 = vperm.slane %v4338, %v4617
        %v4655 = vsel %vm4619, %v4654, %v4653
        %v4656 = vperm.slane %v4339, %v4621
        %v4657 = vsel %vm4623, %v4656, %v4655
        %v4658 = vperm.slane %v4340, %v4625
        %v4659 = vsel %vm4627, %v4658, %v4657
        %v4660 = vperm.slane %v4341, %v4567
        %v4661 = vperm.slane %v4342, %v4569
        %v4662 = vsel %vm4571, %v4661, %v4660
        %v4663 = vperm.slane %v4343, %v4573
        %v4664 = vsel %vm4575, %v4663, %v4662
        %v4665 = vperm.slane %v4344, %v4577
        %v4666 = vsel %vm4579, %v4665, %v4664
        %v4667 = vperm.slane %v4345, %v4581
        %v4668 = vsel %vm4583, %v4667, %v4666
        %v4669 = vperm.slane %v4346, %v4585
        %v4670 = vsel %vm4587, %v4669, %v4668
        %v4671 = vperm.slane %v4347, %v4589
        %v4672 = vsel %vm4591, %v4671, %v4670
        %v4673 = vperm.slane %v4348, %v4593
        %v4674 = vsel %vm4595, %v4673, %v4672
        %v4675 = vperm.slane %v4349, %v4597
        %v4676 = vsel %vm4599, %v4675, %v4674
        %v4677 = vperm.slane %v4350, %v4601
        %v4678 = vsel %vm4603, %v4677, %v4676
        %v4679 = vperm.slane %v4351, %v4605
        %v4680 = vsel %vm4607, %v4679, %v4678
        %v4681 = vperm.slane %v4352, %v4609
        %v4682 = vsel %vm4611, %v4681, %v4680
        %v4683 = vperm.slane %v4353, %v4613
        %v4684 = vsel %vm4615, %v4683, %v4682
        %v4685 = vperm.slane %v4354, %v4617
        %v4686 = vsel %vm4619, %v4685, %v4684
        %v4687 = vperm.slane %v4355, %v4621
        %v4688 = vsel %vm4623, %v4687, %v4686
        %v4689 = vperm.slane %v4356, %v4625
        %v4690 = vsel %vm4627, %v4689, %v4688
        %v4691 = vperm.slane %v4357, %v4567
        %v4692 = vperm.slane %v4358, %v4569
        %v4693 = vsel %vm4571, %v4692, %v4691
        %v4694 = vperm.slane %v4359, %v4573
        %v4695 = vsel %vm4575, %v4694, %v4693
        %v4696 = vperm.slane %v4360, %v4577
        %v4697 = vsel %vm4579, %v4696, %v4695
        %v4698 = vperm.slane %v4361, %v4581
        %v4699 = vsel %vm4583, %v4698, %v4697
        %v4700 = vperm.slane %v4362, %v4585
        %v4701 = vsel %vm4587, %v4700, %v4699
        %v4702 = vperm.slane %v4363, %v4589
        %v4703 = vsel %vm4591, %v4702, %v4701
        %v4704 = vperm.slane %v4364, %v4593
        %v4705 = vsel %vm4595, %v4704, %v4703
        %v4706 = vperm.slane %v4365, %v4597
        %v4707 = vsel %vm4599, %v4706, %v4705
        %v4708 = vperm.slane %v4366, %v4601
        %v4709 = vsel %vm4603, %v4708, %v4707
        %v4710 = vperm.slane %v4367, %v4605
        %v4711 = vsel %vm4607, %v4710, %v4709
        %v4712 = vperm.slane %v4368, %v4609
        %v4713 = vsel %vm4611, %v4712, %v4711
        %v4714 = vperm.slane %v4369, %v4613
        %v4715 = vsel %vm4615, %v4714, %v4713
        %v4716 = vperm.slane %v4370, %v4617
        %v4717 = vsel %vm4619, %v4716, %v4715
        %v4718 = vperm.slane %v4371, %v4621
        %v4719 = vsel %vm4623, %v4718, %v4717
        %v4720 = vperm.slane %v4372, %v4625
        %v4721 = vsel %vm4627, %v4720, %v4719
        %v4722 = vperm.slane %v4373, %v4567
        %v4723 = vperm.slane %v4374, %v4569
        %v4724 = vsel %vm4571, %v4723, %v4722
        %v4725 = vperm.slane %v4375, %v4573
        %v4726 = vsel %vm4575, %v4725, %v4724
        %v4727 = vperm.slane %v4376, %v4577
        %v4728 = vsel %vm4579, %v4727, %v4726
        %v4729 = vperm.slane %v4377, %v4581
        %v4730 = vsel %vm4583, %v4729, %v4728
        %v4731 = vperm.slane %v4378, %v4585
        %v4732 = vsel %vm4587, %v4731, %v4730
        %v4733 = vperm.slane %v4379, %v4589
        %v4734 = vsel %vm4591, %v4733, %v4732
        %v4735 = vperm.slane %v4380, %v4593
        %v4736 = vsel %vm4595, %v4735, %v4734
        %v4737 = vperm.slane %v4381, %v4597
        %v4738 = vsel %vm4599, %v4737, %v4736
        %v4739 = vperm.slane %v4382, %v4601
        %v4740 = vsel %vm4603, %v4739, %v4738
        %v4741 = vperm.slane %v4383, %v4605
        %v4742 = vsel %vm4607, %v4741, %v4740
        %v4743 = vperm.slane %v4384, %v4609
        %v4744 = vsel %vm4611, %v4743, %v4742
        %v4745 = vperm.slane %v4385, %v4613
        %v4746 = vsel %vm4615, %v4745, %v4744
        %v4747 = vperm.slane %v4386, %v4617
        %v4748 = vsel %vm4619, %v4747, %v4746
        %v4749 = vperm.slane %v4387, %v4621
        %v4750 = vsel %vm4623, %v4749, %v4748
        %v4751 = vperm.slane %v4388, %v4625
        %v4752 = vsel %vm4627, %v4751, %v4750
        %v4753 = vperm.slane %v4389, %v4567
        %v4754 = vperm.slane %v4390, %v4569
        %v4755 = vsel %vm4571, %v4754, %v4753
        %v4756 = vperm.slane %v4391, %v4573
        %v4757 = vsel %vm4575, %v4756, %v4755
        %v4758 = vperm.slane %v4392, %v4577
        %v4759 = vsel %vm4579, %v4758, %v4757
        %v4760 = vperm.slane %v4393, %v4581
        %v4761 = vsel %vm4583, %v4760, %v4759
        %v4762 = vperm.slane %v4394, %v4585
        %v4763 = vsel %vm4587, %v4762, %v4761
        %v4764 = vperm.slane %v4395, %v4589
        %v4765 = vsel %vm4591, %v4764, %v4763
        %v4766 = vperm.slane %v4396, %v4593
        %v4767 = vsel %vm4595, %v4766, %v4765
        %v4768 = vperm.slane %v4397, %v4597
        %v4769 = vsel %vm4599, %v4768, %v4767
        %v4770 = vperm.slane %v4398, %v4601
        %v4771 = vsel %vm4603, %v4770, %v4769
        %v4772 = vperm.slane %v4399, %v4605
        %v4773 = vsel %vm4607, %v4772, %v4771
        %v4774 = vperm.slane %v4400, %v4609
        %v4775 = vsel %vm4611, %v4774, %v4773
        %v4776 = vperm.slane %v4401, %v4613
        %v4777 = vsel %vm4615, %v4776, %v4775
        %v4778 = vperm.slane %v4402, %v4617
        %v4779 = vsel %vm4619, %v4778, %v4777
        %v4780 = vperm.slane %v4403, %v4621
        %v4781 = vsel %vm4623, %v4780, %v4779
        %v4782 = vperm.slane %v4404, %v4625
        %v4783 = vsel %vm4627, %v4782, %v4781
        %v4784 = vperm.slane %v4405, %v4567
        %v4785 = vperm.slane %v4406, %v4569
        %v4786 = vsel %vm4571, %v4785, %v4784
        %v4787 = vperm.slane %v4407, %v4573
        %v4788 = vsel %vm4575, %v4787, %v4786
        %v4789 = vperm.slane %v4408, %v4577
        %v4790 = vsel %vm4579, %v4789, %v4788
        %v4791 = vperm.slane %v4409, %v4581
        %v4792 = vsel %vm4583, %v4791, %v4790
        %v4793 = vperm.slane %v4410, %v4585
        %v4794 = vsel %vm4587, %v4793, %v4792
        %v4795 = vperm.slane %v4411, %v4589
        %v4796 = vsel %vm4591, %v4795, %v4794
        %v4797 = vperm.slane %v4412, %v4593
        %v4798 = vsel %vm4595, %v4797, %v4796
        %v4799 = vperm.slane %v4413, %v4597
        %v4800 = vsel %vm4599, %v4799, %v4798
        %v4801 = vperm.slane %v4414, %v4601
        %v4802 = vsel %vm4603, %v4801, %v4800
        %v4803 = vperm.slane %v4415, %v4605
        %v4804 = vsel %vm4607, %v4803, %v4802
        %v4805 = vperm.slane %v4416, %v4609
        %v4806 = vsel %vm4611, %v4805, %v4804
        %v4807 = vperm.slane %v4417, %v4613
        %v4808 = vsel %vm4615, %v4807, %v4806
        %v4809 = vperm.slane %v4418, %v4617
        %v4810 = vsel %vm4619, %v4809, %v4808
        %v4811 = vperm.slane %v4419, %v4621
        %v4812 = vsel %vm4623, %v4811, %v4810
        %v4813 = vperm.slane %v4420, %v4625
        %v4814 = vsel %vm4627, %v4813, %v4812
        %v4815 = vperm.slane %v4421, %v4567
        %v4816 = vperm.slane %v4422, %v4569
        %v4817 = vsel %vm4571, %v4816, %v4815
        %v4818 = vperm.slane %v4423, %v4573
        %v4819 = vsel %vm4575, %v4818, %v4817
        %v4820 = vperm.slane %v4424, %v4577
        %v4821 = vsel %vm4579, %v4820, %v4819
        %v4822 = vperm.slane %v4425, %v4581
        %v4823 = vsel %vm4583, %v4822, %v4821
        %v4824 = vperm.slane %v4426, %v4585
        %v4825 = vsel %vm4587, %v4824, %v4823
        %v4826 = vperm.slane %v4427, %v4589
        %v4827 = vsel %vm4591, %v4826, %v4825
        %v4828 = vperm.slane %v4428, %v4593
        %v4829 = vsel %vm4595, %v4828, %v4827
        %v4830 = vperm.slane %v4429, %v4597
        %v4831 = vsel %vm4599, %v4830, %v4829
        %v4832 = vperm.slane %v4430, %v4601
        %v4833 = vsel %vm4603, %v4832, %v4831
        %v4834 = vperm.slane %v4431, %v4605
        %v4835 = vsel %vm4607, %v4834, %v4833
        %v4836 = vperm.slane %v4432, %v4609
        %v4837 = vsel %vm4611, %v4836, %v4835
        %v4838 = vperm.slane %v4433, %v4613
        %v4839 = vsel %vm4615, %v4838, %v4837
        %v4840 = vperm.slane %v4434, %v4617
        %v4841 = vsel %vm4619, %v4840, %v4839
        %v4842 = vperm.slane %v4435, %v4621
        %v4843 = vsel %vm4623, %v4842, %v4841
        %v4844 = vperm.slane %v4436, %v4625
        %v4845 = vsel %vm4627, %v4844, %v4843
        %vm4846 = vcmask 1041409
        %v4847 = vsel %vm4846, %v4659, %v4628
        %vm4848 = vcmask 1042434
        %v4849 = vsel %vm4848, %v4690, %v4847
        %vm4850 = vcmask 1043459
        %v4851 = vsel %vm4850, %v4721, %v4849
        %vm4852 = vcmask 1044484
        %v4853 = vsel %vm4852, %v4752, %v4851
        %vm4854 = vcmask 1045509
        %v4855 = vsel %vm4854, %v4783, %v4853
        %vm4856 = vcmask 1046534
        %v4857 = vsel %vm4856, %v4814, %v4855
        %vm4858 = vcmask 1047559
        %v4859 = vsel %vm4858, %v4845, %v4857
        %v4861 = vsel %vm4437, %v4859, 0.0
        %vm4862 = vcmp.eq.s32.totalorder %v966, 1
        %s4863 = sld [smem:[#allocation4 + $0x1]]
        %v4864 = vstv %s4863
        %v4865 = vsel %vm4862, %v4864, 0.0
        %v4866 = vadd.f32 %v4865, 0.0
        %vm4867 = vcmp.eq.s32.totalorder %v966, 2
        %s4868 = sld [smem:[#allocation4 + $0x2]]
        %v4869 = vstv %s4868
        %v4870 = vsel %vm4867, %v4869, 0.0
        %v4871 = vadd.f32 %v4866, %v4870
        %vm4872 = vcmp.eq.s32.totalorder %v966, 3
        %s4873 = sld [smem:[#allocation4 + $0x3]]
        %v4874 = vstv %s4873
        %v4875 = vsel %vm4872, %v4874, 0.0
        %v4876 = vadd.f32 %v4871, %v4875
        %vm4877 = vcmp.eq.s32.totalorder %v966, 4
        %s4878 = sld [smem:[#allocation4 + $0x4]]
        %v4879 = vstv %s4878
        %v4880 = vsel %vm4877, %v4879, 0.0
        %v4881 = vadd.f32 %v4876, %v4880
        %vm4882 = vcmp.eq.s32.totalorder %v966, 5
        %s4883 = sld [smem:[#allocation4 + $0x5]]
        %v4884 = vstv %s4883
        %v4885 = vsel %vm4882, %v4884, 0.0
        %v4886 = vadd.f32 %v4881, %v4885
        %vm4887 = vcmp.eq.s32.totalorder %v966, 6
        %s4888 = sld [smem:[#allocation4 + $0x6]]
        %v4889 = vstv %s4888
        %v4890 = vsel %vm4887, %v4889, 0.0
        %v4891 = vadd.f32 %v4886, %v4890
        %vm4892 = vcmp.eq.s32.totalorder %v966, 7
        %s4893 = sld [smem:[#allocation4 + $0x7]]
        %v4894 = vstv %s4893
        %v4895 = vsel %vm4892, %v4894, 0.0
        %v4896 = vadd.f32 %v4891, %v4895
        %vm4897 = vcmp.eq.s32.totalorder %v966, 8
        %s4898 = sld [smem:[#allocation4 + $0x8]]
        %v4899 = vstv %s4898
        %v4900 = vsel %vm4897, %v4899, 0.0
        %v4901 = vadd.f32 %v4896, %v4900
        %vm4902 = vcmp.eq.s32.totalorder %v966, 9
        %s4903 = sld [smem:[#allocation4 + $0x9]]
        %v4904 = vstv %s4903
        %v4905 = vsel %vm4902, %v4904, 0.0
        %v4906 = vadd.f32 %v4901, %v4905
        %v4907 = vld [vmem:[%s831] sm:$0xff]
        %v4908 = vadd.f32 %v4861, %v4906
        %4909 = vadd.xlane.f32.xlu0 %v4908
        %v4910 = vpop.xlane.xlu0 %4909
        %v4911 = vadd.f32 %v4907, %v4910
        %vm4912 = vcmask 7168
        %4913 = vst.msk [vmem:[%s831] sm:$0xff] %vm4912, %v4911
        %p4914 = scmp.lt.s32.totalorder %s22, 1
        %s4915 = scalar_select %p4914, %s22, 1
        %s4916 = smul.addr %s4915, 8
        %s4917 = scalar_lea.vmem %s5, %s4916
        // Predicated region
        $region87: #{tpu_custom_call.1} parent=73 // pred_check
          %p4918 = pneg %p167
        $region88: #{tpu_custom_call.1} parent=73 // pred_check_branch
          %4920 = sbr.rel (%p4918) target = $region90
        $region89: #{tpu_custom_call.1} parent=73 // pred_region
          _
        $region90: #{tpu_custom_call.1} parent=73 // pred_fallthru
          _
      $region74: #{tpu_custom_call.1} parent=5 // pred_fallthru
        _
      %p4921 = scmp.le.s32.totalorder 2, %s13
      // Predicated region
      $region91: #{tpu_custom_call.1} parent=5 // pred_check
        %p4922 = pneg %p4921
      $region92: #{tpu_custom_call.1} parent=5 // pred_check_branch
        %4924 = sbr.rel (%p4922) target = $region94
      $region93: #{tpu_custom_call.1} parent=5 // pred_region
        %s4925 = ssub.s32 %s13, 2
        // Predicated region
        $region95: #{tpu_custom_call.1} parent=93 // pred_check
          %p4926 = pneg %p173
        $region96: #{tpu_custom_call.1} parent=93 // pred_check_branch
          %4928 = sbr.rel (%p4926) target = $region98
        $region97: #{tpu_custom_call.1} parent=93 // pred_region
          %p4929 = scmp.lt.s32.totalorder %s24, 1
          %s4930 = scalar_select %p4929, %s24, 1
          %s4931 = smul.addr %s4930, 8
          %s4932 = scalar_lea.vmem %s5, %s4931
        $region98: #{tpu_custom_call.1} parent=93 // pred_fallthru
          _
      $region94: #{tpu_custom_call.1} parent=5 // pred_fallthru
        _
    $region6: #{tpu_custom_call.1} parent=1 // loop_footer
      %s17 = sadd.s32 1, %s13
    $region7: #{tpu_custom_call.1} parent=1 // loop_footer_branch
      %12 = sbr.rel target = $region3
    $region8: #{tpu_custom_call.1} parent=1 // loop_exit
      _
    %4933 = vsyncpa [#allocation5], 1
    %s4934 = scalar_lea.sflag [#allocation5], 1
    %4935 = vsyncpa %s4934, 1

</llo_original>
